<compile_context>
chip_gen: v7x
topology: tpu7x:2x2x1
jax: 0.10.0
libtpu: 0.0.40
codegen_flags: <defaults>
</compile_context>

<pallas_src>
import functools

import jax
import jax.numpy as jnp
from jax.experimental import pallas as pl
from jax.experimental.pallas import tpu as pltpu

C_HIDDEN = 64                  # fixed by the module definition
K_IM2COL = 10 * C_HIDDEN       # 9 taps * 64 cin, padded to 640 = 5 * 128 lanes


def _round_up(x, m):
    return ((x + m - 1) // m) * m


def _vmem_capacity_bytes():
    try:
        return int(pltpu.get_tpu_info().vmem_capacity_bytes)
    except Exception:
        return 64 * 1024 * 1024        # conservative: v7x per-TensorCore VMEM


def _pick_tile_h(H, W, mm_itemsize, vmem_cap):
    """Largest multiple-of-8 time tile whose scratches + temporaries fit VMEM."""
    budget = int(vmem_cap * 0.4)                       # leave pipelining headroom
    per_row = W * K_IM2COL * mm_itemsize               # im2col patch scratch
    per_row += (W + 2) * C_HIDDEN * mm_itemsize        # padded h1 scratch
    per_row += 8 * W * C_HIDDEN * 4                    # f32 temporaries headroom
    tile_h = budget // max(per_row, 1)
    tile_h = max(8, (tile_h // 8) * 8)
    tile_h = min(tile_h, 512)
    tile_h = min(tile_h, _round_up(H, 8))
    return int(tile_h)


def _conv_pool_kernel(x_ref, w1_ref, b1_ref, w2_ref, b2_ref, pool_ref,
                      h1_pad, col_ref, *, H, W, C, tile_h, mm_dtype):
    """Grid step = (batch element b, time-tile t).

    x_ref   : (1, H_pad+4, W+2) zero-padded input (f32), resident across t
    w1_ref  : (9, C)      conv1 weights, row = dy*3+dx
    b1_ref  : (1, C)
    w2_ref  : (10C, C)    conv2 im2col weights, row = (dy*3+dx)*C + cin
                          (rows 9C..10C-1 are zeros -> K padded to 640)
    b2_ref  : (1, C)
    pool_ref: (1, W, C)   f32 pooling accumulator (same block for all t)
    h1_pad  : VMEM (tile_h+2, W+2, C) mm_dtype   W-padded conv1 act (+1-row halo)
    col_ref : VMEM (tile_h*W, 10C)    mm_dtype   conv2 im2col patches
    """
    t = pl.program_id(1)
    nt = pl.num_programs(1)
    r0 = pl.multiple_of(t * tile_h, 8)          # tile_h is a multiple of 8

    # ---- Conv1 (1 -> C), 3x3, pad=1, + ReLU on the VPU over tile_h+2 rows ----
    xt = x_ref[0, pl.ds(r0, tile_h + 4), :]                         # (tile_h+4, W+2)
    # Single hoisted lane-broadcast (1 relayout, reused by all 9 taps).
    xb = jnp.broadcast_to(xt[:, :, None], (tile_h + 4, W + 2, C))
    w1 = w1_ref[...]                                                 # (9, C)
    acc1 = jnp.zeros((tile_h + 2, W, C), jnp.float32)
    for dy in range(3):
        for dx in range(3):
            acc1 = acc1 + (xb[dy:dy + tile_h + 2, dx:dx + W, :]
                           * w1[dy * 3 + dx][None, None, :])
    h1 = jnp.maximum(acc1 + b1_ref[0][None, None, :], 0.0)           # (tile_h+2, W, C)

    # Rows outside [0, H) must be exactly zero: they are conv2's 'same' padding
    # (top/bottom halo) and the invalid rows of a partial last tile.
    gh = r0 - 1 + jax.lax.broadcasted_iota(jnp.int32, (tile_h + 2, 1, 1), 0)
    h1 = jnp.where((gh >= 0) & (gh < H), h1, 0.0)

    # ---- Stage h1 into the W-padded scratch in mm_dtype (bf16) ---------------
    h1_pad[:, 1:W + 1, :] = h1.astype(mm_dtype)
    zcol = jnp.zeros((tile_h + 2, 1, C), mm_dtype)
    h1_pad[:, 0:1, :] = zcol
    h1_pad[:, W + 1:W + 2, :] = zcol

    # ---- Conv2 im2col: 5 lane-dense 128-wide strips (taps staged in pairs) ---
    def slab(tap):
        dy, dx = tap // 3, tap % 3
        return h1_pad[dy:dy + tile_h, dx:dx + W, :].reshape(tile_h * W, C)

    for p in range(4):
        col_ref[:, 2 * p * C:(2 * p + 2) * C] = jnp.concatenate(
            [slab(2 * p), slab(2 * p + 1)], axis=-1)
    col_ref[:, 8 * C:10 * C] = jnp.concatenate(
        [slab(8), jnp.zeros((tile_h * W, C), mm_dtype)], axis=-1)

    # ---- Conv2 (C -> C): one MXU matmul (K=640), f32 accum, + bias + ReLU ----
    acc2 = jnp.dot(col_ref[...], w2_ref[...],
                   preferred_element_type=jnp.float32)               # (tile_h*W, C)
    h2 = jnp.maximum(acc2 + b2_ref[...], 0.0)

    # ---- Partial pooling sum over this tile's valid rows ---------------------
    h2 = h2.reshape(tile_h, W, C)
    gv = r0 + jax.lax.broadcasted_iota(jnp.int32, (tile_h, 1, 1), 0)
    tile_sum = jnp.sum(jnp.where(gv < H, h2, 0.0), axis=0)           # (W, C)

    @pl.when(t == 0)
    def _():
        pool_ref[...] = jnp.zeros_like(pool_ref)

    pool_ref[...] += tile_sum[None]

    @pl.when(t == nt - 1)
    def _():
        pool_ref[...] = pool_ref[...] * jnp.float32(1.0 / H)


def _linear_layernorm_kernel(p_ref, wl_ref, bl_ref, g_ref, beta_ref, out_ref, *, eps):
    """Batched Flatten+Linear+LayerNorm, all in f32 (single grid step)."""
    lin = jnp.dot(p_ref[...], wl_ref[...],
                  preferred_element_type=jnp.float32) + bl_ref[...]  # (B, E)
    mu = jnp.mean(lin, axis=-1, keepdims=True)
    var = jnp.mean((lin - mu) ** 2, axis=-1, keepdims=True)
    normed = (lin - mu) * jax.lax.rsqrt(var + eps)
    out_ref[...] = normed * g_ref[...] + beta_ref[...]


def simple_audio_encoder(mel, params, *, mm_dtype=jnp.bfloat16, tile_h=None):
    """mel: (B, 1, T, mel_bins) float32, NCHW like the PyTorch module."""
    B, cin, H, W = mel.shape
    assert cin == 1
    C = C_HIDDEN
    E = params["b_lin"].shape[0]
    # AdaptiveAvgPool2d((1, mel_bins)) degenerates to a plain mean over time only
    # when the input width equals mel_bins; the Linear layer's shape enforces it.
    assert params["w_lin"].shape == (E, C * W)

    mm_itemsize = jnp.dtype(mm_dtype).itemsize
    vmem_cap = _vmem_capacity_bytes()
    vmem_limit = int(max(32 * 2**20, min(vmem_cap - 8 * 2**20, 100 * 2**20)))

    if tile_h is None:
        tile_h = _pick_tile_h(H, W, mm_itemsize, vmem_cap)
    tile_h = max(8, (int(tile_h) // 8) * 8)
    nt = -(-H // tile_h)                      # cdiv
    h_pad = nt * tile_h

    # ---- glue: pad input, permute/reshape weights ---------------------------
    # x row i corresponds to mel row i-2 (1 conv pad row + 1 halo row each side).
    x = jnp.pad(mel[:, 0], ((0, 0), (2, h_pad - H + 2), (1, 1)))     # (B, h_pad+4, W+2)
    w1 = jnp.transpose(params["w1"][:, 0], (1, 2, 0)).reshape(9, C)   # row = dy*3+dx
    b1 = params["b1"].reshape(1, C)
    # conv2 im2col weights: row = (dy*3+dx)*C + cin, padded with 64 zero rows.
    w2 = jnp.transpose(params["w2"], (2, 3, 1, 0)).reshape(9 * C, C)
    w2 = jnp.pad(w2, ((0, K_IM2COL - 9 * C), (0, 0))).astype(mm_dtype)
    b2 = params["b2"].reshape(1, C)

    kern = functools.partial(_conv_pool_kernel, H=H, W=W, C=C,
                             tile_h=tile_h, mm_dtype=mm_dtype)
    pooled = pl.pallas_call(
        kern,
        out_shape=jax.ShapeDtypeStruct((B, W, C), jnp.float32),
        grid_spec=pltpu.PrefetchScalarGridSpec(
            num_scalar_prefetch=0,
            grid=(B, nt),
            in_specs=[
                pl.BlockSpec((1, h_pad + 4, W + 2), lambda b, t: (b, 0, 0)),
                pl.BlockSpec((9, C), lambda b, t: (0, 0)),
                pl.BlockSpec((1, C), lambda b, t: (0, 0)),
                pl.BlockSpec((K_IM2COL, C), lambda b, t: (0, 0)),
                pl.BlockSpec((1, C), lambda b, t: (0, 0)),
            ],
            out_specs=pl.BlockSpec((1, W, C), lambda b, t: (b, 0, 0)),
            scratch_shapes=[
                pltpu.VMEM((tile_h + 2, W + 2, C), mm_dtype),   # padded conv1 act
                pltpu.VMEM((tile_h * W, K_IM2COL), mm_dtype),   # im2col patches
            ],
        ),
        compiler_params=pltpu.CompilerParams(
            dimension_semantics=("parallel", "arbitrary"),
            vmem_limit_bytes=vmem_limit),
    )(x, w1, b1, w2, b2)

    # ---- Flatten + Linear + LayerNorm: one batched f32 matmul + LN ----------
    # PyTorch flatten order after pooling is c*W + w; pooled flattens as w*C + c,
    # so remap the weight: wl[w*C + c, e] = w_lin[e, c*W + w].  Kept in f32 so the
    # LayerNorm input is full precision.
    pooled_flat = pooled.reshape(B, W * C)
    wl = jnp.transpose(params["w_lin"].reshape(E, C, W), (2, 1, 0)).reshape(W * C, E)
    bl = params["b_lin"].reshape(1, E)
    g = params["gamma"].reshape(1, E)
    bt = params["beta"].reshape(1, E)

    kern2 = functools.partial(_linear_layernorm_kernel, eps=1e-5)
    return pl.pallas_call(
        kern2,
        out_shape=jax.ShapeDtypeStruct((B, E), jnp.float32),
        grid_spec=pltpu.PrefetchScalarGridSpec(
            num_scalar_prefetch=0,
            grid=(1,),
            in_specs=[
                pl.BlockSpec((B, W * C), lambda i: (0, 0)),
                pl.BlockSpec((W * C, E), lambda i: (0, 0)),
                pl.BlockSpec((1, E), lambda i: (0, 0)),
                pl.BlockSpec((1, E), lambda i: (0, 0)),
                pl.BlockSpec((1, E), lambda i: (0, 0)),
            ],
            out_specs=pl.BlockSpec((B, E), lambda i: (0, 0)),
        ),
        compiler_params=pltpu.CompilerParams(
            dimension_semantics=("arbitrary",),
            vmem_limit_bytes=vmem_limit),
    )(pooled_flat, wl, bl, g, bt)


def _reference(mel, params):
    """Pure-JAX reference mirroring the PyTorch forward (all f32)."""
    dn = ("NCHW", "OIHW", "NCHW")
    h = jax.lax.conv_general_dilated(mel, params["w1"], (1, 1), "SAME",
                                     dimension_numbers=dn)
    h = jnp.maximum(h + params["b1"][None, :, None, None], 0.0)
    h = jax.lax.conv_general_dilated(h, params["w2"], (1, 1), "SAME",
                                     dimension_numbers=dn)
    h = jnp.maximum(h + params["b2"][None, :, None, None], 0.0)
    pooled = jnp.mean(h, axis=2)                  # (B, C, W); W == mel_bins
    flat = pooled.reshape(mel.shape[0], -1)       # (B, C*W), index c*W + w
    lin = flat @ params["w_lin"].T + params["b_lin"]
    mu = jnp.mean(lin, axis=-1, keepdims=True)
    var = jnp.mean((lin - mu) ** 2, axis=-1, keepdims=True)
    return (lin - mu) * jax.lax.rsqrt(var + 1e-5) * params["gamma"] + params["beta"]


def _init_params(key, mel_bins, embed_dim):
    C = C_HIDDEN
    ks = jax.random.split(key, 8)
    return {
        "w1": 0.10 * jax.random.normal(ks[0], (C, 1, 3, 3), jnp.float32),
        "b1": 0.05 * jax.random.normal(ks[1], (C,), jnp.float32),
        "w2": 0.04 * jax.random.normal(ks[2], (C, C, 3, 3), jnp.float32),
        "b2": 0.05 * jax.random.normal(ks[3], (C,), jnp.float32),
        "w_lin": 0.03 * jax.random.normal(ks[4], (embed_dim, C * mel_bins), jnp.float32),
        "b_lin": 0.05 * jax.random.normal(ks[5], (embed_dim,), jnp.float32),
        "gamma": 1.0 + 0.1 * jax.random.normal(ks[6], (embed_dim,), jnp.float32),
        "beta": 0.05 * jax.random.normal(ks[7], (embed_dim,), jnp.float32),
    }


if __name__ == "__main__":
    # Small shapes consistent with the module: batch=2, 1 input channel,
    # T=8 time frames, mel_bins=16, embed_dim=32.
    B, T, MEL, EMB = 2, 8, 16, 32
    key = jax.random.PRNGKey(0)
    k_in, k_par, k_in2 = jax.random.split(key, 3)
    mel = jax.random.normal(k_in, (B, 1, T, MEL), jnp.float32)
    params = _init_params(k_par, MEL, EMB)

    ref = jax.block_until_ready(_reference(mel, params))

    # Performance path: bf16 MXU inputs with f32 accumulation; Linear/LN in f32.
    out = jax.block_until_ready(simple_audio_encoder(mel, params))
    assert out.shape == (B, EMB) and out.dtype == jnp.float32
    err_bf16 = float(jnp.max(jnp.abs(out - ref)))
    if err_bf16 > 5e-2:
        raise AssertionError(f"bf16-MXU kernel mismatch vs reference: {err_bf16}")

    # Structural check: full-f32 kernel variant must match the reference tightly.
    out_f32 = jax.block_until_ready(
        simple_audio_encoder(mel, params, mm_dtype=jnp.float32))
    err_f32 = float(jnp.max(jnp.abs(out_f32 - ref)))
    if err_f32 > 2e-3:
        raise AssertionError(f"f32 kernel mismatch vs reference: {err_f32}")

    # Multi-tile path: T=20 with forced tile_h=8 -> 3 time tiles including a
    # partial last tile; exercises the halo, masking and pooling accumulator.
    T2 = 20
    mel2 = jax.random.normal(k_in2, (B, 1, T2, MEL), jnp.float32)
    ref2 = jax.block_until_ready(_reference(mel2, params))
    out2 = jax.block_until_ready(
        simple_audio_encoder(mel2, params, mm_dtype=jnp.float32, tile_h=8))
    err_tiled = float(jnp.max(jnp.abs(out2 - ref2)))
    if err_tiled > 2e-3:
        raise AssertionError(f"tiled kernel mismatch vs reference: {err_tiled}")

    print("KERNEL_OK")
</pallas_src>

<mosaic_0001>
module attributes {stable_mosaic.version = 11 : i64} {
  func.func @_conv_pool_kernel(%arg0: i32, %arg1: i32, %arg2: memref<1x12x18xf32, #tpu.memory_space<vmem>>, %arg3: memref<9x64xf32, #tpu.memory_space<vmem>>, %arg4: memref<1x64xf32, #tpu.memory_space<vmem>>, %arg5: memref<640x64xbf16, #tpu.memory_space<vmem>>, %arg6: memref<1x64xf32, #tpu.memory_space<vmem>>, %arg7: memref<1x16x64xf32, #tpu.memory_space<vmem>>, %arg8: memref<10x18x64xbf16, #tpu.memory_space<vmem>>, %arg9: memref<128x640xbf16, #tpu.memory_space<vmem>>) attributes {dimension_semantics = [#tpu.dimension_semantics<parallel>, #tpu.dimension_semantics<arbitrary>], iteration_bounds = array<i64: 2, 1>, scalar_prefetch = 0 : i64, scratch_operands = 2 : i64, tpu.core_type = #tpu.core_type<tc>, window_params = [{transform_indices = @transform_0, window_bounds = array<i64: 1, 12, 18>}, {pipeline_mode = #tpu.pipeline_mode<synchronous>, transform_indices = @transform_1, window_bounds = array<i64: 9, 64>}, {pipeline_mode = #tpu.pipeline_mode<synchronous>, transform_indices = @transform_2, window_bounds = array<i64: 1, 64>}, {pipeline_mode = #tpu.pipeline_mode<synchronous>, transform_indices = @transform_3, window_bounds = array<i64: 640, 64>}, {pipeline_mode = #tpu.pipeline_mode<synchronous>, transform_indices = @transform_4, window_bounds = array<i64: 1, 64>}, {transform_indices = @transform_5, window_bounds = array<i64: 1, 16, 64>}]} {
    %c8_i32 = arith.constant 8 : i32
    %0 = arith.muli %arg1, %c8_i32 : i32
    %1 = tpu.assume_multiple %0, 8 : i32
    %c0 = arith.constant 0 : index
    %2 = arith.index_cast %1 : i32 to index
    %c0_0 = arith.constant 0 : index
    %3 = vector.load %arg2[%c0, %2, %c0_0] : memref<1x12x18xf32, #tpu.memory_space<vmem>>, vector<1x12x18xf32>
    %4 = vector.shape_cast %3 : vector<1x12x18xf32> to vector<12x18xf32>
    %5 = vector.shape_cast %4 : vector<12x18xf32> to vector<12x18x1xf32>
    %6 = vector.shape_cast %5 : vector<12x18x1xf32> to vector<12x18x1xf32>
    %7 = vector.broadcast %6 : vector<12x18x1xf32> to vector<12x18x64xf32>
    %c0_1 = arith.constant 0 : index
    %c0_2 = arith.constant 0 : index
    %8 = vector.load %arg3[%c0_1, %c0_2] : memref<9x64xf32, #tpu.memory_space<vmem>>, vector<9x64xf32>
    %cst = arith.constant 0.000000e+00 : f32
    %9 = vector.broadcast %cst : f32 to vector<10x16x64xf32>
    %10 = vector.extract_strided_slice %7 {offsets = [0, 0, 0], sizes = [10, 16, 64], strides = [1, 1, 1]} : vector<12x18x64xf32> to vector<10x16x64xf32>
    %11 = vector.extract_strided_slice %8 {offsets = [0, 0], sizes = [1, 64], strides = [1, 1]} : vector<9x64xf32> to vector<1x64xf32>
    %12 = vector.shape_cast %11 : vector<1x64xf32> to vector<64xf32>
    %13 = vector.shape_cast %12 : vector<64xf32> to vector<1x1x64xf32>
    %14 = vector.broadcast %13 : vector<1x1x64xf32> to vector<10x16x64xf32>
    %15 = arith.mulf %10, %14 : vector<10x16x64xf32>
    %16 = arith.addf %9, %15 : vector<10x16x64xf32>
    %17 = vector.extract_strided_slice %7 {offsets = [0, 1, 0], sizes = [10, 16, 64], strides = [1, 1, 1]} : vector<12x18x64xf32> to vector<10x16x64xf32>
    %18 = vector.extract_strided_slice %8 {offsets = [1, 0], sizes = [1, 64], strides = [1, 1]} : vector<9x64xf32> to vector<1x64xf32>
    %19 = vector.shape_cast %18 : vector<1x64xf32> to vector<64xf32>
    %20 = vector.shape_cast %19 : vector<64xf32> to vector<1x1x64xf32>
    %21 = vector.broadcast %20 : vector<1x1x64xf32> to vector<10x16x64xf32>
    %22 = arith.mulf %17, %21 : vector<10x16x64xf32>
    %23 = arith.addf %16, %22 : vector<10x16x64xf32>
    %24 = vector.extract_strided_slice %7 {offsets = [0, 2, 0], sizes = [10, 16, 64], strides = [1, 1, 1]} : vector<12x18x64xf32> to vector<10x16x64xf32>
    %25 = vector.extract_strided_slice %8 {offsets = [2, 0], sizes = [1, 64], strides = [1, 1]} : vector<9x64xf32> to vector<1x64xf32>
    %26 = vector.shape_cast %25 : vector<1x64xf32> to vector<64xf32>
    %27 = vector.shape_cast %26 : vector<64xf32> to vector<1x1x64xf32>
    %28 = vector.broadcast %27 : vector<1x1x64xf32> to vector<10x16x64xf32>
    %29 = arith.mulf %24, %28 : vector<10x16x64xf32>
    %30 = arith.addf %23, %29 : vector<10x16x64xf32>
    %31 = vector.extract_strided_slice %7 {offsets = [1, 0, 0], sizes = [10, 16, 64], strides = [1, 1, 1]} : vector<12x18x64xf32> to vector<10x16x64xf32>
    %32 = vector.extract_strided_slice %8 {offsets = [3, 0], sizes = [1, 64], strides = [1, 1]} : vector<9x64xf32> to vector<1x64xf32>
    %33 = vector.shape_cast %32 : vector<1x64xf32> to vector<64xf32>
    %34 = vector.shape_cast %33 : vector<64xf32> to vector<1x1x64xf32>
    %35 = vector.broadcast %34 : vector<1x1x64xf32> to vector<10x16x64xf32>
    %36 = arith.mulf %31, %35 : vector<10x16x64xf32>
    %37 = arith.addf %30, %36 : vector<10x16x64xf32>
    %38 = vector.extract_strided_slice %7 {offsets = [1, 1, 0], sizes = [10, 16, 64], strides = [1, 1, 1]} : vector<12x18x64xf32> to vector<10x16x64xf32>
    %39 = vector.extract_strided_slice %8 {offsets = [4, 0], sizes = [1, 64], strides = [1, 1]} : vector<9x64xf32> to vector<1x64xf32>
    %40 = vector.shape_cast %39 : vector<1x64xf32> to vector<64xf32>
    %41 = vector.shape_cast %40 : vector<64xf32> to vector<1x1x64xf32>
    %42 = vector.broadcast %41 : vector<1x1x64xf32> to vector<10x16x64xf32>
    %43 = arith.mulf %38, %42 : vector<10x16x64xf32>
    %44 = arith.addf %37, %43 : vector<10x16x64xf32>
    %45 = vector.extract_strided_slice %7 {offsets = [1, 2, 0], sizes = [10, 16, 64], strides = [1, 1, 1]} : vector<12x18x64xf32> to vector<10x16x64xf32>
    %46 = vector.extract_strided_slice %8 {offsets = [5, 0], sizes = [1, 64], strides = [1, 1]} : vector<9x64xf32> to vector<1x64xf32>
    %47 = vector.shape_cast %46 : vector<1x64xf32> to vector<64xf32>
    %48 = vector.shape_cast %47 : vector<64xf32> to vector<1x1x64xf32>
    %49 = vector.broadcast %48 : vector<1x1x64xf32> to vector<10x16x64xf32>
    %50 = arith.mulf %45, %49 : vector<10x16x64xf32>
    %51 = arith.addf %44, %50 : vector<10x16x64xf32>
    %52 = vector.extract_strided_slice %7 {offsets = [2, 0, 0], sizes = [10, 16, 64], strides = [1, 1, 1]} : vector<12x18x64xf32> to vector<10x16x64xf32>
    %53 = vector.extract_strided_slice %8 {offsets = [6, 0], sizes = [1, 64], strides = [1, 1]} : vector<9x64xf32> to vector<1x64xf32>
    %54 = vector.shape_cast %53 : vector<1x64xf32> to vector<64xf32>
    %55 = vector.shape_cast %54 : vector<64xf32> to vector<1x1x64xf32>
    %56 = vector.broadcast %55 : vector<1x1x64xf32> to vector<10x16x64xf32>
    %57 = arith.mulf %52, %56 : vector<10x16x64xf32>
    %58 = arith.addf %51, %57 : vector<10x16x64xf32>
    %59 = vector.extract_strided_slice %7 {offsets = [2, 1, 0], sizes = [10, 16, 64], strides = [1, 1, 1]} : vector<12x18x64xf32> to vector<10x16x64xf32>
    %60 = vector.extract_strided_slice %8 {offsets = [7, 0], sizes = [1, 64], strides = [1, 1]} : vector<9x64xf32> to vector<1x64xf32>
    %61 = vector.shape_cast %60 : vector<1x64xf32> to vector<64xf32>
    %62 = vector.shape_cast %61 : vector<64xf32> to vector<1x1x64xf32>
    %63 = vector.broadcast %62 : vector<1x1x64xf32> to vector<10x16x64xf32>
    %64 = arith.mulf %59, %63 : vector<10x16x64xf32>
    %65 = arith.addf %58, %64 : vector<10x16x64xf32>
    %66 = vector.extract_strided_slice %7 {offsets = [2, 2, 0], sizes = [10, 16, 64], strides = [1, 1, 1]} : vector<12x18x64xf32> to vector<10x16x64xf32>
    %67 = vector.extract_strided_slice %8 {offsets = [8, 0], sizes = [1, 64], strides = [1, 1]} : vector<9x64xf32> to vector<1x64xf32>
    %68 = vector.shape_cast %67 : vector<1x64xf32> to vector<64xf32>
    %69 = vector.shape_cast %68 : vector<64xf32> to vector<1x1x64xf32>
    %70 = vector.broadcast %69 : vector<1x1x64xf32> to vector<10x16x64xf32>
    %71 = arith.mulf %66, %70 : vector<10x16x64xf32>
    %72 = arith.addf %65, %71 : vector<10x16x64xf32>
    %c0_3 = arith.constant 0 : index
    %c0_4 = arith.constant 0 : index
    %73 = vector.load %arg4[%c0_3, %c0_4] : memref<1x64xf32, #tpu.memory_space<vmem>>, vector<1x64xf32>
    %74 = vector.shape_cast %73 : vector<1x64xf32> to vector<64xf32>
    %75 = vector.shape_cast %74 : vector<64xf32> to vector<1x1x64xf32>
    %76 = vector.broadcast %75 : vector<1x1x64xf32> to vector<10x16x64xf32>
    %77 = arith.addf %72, %76 : vector<10x16x64xf32>
    %cst_5 = arith.constant 0.000000e+00 : f32
    %78 = vector.broadcast %cst_5 : f32 to vector<10x16x64xf32>
    %79 = arith.maximumf %77, %78 : vector<10x16x64xf32>
    %c1_i32 = arith.constant 1 : i32
    %80 = arith.subi %1, %c1_i32 : i32
    %81 = tpu.iota {dimensions = array<i32: 0>} : vector<10x1x1xi32>
    %82 = vector.broadcast %80 : i32 to vector<10x1x1xi32>
    %83 = arith.addi %82, %81 : vector<10x1x1xi32>
    %c0_i32 = arith.constant 0 : i32
    %84 = vector.broadcast %c0_i32 : i32 to vector<10x1x1xi32>
    %85 = arith.cmpi sge, %83, %84 : vector<10x1x1xi32>
    %c8_i32_6 = arith.constant 8 : i32
    %86 = vector.broadcast %c8_i32_6 : i32 to vector<10x1x1xi32>
    %87 = arith.cmpi slt, %83, %86 : vector<10x1x1xi32>
    %88 = arith.andi %85, %87 : vector<10x1x1xi1>
    %cst_7 = arith.constant 0.000000e+00 : f32
    %89 = vector.shape_cast %88 : vector<10x1x1xi1> to vector<10x1x1xi1>
    %90 = vector.broadcast %89 : vector<10x1x1xi1> to vector<10x16x64xi1>
    %91 = vector.broadcast %cst_7 : f32 to vector<10x16x64xf32>
    %92 = arith.select %90, %79, %91 : vector<10x16x64xi1>, vector<10x16x64xf32>
    %93 = arith.truncf %92 : vector<10x16x64xf32> to vector<10x16x64xbf16>
    %c0_8 = arith.constant 0 : index
    %c1 = arith.constant 1 : index
    %c0_9 = arith.constant 0 : index
    %94 = vector.load %arg8[%c0_8, %c1, %c0_9] : memref<10x18x64xbf16, #tpu.memory_space<vmem>>, vector<10x16x64xbf16>
    tpu.vector_store %arg8[%c0_8, %c1, %c0_9], %93 {strides = array<i32>} : memref<10x18x64xbf16, #tpu.memory_space<vmem>>, vector<10x16x64xbf16>,
    %cst_10 = arith.constant 0.000000e+00 : bf16
    %95 = vector.broadcast %cst_10 : bf16 to vector<10x1x64xbf16>
    %c0_11 = arith.constant 0 : index
    %c0_12 = arith.constant 0 : index
    %c0_13 = arith.constant 0 : index
    %96 = vector.load %arg8[%c0_11, %c0_12, %c0_13] : memref<10x18x64xbf16, #tpu.memory_space<vmem>>, vector<10x1x64xbf16>
    tpu.vector_store %arg8[%c0_11, %c0_12, %c0_13], %95 {strides = array<i32>} : memref<10x18x64xbf16, #tpu.memory_space<vmem>>, vector<10x1x64xbf16>,
    %c0_14 = arith.constant 0 : index
    %c17 = arith.constant 17 : index
    %c0_15 = arith.constant 0 : index
    %97 = vector.load %arg8[%c0_14, %c17, %c0_15] : memref<10x18x64xbf16, #tpu.memory_space<vmem>>, vector<10x1x64xbf16>
    tpu.vector_store %arg8[%c0_14, %c17, %c0_15], %95 {strides = array<i32>} : memref<10x18x64xbf16, #tpu.memory_space<vmem>>, vector<10x1x64xbf16>,
    %c0_16 = arith.constant 0 : index
    %c0_17 = arith.constant 0 : index
    %c0_18 = arith.constant 0 : index
    %98 = vector.load %arg8[%c0_16, %c0_17, %c0_18] : memref<10x18x64xbf16, #tpu.memory_space<vmem>>, vector<8x16x64xbf16>
    %99 = vector.shape_cast %98 : vector<8x16x64xbf16> to vector<128x64xbf16>
    %c0_19 = arith.constant 0 : index
    %c1_20 = arith.constant 1 : index
    %c0_21 = arith.constant 0 : index
    %100 = vector.load %arg8[%c0_19, %c1_20, %c0_21] : memref<10x18x64xbf16, #tpu.memory_space<vmem>>, vector<8x16x64xbf16>
    %101 = vector.shape_cast %100 : vector<8x16x64xbf16> to vector<128x64xbf16>
    %102 = tpu.concatenate %99, %101 in 1 : vector<128x64xbf16>, vector<128x64xbf16> -> vector<128x128xbf16>
    %c0_22 = arith.constant 0 : index
    %c0_23 = arith.constant 0 : index
    %103 = vector.load %arg9[%c0_22, %c0_23] : memref<128x640xbf16, #tpu.memory_space<vmem>>, vector<128x128xbf16>
    tpu.vector_store %arg9[%c0_22, %c0_23], %102 {strides = array<i32>} : memref<128x640xbf16, #tpu.memory_space<vmem>>, vector<128x128xbf16>,
    %c0_24 = arith.constant 0 : index
    %c2 = arith.constant 2 : index
    %c0_25 = arith.constant 0 : index
    %104 = vector.load %arg8[%c0_24, %c2, %c0_25] : memref<10x18x64xbf16, #tpu.memory_space<vmem>>, vector<8x16x64xbf16>
    %105 = vector.shape_cast %104 : vector<8x16x64xbf16> to vector<128x64xbf16>
    %c1_26 = arith.constant 1 : index
    %c0_27 = arith.constant 0 : index
    %c0_28 = arith.constant 0 : index
    %106 = vector.load %arg8[%c1_26, %c0_27, %c0_28] : memref<10x18x64xbf16, #tpu.memory_space<vmem>>, vector<8x16x64xbf16>
    %107 = vector.shape_cast %106 : vector<8x16x64xbf16> to vector<128x64xbf16>
    %108 = tpu.concatenate %105, %107 in 1 : vector<128x64xbf16>, vector<128x64xbf16> -> vector<128x128xbf16>
    %c0_29 = arith.constant 0 : index
    %c128 = arith.constant 128 : index
    %109 = vector.load %arg9[%c0_29, %c128] : memref<128x640xbf16, #tpu.memory_space<vmem>>, vector<128x128xbf16>
    tpu.vector_store %arg9[%c0_29, %c128], %108 {strides = array<i32>} : memref<128x640xbf16, #tpu.memory_space<vmem>>, vector<128x128xbf16>,
    %c1_30 = arith.constant 1 : index
    %c1_31 = arith.constant 1 : index
    %c0_32 = arith.constant 0 : index
    %110 = vector.load %arg8[%c1_30, %c1_31, %c0_32] : memref<10x18x64xbf16, #tpu.memory_space<vmem>>, vector<8x16x64xbf16>
    %111 = vector.shape_cast %110 : vector<8x16x64xbf16> to vector<128x64xbf16>
    %c1_33 = arith.constant 1 : index
    %c2_34 = arith.constant 2 : index
    %c0_35 = arith.constant 0 : index
    %112 = vector.load %arg8[%c1_33, %c2_34, %c0_35] : memref<10x18x64xbf16, #tpu.memory_space<vmem>>, vector<8x16x64xbf16>
    %113 = vector.shape_cast %112 : vector<8x16x64xbf16> to vector<128x64xbf16>
    %114 = tpu.concatenate %111, %113 in 1 : vector<128x64xbf16>, vector<128x64xbf16> -> vector<128x128xbf16>
    %c0_36 = arith.constant 0 : index
    %c256 = arith.constant 256 : index
    %115 = vector.load %arg9[%c0_36, %c256] : memref<128x640xbf16, #tpu.memory_space<vmem>>, vector<128x128xbf16>
    tpu.vector_store %arg9[%c0_36, %c256], %114 {strides = array<i32>} : memref<128x640xbf16, #tpu.memory_space<vmem>>, vector<128x128xbf16>,
    %c2_37 = arith.constant 2 : index
    %c0_38 = arith.constant 0 : index
    %c0_39 = arith.constant 0 : index
    %116 = vector.load %arg8[%c2_37, %c0_38, %c0_39] : memref<10x18x64xbf16, #tpu.memory_space<vmem>>, vector<8x16x64xbf16>
    %117 = vector.shape_cast %116 : vector<8x16x64xbf16> to vector<128x64xbf16>
    %c2_40 = arith.constant 2 : index
    %c1_41 = arith.constant 1 : index
    %c0_42 = arith.constant 0 : index
    %118 = vector.load %arg8[%c2_40, %c1_41, %c0_42] : memref<10x18x64xbf16, #tpu.memory_space<vmem>>, vector<8x16x64xbf16>
    %119 = vector.shape_cast %118 : vector<8x16x64xbf16> to vector<128x64xbf16>
    %120 = tpu.concatenate %117, %119 in 1 : vector<128x64xbf16>, vector<128x64xbf16> -> vector<128x128xbf16>
    %c0_43 = arith.constant 0 : index
    %c384 = arith.constant 384 : index
    %121 = vector.load %arg9[%c0_43, %c384] : memref<128x640xbf16, #tpu.memory_space<vmem>>, vector<128x128xbf16>
    tpu.vector_store %arg9[%c0_43, %c384], %120 {strides = array<i32>} : memref<128x640xbf16, #tpu.memory_space<vmem>>, vector<128x128xbf16>,
    %c2_44 = arith.constant 2 : index
    %c2_45 = arith.constant 2 : index
    %c0_46 = arith.constant 0 : index
    %122 = vector.load %arg8[%c2_44, %c2_45, %c0_46] : memref<10x18x64xbf16, #tpu.memory_space<vmem>>, vector<8x16x64xbf16>
    %123 = vector.shape_cast %122 : vector<8x16x64xbf16> to vector<128x64xbf16>
    %cst_47 = arith.constant 0.000000e+00 : bf16
    %124 = vector.broadcast %cst_47 : bf16 to vector<128x64xbf16>
    %125 = tpu.concatenate %123, %124 in 1 : vector<128x64xbf16>, vector<128x64xbf16> -> vector<128x128xbf16>
    %c0_48 = arith.constant 0 : index
    %c512 = arith.constant 512 : index
    %126 = vector.load %arg9[%c0_48, %c512] : memref<128x640xbf16, #tpu.memory_space<vmem>>, vector<128x128xbf16>
    tpu.vector_store %arg9[%c0_48, %c512], %125 {strides = array<i32>} : memref<128x640xbf16, #tpu.memory_space<vmem>>, vector<128x128xbf16>,
    %c0_49 = arith.constant 0 : index
    %c0_50 = arith.constant 0 : index
    %127 = vector.load %arg9[%c0_49, %c0_50] : memref<128x640xbf16, #tpu.memory_space<vmem>>, vector<128x640xbf16>
    %c0_51 = arith.constant 0 : index
    %c0_52 = arith.constant 0 : index
    %128 = vector.load %arg5[%c0_51, %c0_52] : memref<640x64xbf16, #tpu.memory_space<vmem>>, vector<640x64xbf16>
    %cst_53 = arith.constant dense<0.000000e+00> : vector<128x64xf32>
    %129 = tpu.matmul %127, %128, %cst_53 {dimension_numbers = #tpu.dot_dimension_numbers<[1], [0], [0], [1], [0, 0, 1, 1], [], []>} : vector<128x640xbf16>, vector<640x64xbf16>, vector<128x64xf32> -> vector<128x64xf32>
    %c0_54 = arith.constant 0 : index
    %c0_55 = arith.constant 0 : index
    %130 = vector.load %arg6[%c0_54, %c0_55] : memref<1x64xf32, #tpu.memory_space<vmem>>, vector<1x64xf32>
    %131 = vector.broadcast %130 : vector<1x64xf32> to vector<128x64xf32>
    %132 = arith.addf %129, %131 : vector<128x64xf32>
    %cst_56 = arith.constant 0.000000e+00 : f32
    %133 = vector.broadcast %cst_56 : f32 to vector<128x64xf32>
    %134 = arith.maximumf %132, %133 : vector<128x64xf32>
    %135 = vector.shape_cast %134 : vector<128x64xf32> to vector<8x16x64xf32>
    %136 = tpu.iota {dimensions = array<i32: 0>} : vector<8x1x1xi32>
    %137 = vector.broadcast %1 : i32 to vector<8x1x1xi32>
    %138 = arith.addi %137, %136 : vector<8x1x1xi32>
    %c8_i32_57 = arith.constant 8 : i32
    %139 = vector.broadcast %c8_i32_57 : i32 to vector<8x1x1xi32>
    %140 = arith.cmpi slt, %138, %139 : vector<8x1x1xi32>
    %cst_58 = arith.constant 0.000000e+00 : f32
    %141 = vector.shape_cast %140 : vector<8x1x1xi1> to vector<8x1x1xi1>
    %142 = vector.broadcast %141 : vector<8x1x1xi1> to vector<8x16x64xi1>
    %143 = vector.broadcast %cst_58 : f32 to vector<8x16x64xf32>
    %144 = arith.select %142, %135, %143 : vector<8x16x64xi1>, vector<8x16x64xf32>
    %cst_59 = arith.constant dense<0.000000e+00> : vector<16x64xf32>
    %145 = vector.multi_reduction <add>, %144, %cst_59 [0] : vector<8x16x64xf32> to vector<16x64xf32>
    %c0_i32_60 = arith.constant 0 : i32
    %146 = arith.cmpi eq, %arg1, %c0_i32_60 : i32
    %147 = arith.extui %146 : i1 to i32
    %c0_i32_61 = arith.constant 0 : i32
    %148 = arith.cmpi ne, %147, %c0_i32_61 : i32
    scf.if %148 {
      %cst_70 = arith.constant 0.000000e+00 : f32
      %156 = vector.broadcast %cst_70 : f32 to vector<1x16x64xf32>
      %c0_71 = arith.constant 0 : index
      %c0_72 = arith.constant 0 : index
      %c0_73 = arith.constant 0 : index
      %157 = vector.load %arg7[%c0_71, %c0_72, %c0_73] : memref<1x16x64xf32, #tpu.memory_space<vmem>>, vector<1x16x64xf32>
      tpu.vector_store %arg7[%c0_71, %c0_72, %c0_73], %156 {strides = array<i32>} : memref<1x16x64xf32, #tpu.memory_space<vmem>>, vector<1x16x64xf32>,
    } else {
    }
    %c0_62 = arith.constant 0 : index
    %c0_63 = arith.constant 0 : index
    %c0_64 = arith.constant 0 : index
    %149 = vector.load %arg7[%c0_62, %c0_63, %c0_64] : memref<1x16x64xf32, #tpu.memory_space<vmem>>, vector<1x16x64xf32>
    %150 = vector.shape_cast %145 : vector<16x64xf32> to vector<1x16x64xf32>
    %151 = arith.addf %149, %150 : vector<1x16x64xf32>
    %c0_65 = arith.constant 0 : index
    %c0_66 = arith.constant 0 : index
    %c0_67 = arith.constant 0 : index
    %152 = vector.load %arg7[%c0_65, %c0_66, %c0_67] : memref<1x16x64xf32, #tpu.memory_space<vmem>>, vector<1x16x64xf32>
    tpu.vector_store %arg7[%c0_65, %c0_66, %c0_67], %151 {strides = array<i32>} : memref<1x16x64xf32, #tpu.memory_space<vmem>>, vector<1x16x64xf32>,
    %c0_i32_68 = arith.constant 0 : i32
    %153 = arith.cmpi eq, %arg1, %c0_i32_68 : i32
    %154 = arith.extui %153 : i1 to i32
    %c0_i32_69 = arith.constant 0 : i32
    %155 = arith.cmpi ne, %154, %c0_i32_69 : i32
    scf.if %155 {
      %c0_70 = arith.constant 0 : index
      %c0_71 = arith.constant 0 : index
      %c0_72 = arith.constant 0 : index
      %156 = vector.load %arg7[%c0_70, %c0_71, %c0_72] : memref<1x16x64xf32, #tpu.memory_space<vmem>>, vector<1x16x64xf32>
      %cst_73 = arith.constant 1.250000e-01 : f32
      %157 = vector.broadcast %cst_73 : f32 to vector<1x16x64xf32>
      %158 = arith.mulf %156, %157 : vector<1x16x64xf32>
      %c0_74 = arith.constant 0 : index
      %c0_75 = arith.constant 0 : index
      %c0_76 = arith.constant 0 : index
      %159 = vector.load %arg7[%c0_74, %c0_75, %c0_76] : memref<1x16x64xf32, #tpu.memory_space<vmem>>, vector<1x16x64xf32>
      tpu.vector_store %arg7[%c0_74, %c0_75, %c0_76], %158 {strides = array<i32>} : memref<1x16x64xf32, #tpu.memory_space<vmem>>, vector<1x16x64xf32>,
    } else {
    }
    return
  }
  func.func @transform_0(%arg0: i32, %arg1: i32) -> (i32, i32, i32) {
    %c0_i32 = arith.constant 0 : i32
    %c0_i32_0 = arith.constant 0 : i32
    %c0_i32_1 = arith.constant 0 : i32
    return %arg0, %c0_i32, %c0_i32_0 : i32, i32, i32
  }
  func.func @transform_1(%arg0: i32, %arg1: i32) -> (i32, i32) {
    %c0_i32 = arith.constant 0 : i32
    %c0_i32_0 = arith.constant 0 : i32
    %c0_i32_1 = arith.constant 0 : i32
    return %c0_i32, %c0_i32_0 : i32, i32
  }
  func.func @transform_2(%arg0: i32, %arg1: i32) -> (i32, i32) {
    %c0_i32 = arith.constant 0 : i32
    %c0_i32_0 = arith.constant 0 : i32
    %c0_i32_1 = arith.constant 0 : i32
    return %c0_i32, %c0_i32_0 : i32, i32
  }
  func.func @transform_3(%arg0: i32, %arg1: i32) -> (i32, i32) {
    %c0_i32 = arith.constant 0 : i32
    %c0_i32_0 = arith.constant 0 : i32
    %c0_i32_1 = arith.constant 0 : i32
    return %c0_i32, %c0_i32_0 : i32, i32
  }
  func.func @transform_4(%arg0: i32, %arg1: i32) -> (i32, i32) {
    %c0_i32 = arith.constant 0 : i32
    %c0_i32_0 = arith.constant 0 : i32
    %c0_i32_1 = arith.constant 0 : i32
    return %c0_i32, %c0_i32_0 : i32, i32
  }
  func.func @transform_5(%arg0: i32, %arg1: i32) -> (i32, i32, i32) {
    %c0_i32 = arith.constant 0 : i32
    %c0_i32_0 = arith.constant 0 : i32
    %c0_i32_1 = arith.constant 0 : i32
    return %arg0, %c0_i32, %c0_i32_0 : i32, i32, i32
  }
}

</mosaic_0001>

<llo_original>
// kernel: tpu_custom_call.1
$region0: #{tpu_custom_call.1}
  #allocation0 [shape = 'u32[]', space=smem, size = 0x4, offset = 0x4, fixed_abs, tag = 'smem constant byte address 0x4 - core index']
  #allocation1 [shape = 'u32[144,128]{1,0:T(1,128)}', space=vmem, size = 0x12000, scoped, tag = 'internal scratch']
  #allocation2 [shape = 'bf16[10,18,64]{2,1,0:T(8,128)(2,1)}', space=vmem, size = 0xf000, scoped, tag = 'scratch operand']
  #allocation3 [shape = 'bf16[128,640]{1,0:T(16,128)(2,1)}', space=vmem, size = 0x28000, scoped, tag = 'scratch operand']
  %s0 = inlined_call_operand.vmem [shape: f32[2,12,18], index: 0, kind: input, shape index: {}]
  %s1 = inlined_call_operand.vmem [shape: f32[9,64], index: 1, kind: input, shape index: {}]
  %s2 = inlined_call_operand.vmem [shape: f32[1,64], index: 2, kind: input, shape index: {}]
  %s3 = inlined_call_operand.vmem [shape: bf16[640,64], index: 3, kind: input, shape index: {}]
  %s4 = inlined_call_operand.vmem [shape: f32[1,64], index: 4, kind: input, shape index: {}]
  %s5 = inlined_call_operand.hbm [shape: f32[2,16,64], index: 5, kind: output, shape index: {}]
  %s6 = sld [smem:[#allocation0]]
  $region61: #{tpu_custom_call.1} parent=0
    _
  %s8 = ssub.s32 1, %s6
  %s9 = scalar_select 0, %s8, %s6
  $region1: #{tpu_custom_call.1} parent=0
    #allocation4 [shape = 'u8[16384]{0}', space=vmem, size = 0x4000, scoped, tag = 'output window, operand 0']
    #allocation5 [shape = 's32[2]{0}', space=sflag, size = 0x8, scoped, tag = 'scoped memory for tpu_custom_call.1']
    %10 = vsyncpa [#allocation5], 0
    %s11 = scalar_lea.sflag [#allocation5], 1
    %12 = vsyncpa %s11, 0
    loop: start=0, step=1, limit=4
    $region2: #{tpu_custom_call.1} parent=1 // loop_pre_header
      _
    $region3: #{tpu_custom_call.1} parent=1 // loop_header
      %s14 = sphi 0, %s18
      %p15 = scmp.ge.s32.totalorder %s14, 4
      %s21 = sphi 0, %s33
      %s22 = sphi 0, %s29
      %s23 = sphi 0, %s21
      %s24 = sphi 0, %s22
      %s25 = sphi 0, %s23
      %s26 = sphi 0, %s24
      %s36 = sphi 0, %s38
      %s39 = sphi 0, %s36
      %s40 = sphi 0, %s39
      %s56 = sphi 0, %s40
      %s60 = sphi 0, %s60
      %s62 = sphi 0, %s60
      %s63 = sphi 0, %s62
      %s77 = sphi 0, %s63
      %s81 = sphi 0, %s81
      %s83 = sphi 0, %s81
      %s84 = sphi 0, %s83
      %s98 = sphi 0, %s84
      %s102 = sphi 0, %s102
      %s104 = sphi 0, %s102
      %s105 = sphi 0, %s104
      %s119 = sphi 0, %s105
      %s123 = sphi 0, %s123
      %s125 = sphi 0, %s123
      %s126 = sphi 0, %s125
      %s140 = sphi 0, %s126
      %s146 = sphi 0, %s148
      %s149 = sphi 0, %s146
      %s150 = sphi 0, %s149
      %s166 = sphi 0, %s150
    $region4: #{tpu_custom_call.1} parent=1 // loop_header_branch
      %17 = sbr.rel (%p15) target = $region8
    $region5: #{tpu_custom_call.1} parent=1 // loop_body
      %s19 = ssub.s32 %s14, 1
      %s20 = ssub.s32 %s14, 2
      %s27 = sadd.s32 1, %s22
      %p28 = scmp.ge.s32.totalorder %s27, 1
      %s29 = scalar_select %p28, 0, %s27
      %s30 = sadd.s32 1, %s21
      %s31 = scalar_select %p28, %s30, %s21
      %p32 = scmp.ge.s32.totalorder %s31, 2
      %s33 = scalar_select %p32, 0, %s31
      %s34 = ssub.s32 %s21, %s33
      %p35 = scmp.eq.s32.totalorder %s34, 0
      %s37 = sadd.s32 %s36, 1
      %s38 = scalar_select %p35, %s36, %s37
      %p41 = pneg %p35
      %p42 = scmp.eq.s32.totalorder %s14, 1
      %p43 = por %p41, %p42
      %p44 = scmp.ne.s32.totalorder %s36, %s39
      %p45 = scmp.eq.s32.totalorder %s14, 0
      %p46 = por %p44, %p45
      %p47 = scmp.ne.s32.totalorder %s36, %s39
      %p48 = scmp.eq.s32.totalorder %s19, 1
      %p49 = por %p47, %p48
      %p50 = scmp.ne.s32.totalorder %s39, %s40
      %p51 = scmp.eq.s32.totalorder %s19, 0
      %p52 = por %p50, %p51
      %p53 = scmp.ne.s32.totalorder %s39, %s40
      %p54 = scmp.eq.s32.totalorder %s20, 1
      %p55 = por %p53, %p54
      %p57 = scmp.ne.s32.totalorder %s40, %s56
      %p58 = scmp.eq.s32.totalorder %s20, 0
      %p59 = por %p57, %p58
      %s61 = sadd.s32 %s60, 1
      %p64 = scmp.eq.s32.totalorder %s14, 1
      %p65 = scmp.ne.s32.totalorder %s60, %s62
      %p66 = scmp.eq.s32.totalorder %s14, 0
      %p67 = por %p65, %p66
      %p68 = scmp.ne.s32.totalorder %s60, %s62
      %p69 = scmp.eq.s32.totalorder %s19, 1
      %p70 = por %p68, %p69
      %p71 = scmp.ne.s32.totalorder %s62, %s63
      %p72 = scmp.eq.s32.totalorder %s19, 0
      %p73 = por %p71, %p72
      %p74 = scmp.ne.s32.totalorder %s62, %s63
      %p75 = scmp.eq.s32.totalorder %s20, 1
      %p76 = por %p74, %p75
      %p78 = scmp.ne.s32.totalorder %s63, %s77
      %p79 = scmp.eq.s32.totalorder %s20, 0
      %p80 = por %p78, %p79
      %s82 = sadd.s32 %s81, 1
      %p85 = scmp.eq.s32.totalorder %s14, 1
      %p86 = scmp.ne.s32.totalorder %s81, %s83
      %p87 = scmp.eq.s32.totalorder %s14, 0
      %p88 = por %p86, %p87
      %p89 = scmp.ne.s32.totalorder %s81, %s83
      %p90 = scmp.eq.s32.totalorder %s19, 1
      %p91 = por %p89, %p90
      %p92 = scmp.ne.s32.totalorder %s83, %s84
      %p93 = scmp.eq.s32.totalorder %s19, 0
      %p94 = por %p92, %p93
      %p95 = scmp.ne.s32.totalorder %s83, %s84
      %p96 = scmp.eq.s32.totalorder %s20, 1
      %p97 = por %p95, %p96
      %p99 = scmp.ne.s32.totalorder %s84, %s98
      %p100 = scmp.eq.s32.totalorder %s20, 0
      %p101 = por %p99, %p100
      %s103 = sadd.s32 %s102, 1
      %p106 = scmp.eq.s32.totalorder %s14, 1
      %p107 = scmp.ne.s32.totalorder %s102, %s104
      %p108 = scmp.eq.s32.totalorder %s14, 0
      %p109 = por %p107, %p108
      %p110 = scmp.ne.s32.totalorder %s102, %s104
      %p111 = scmp.eq.s32.totalorder %s19, 1
      %p112 = por %p110, %p111
      %p113 = scmp.ne.s32.totalorder %s104, %s105
      %p114 = scmp.eq.s32.totalorder %s19, 0
      %p115 = por %p113, %p114
      %p116 = scmp.ne.s32.totalorder %s104, %s105
      %p117 = scmp.eq.s32.totalorder %s20, 1
      %p118 = por %p116, %p117
      %p120 = scmp.ne.s32.totalorder %s105, %s119
      %p121 = scmp.eq.s32.totalorder %s20, 0
      %p122 = por %p120, %p121
      %s124 = sadd.s32 %s123, 1
      %p127 = scmp.eq.s32.totalorder %s14, 1
      %p128 = scmp.ne.s32.totalorder %s123, %s125
      %p129 = scmp.eq.s32.totalorder %s14, 0
      %p130 = por %p128, %p129
      %p131 = scmp.ne.s32.totalorder %s123, %s125
      %p132 = scmp.eq.s32.totalorder %s19, 1
      %p133 = por %p131, %p132
      %p134 = scmp.ne.s32.totalorder %s125, %s126
      %p135 = scmp.eq.s32.totalorder %s19, 0
      %p136 = por %p134, %p135
      %p137 = scmp.ne.s32.totalorder %s125, %s126
      %p138 = scmp.eq.s32.totalorder %s20, 1
      %p139 = por %p137, %p138
      %p141 = scmp.ne.s32.totalorder %s126, %s140
      %p142 = scmp.eq.s32.totalorder %s20, 0
      %p143 = por %p141, %p142
      %s144 = ssub.s32 %s21, %s33
      %p145 = scmp.eq.s32.totalorder %s144, 0
      %s147 = sadd.s32 %s146, 1
      %s148 = scalar_select %p145, %s146, %s147
      %p151 = pneg %p145
      %p152 = scmp.eq.s32.totalorder %s14, 1
      %p153 = por %p151, %p152
      %p154 = scmp.ne.s32.totalorder %s146, %s149
      %p155 = scmp.eq.s32.totalorder %s14, 0
      %p156 = por %p154, %p155
      %p157 = scmp.ne.s32.totalorder %s146, %s149
      %p158 = scmp.eq.s32.totalorder %s19, 1
      %p159 = por %p157, %p158
      %p160 = scmp.ne.s32.totalorder %s149, %s150
      %p161 = scmp.eq.s32.totalorder %s19, 0
      %p162 = por %p160, %p161
      %p163 = scmp.ne.s32.totalorder %s149, %s150
      %p164 = scmp.eq.s32.totalorder %s20, 1
      %p165 = por %p163, %p164
      %p167 = scmp.ne.s32.totalorder %s150, %s166
      %p168 = scmp.eq.s32.totalorder %s20, 0
      %p169 = por %p167, %p168
      %p170 = scmp.le.s32.totalorder 1, %s14
      %p171 = scmp.lt.s32.totalorder %s14, 3
      %p172 = pnand %p170, %p171
      %p173 = pneg %p172
      // Predicated region
      $region9: #{tpu_custom_call.1} parent=5 // pred_check
        _
      $region10: #{tpu_custom_call.1} parent=5 // pred_check_branch
        %175 = sbr.rel (%p172) target = $region12
      $region11: #{tpu_custom_call.1} parent=5 // pred_region
        %s176 = ssub.s32 %s14, 1
        // Predicated region
        $region13: #{tpu_custom_call.1} parent=11 // pred_check
          %p177 = pneg %p73
        $region14: #{tpu_custom_call.1} parent=11 // pred_check_branch
          %179 = sbr.rel (%p177) target = $region16
        $region15: #{tpu_custom_call.1} parent=11 // pred_region
          _
        $region16: #{tpu_custom_call.1} parent=11 // pred_fallthru
          _
        // Predicated region
        $region17: #{tpu_custom_call.1} parent=11 // pred_check
          %p180 = pneg %p94
        $region18: #{tpu_custom_call.1} parent=11 // pred_check_branch
          %182 = sbr.rel (%p180) target = $region20
        $region19: #{tpu_custom_call.1} parent=11 // pred_region
          _
        $region20: #{tpu_custom_call.1} parent=11 // pred_fallthru
          _
        // Predicated region
        $region21: #{tpu_custom_call.1} parent=11 // pred_check
          %p183 = pneg %p115
        $region22: #{tpu_custom_call.1} parent=11 // pred_check_branch
          %185 = sbr.rel (%p183) target = $region24
        $region23: #{tpu_custom_call.1} parent=11 // pred_region
          _
        $region24: #{tpu_custom_call.1} parent=11 // pred_fallthru
          _
        // Predicated region
        $region25: #{tpu_custom_call.1} parent=11 // pred_check
          %p186 = pneg %p136
        $region26: #{tpu_custom_call.1} parent=11 // pred_check_branch
          %188 = sbr.rel (%p186) target = $region28
        $region27: #{tpu_custom_call.1} parent=11 // pred_region
          _
        $region28: #{tpu_custom_call.1} parent=11 // pred_fallthru
          _
      $region12: #{tpu_custom_call.1} parent=5 // pred_fallthru
        _
      %p189 = scmp.lt.s32.totalorder %s14, 2
      // Predicated region
      $region29: #{tpu_custom_call.1} parent=5 // pred_check
        %p190 = pneg %p189
      $region30: #{tpu_custom_call.1} parent=5 // pred_check_branch
        %192 = sbr.rel (%p190) target = $region32
      $region31: #{tpu_custom_call.1} parent=5 // pred_region
        // Predicated region
        $region33: #{tpu_custom_call.1} parent=31 // pred_check
          %p193 = pneg %p46
        $region34: #{tpu_custom_call.1} parent=31 // pred_check_branch
          %195 = sbr.rel (%p193) target = $region36
        $region35: #{tpu_custom_call.1} parent=31 // pred_region
          %p196 = scmp.lt.s32.totalorder %s21, 1
          %s197 = scalar_select %p196, %s21, 1
          %s198 = smul.addr %s197, 2
          %s199 = smul.addr %s198, 8
          %s200 = scalar_lea.vmem %s0, %s199
        $region36: #{tpu_custom_call.1} parent=31 // pred_fallthru
          _
      $region32: #{tpu_custom_call.1} parent=5 // pred_fallthru
        _
      %p201 = scmp.le.s32.totalorder 1, %s14
      %p202 = scmp.lt.s32.totalorder %s14, 3
      %p203 = pnand %p201, %p202
      %p204 = pneg %p203
      // Predicated region
      $region37: #{tpu_custom_call.1} parent=5 // pred_check
        _
      $region38: #{tpu_custom_call.1} parent=5 // pred_check_branch
        %206 = sbr.rel (%p203) target = $region40
      $region39: #{tpu_custom_call.1} parent=5 // pred_region
        %s207 = ssub.s32 %s14, 1
        %p208 = scmp.lt.s32.totalorder %s23, 1
        %s209 = scalar_select %p208, %s23, 1
        %s210 = smul.addr %s209, 2
        %s211 = smul.addr %s210, 8
        %s212 = scalar_lea.vmem %s0, %s211
        %p213 = pneg %p52
        %p214 = pneg %p49
        %p215 = pneg %p73
        %p216 = pneg %p70
        %p217 = pneg %p94
        %p218 = pneg %p91
        %p219 = pneg %p115
        %p220 = pneg %p112
        %p221 = pneg %p136
        %p222 = pneg %p133
        %p223 = pneg %p162
        %p224 = pneg %p159
        %s225 = sand.u32 %s149, 1
        %s226 = scalar_lea.sflag [#allocation5], %s225
        %s227 = sand.u32 %s149, 1
        %s228 = smul.addr %s227, 16
        %s229 = scalar_lea.vmem [#allocation4], %s228
        %p230 = scmp.lt.s32.totalorder %s23, 1
        %s231 = scalar_select %p230, %s23, 1
        %s232 = smul.addr %s231, 2
        %s233 = smul.addr %s232, 8
        %s234 = scalar_lea.vmem %s0, %s233
        %s236 = smul.u32 %s24, 8
        %s237 = scalar_lea.vmem %s234, %s236
        %v238 = vld [vmem:[%s237] sm:$0xff]
        %v239 = vld [vmem:[%s237 + $0x8] sm:$0xf]
        %v240 = vlaneseq
        %v241 = vshrl.u32 %v240, 7
        %v242 = vsub.s32 0, %v241
        %v243 = vrot.slane %v238, %v242
        %245 = vbcast.lane.b32.xlu0 %v243, 256
        %v246 = vpop.permute.xlu0 %245
        %s248 = sor.u32 256, 8
        %249 = vbcast.lane.b32.xlu0 %v243, %s248
        %v250 = vpop.permute.xlu0 %249
        %s252 = sor.u32 256, 16
        %253 = vbcast.lane.b32.xlu0 %v243, %s252
        %v254 = vpop.permute.xlu0 %253
        %v255 = vlaneseq
        %v256 = vshrl.u32 %v255, 7
        %v257 = vsub.s32 1, %v256
        %v258 = vrot.slane %v238, %v257
        %260 = vbcast.lane.b32.xlu0 %v258, 256
        %v261 = vpop.permute.xlu0 %260
        %s263 = sor.u32 256, 8
        %264 = vbcast.lane.b32.xlu0 %v258, %s263
        %v265 = vpop.permute.xlu0 %264
        %s267 = sor.u32 256, 16
        %268 = vbcast.lane.b32.xlu0 %v258, %s267
        %v269 = vpop.permute.xlu0 %268
        %v270 = vlaneseq
        %v271 = vshrl.u32 %v270, 7
        %v272 = vsub.s32 2, %v271
        %v273 = vrot.slane %v238, %v272
        %275 = vbcast.lane.b32.xlu0 %v273, 256
        %v276 = vpop.permute.xlu0 %275
        %s278 = sor.u32 256, 8
        %279 = vbcast.lane.b32.xlu0 %v273, %s278
        %v280 = vpop.permute.xlu0 %279
        %s282 = sor.u32 256, 16
        %283 = vbcast.lane.b32.xlu0 %v273, %s282
        %v284 = vpop.permute.xlu0 %283
        %v285 = vlaneseq
        %v286 = vshrl.u32 %v285, 7
        %v287 = vsub.s32 3, %v286
        %v288 = vrot.slane %v238, %v287
        %290 = vbcast.lane.b32.xlu0 %v288, 256
        %v291 = vpop.permute.xlu0 %290
        %s293 = sor.u32 256, 8
        %294 = vbcast.lane.b32.xlu0 %v288, %s293
        %v295 = vpop.permute.xlu0 %294
        %s297 = sor.u32 256, 16
        %298 = vbcast.lane.b32.xlu0 %v288, %s297
        %v299 = vpop.permute.xlu0 %298
        %v300 = vlaneseq
        %v301 = vshrl.u32 %v300, 7
        %v302 = vsub.s32 4, %v301
        %v303 = vrot.slane %v238, %v302
        %305 = vbcast.lane.b32.xlu0 %v303, 256
        %v306 = vpop.permute.xlu0 %305
        %s308 = sor.u32 256, 8
        %309 = vbcast.lane.b32.xlu0 %v303, %s308
        %v310 = vpop.permute.xlu0 %309
        %s312 = sor.u32 256, 16
        %313 = vbcast.lane.b32.xlu0 %v303, %s312
        %v314 = vpop.permute.xlu0 %313
        %v315 = vlaneseq
        %v316 = vshrl.u32 %v315, 7
        %v317 = vsub.s32 5, %v316
        %v318 = vrot.slane %v238, %v317
        %320 = vbcast.lane.b32.xlu0 %v318, 256
        %v321 = vpop.permute.xlu0 %320
        %s323 = sor.u32 256, 8
        %324 = vbcast.lane.b32.xlu0 %v318, %s323
        %v325 = vpop.permute.xlu0 %324
        %s327 = sor.u32 256, 16
        %328 = vbcast.lane.b32.xlu0 %v318, %s327
        %v329 = vpop.permute.xlu0 %328
        %v330 = vlaneseq
        %v331 = vshrl.u32 %v330, 7
        %v332 = vsub.s32 6, %v331
        %v333 = vrot.slane %v238, %v332
        %335 = vbcast.lane.b32.xlu0 %v333, 256
        %v336 = vpop.permute.xlu0 %335
        %s338 = sor.u32 256, 8
        %339 = vbcast.lane.b32.xlu0 %v333, %s338
        %v340 = vpop.permute.xlu0 %339
        %s342 = sor.u32 256, 16
        %343 = vbcast.lane.b32.xlu0 %v333, %s342
        %v344 = vpop.permute.xlu0 %343
        %v345 = vlaneseq
        %v346 = vshrl.u32 %v345, 7
        %v347 = vsub.s32 7, %v346
        %v348 = vrot.slane %v238, %v347
        %350 = vbcast.lane.b32.xlu0 %v348, 256
        %v351 = vpop.permute.xlu0 %350
        %s353 = sor.u32 256, 8
        %354 = vbcast.lane.b32.xlu0 %v348, %s353
        %v355 = vpop.permute.xlu0 %354
        %s357 = sor.u32 256, 16
        %358 = vbcast.lane.b32.xlu0 %v348, %s357
        %v359 = vpop.permute.xlu0 %358
        %v360 = vlaneseq
        %v361 = vshrl.u32 %v360, 7
        %v362 = vsub.s32 0, %v361
        %v363 = vrot.slane %v239, %v362
        %365 = vbcast.lane.b32.xlu0 %v363, 256
        %v366 = vpop.permute.xlu0 %365
        %s368 = sor.u32 256, 8
        %369 = vbcast.lane.b32.xlu0 %v363, %s368
        %v370 = vpop.permute.xlu0 %369
        %s372 = sor.u32 256, 16
        %373 = vbcast.lane.b32.xlu0 %v363, %s372
        %v374 = vpop.permute.xlu0 %373
        %v375 = vlaneseq
        %v376 = vshrl.u32 %v375, 7
        %v377 = vsub.s32 1, %v376
        %v378 = vrot.slane %v239, %v377
        %380 = vbcast.lane.b32.xlu0 %v378, 256
        %v381 = vpop.permute.xlu0 %380
        %s383 = sor.u32 256, 8
        %384 = vbcast.lane.b32.xlu0 %v378, %s383
        %v385 = vpop.permute.xlu0 %384
        %s387 = sor.u32 256, 16
        %388 = vbcast.lane.b32.xlu0 %v378, %s387
        %v389 = vpop.permute.xlu0 %388
        %v390 = vlaneseq
        %v391 = vshrl.u32 %v390, 7
        %v392 = vsub.s32 2, %v391
        %v393 = vrot.slane %v239, %v392
        %395 = vbcast.lane.b32.xlu0 %v393, 256
        %v396 = vpop.permute.xlu0 %395
        %s398 = sor.u32 256, 8
        %399 = vbcast.lane.b32.xlu0 %v393, %s398
        %v400 = vpop.permute.xlu0 %399
        %s402 = sor.u32 256, 16
        %403 = vbcast.lane.b32.xlu0 %v393, %s402
        %v404 = vpop.permute.xlu0 %403
        %v405 = vlaneseq
        %v406 = vshrl.u32 %v405, 7
        %v407 = vsub.s32 3, %v406
        %v408 = vrot.slane %v239, %v407
        %410 = vbcast.lane.b32.xlu0 %v408, 256
        %v411 = vpop.permute.xlu0 %410
        %s413 = sor.u32 256, 8
        %414 = vbcast.lane.b32.xlu0 %v408, %s413
        %v415 = vpop.permute.xlu0 %414
        %s417 = sor.u32 256, 16
        %418 = vbcast.lane.b32.xlu0 %v408, %s417
        %v419 = vpop.permute.xlu0 %418
        %v420 = vld [vmem:[%s1] sm:$0xff]
        %v421 = vld [vmem:[%s1 + $0x8] sm:$0x1]
        %v422 = vlaneseq
        %v423 = vshrl.u32 %v422, 7
        %v424 = vsub.s32 0, %v423
        %v425 = vrot.slane %v420, %v424
        %v426 = vmul.f32 %v246, %v425
        %v427 = vmul.f32 %v250, %v425
        %v428 = vmul.f32 %v261, %v425
        %v429 = vmul.f32 %v265, %v425
        %v430 = vmul.f32 %v276, %v425
        %v431 = vmul.f32 %v280, %v425
        %v432 = vmul.f32 %v291, %v425
        %v433 = vmul.f32 %v295, %v425
        %v434 = vmul.f32 %v306, %v425
        %v435 = vmul.f32 %v310, %v425
        %v436 = vmul.f32 %v321, %v425
        %v437 = vmul.f32 %v325, %v425
        %v438 = vmul.f32 %v336, %v425
        %v439 = vmul.f32 %v340, %v425
        %v440 = vmul.f32 %v351, %v425
        %v441 = vmul.f32 %v355, %v425
        %v442 = vmul.f32 %v366, %v425
        %v443 = vmul.f32 %v370, %v425
        %v444 = vmul.f32 %v381, %v425
        %v445 = vmul.f32 %v385, %v425
        %v446 = vadd.f32 %v426, 0.0
        %v447 = vadd.f32 %v427, 0.0
        %v448 = vadd.f32 %v428, 0.0
        %v449 = vadd.f32 %v429, 0.0
        %v450 = vadd.f32 %v430, 0.0
        %v451 = vadd.f32 %v431, 0.0
        %v452 = vadd.f32 %v432, 0.0
        %v453 = vadd.f32 %v433, 0.0
        %v454 = vadd.f32 %v434, 0.0
        %v455 = vadd.f32 %v435, 0.0
        %v456 = vadd.f32 %v436, 0.0
        %v457 = vadd.f32 %v437, 0.0
        %v458 = vadd.f32 %v438, 0.0
        %v459 = vadd.f32 %v439, 0.0
        %v460 = vadd.f32 %v440, 0.0
        %v461 = vadd.f32 %v441, 0.0
        %v462 = vadd.f32 %v442, 0.0
        %v463 = vadd.f32 %v443, 0.0
        %v464 = vadd.f32 %v444, 0.0
        %v465 = vadd.f32 %v445, 0.0
        %v466 = vlaneseq
        %v467 = vshrl.u32 %v466, 7
        %v468 = vsub.s32 1, %v467
        %v469 = vrot.slane %v420, %v468
        %v470 = vmul.f32 %v246, %v469
        %v471 = vmul.f32 %v250, %v469
        %v472 = vmul.f32 %v254, %v469
        %v473 = vmul.f32 %v261, %v469
        %v474 = vmul.f32 %v265, %v469
        %v475 = vmul.f32 %v269, %v469
        %v476 = vmul.f32 %v276, %v469
        %v477 = vmul.f32 %v280, %v469
        %v478 = vmul.f32 %v284, %v469
        %v479 = vmul.f32 %v291, %v469
        %v480 = vmul.f32 %v295, %v469
        %v481 = vmul.f32 %v299, %v469
        %v482 = vmul.f32 %v306, %v469
        %v483 = vmul.f32 %v310, %v469
        %v484 = vmul.f32 %v314, %v469
        %v485 = vmul.f32 %v321, %v469
        %v486 = vmul.f32 %v325, %v469
        %v487 = vmul.f32 %v329, %v469
        %v488 = vmul.f32 %v336, %v469
        %v489 = vmul.f32 %v340, %v469
        %v490 = vmul.f32 %v344, %v469
        %v491 = vmul.f32 %v351, %v469
        %v492 = vmul.f32 %v355, %v469
        %v493 = vmul.f32 %v359, %v469
        %v494 = vmul.f32 %v366, %v469
        %v495 = vmul.f32 %v370, %v469
        %v496 = vmul.f32 %v374, %v469
        %v497 = vmul.f32 %v381, %v469
        %v498 = vmul.f32 %v385, %v469
        %v499 = vmul.f32 %v389, %v469
        %vm530 = vcmask 1046528
        %v531 = vrot.slane %v470, 1
        %v532 = vrot.slane %v471, 1
        %v533 = vsel %vm530, %v531, %v532
        %v534 = vrot.slane %v472, 1
        %v535 = vsel %vm530, %v532, %v534
        %v536 = vrot.slane %v473, 1
        %v537 = vrot.slane %v474, 1
        %v538 = vsel %vm530, %v536, %v537
        %v539 = vrot.slane %v475, 1
        %v540 = vsel %vm530, %v537, %v539
        %v541 = vrot.slane %v476, 1
        %v542 = vrot.slane %v477, 1
        %v543 = vsel %vm530, %v541, %v542
        %v544 = vrot.slane %v478, 1
        %v545 = vsel %vm530, %v542, %v544
        %v546 = vrot.slane %v479, 1
        %v547 = vrot.slane %v480, 1
        %v548 = vsel %vm530, %v546, %v547
        %v549 = vrot.slane %v481, 1
        %v550 = vsel %vm530, %v547, %v549
        %v551 = vrot.slane %v482, 1
        %v552 = vrot.slane %v483, 1
        %v553 = vsel %vm530, %v551, %v552
        %v554 = vrot.slane %v484, 1
        %v555 = vsel %vm530, %v552, %v554
        %v556 = vrot.slane %v485, 1
        %v557 = vrot.slane %v486, 1
        %v558 = vsel %vm530, %v556, %v557
        %v559 = vrot.slane %v487, 1
        %v560 = vsel %vm530, %v557, %v559
        %v561 = vrot.slane %v488, 1
        %v562 = vrot.slane %v489, 1
        %v563 = vsel %vm530, %v561, %v562
        %v564 = vrot.slane %v490, 1
        %v565 = vsel %vm530, %v562, %v564
        %v566 = vrot.slane %v491, 1
        %v567 = vrot.slane %v492, 1
        %v568 = vsel %vm530, %v566, %v567
        %v569 = vrot.slane %v493, 1
        %v570 = vsel %vm530, %v567, %v569
        %v571 = vrot.slane %v494, 1
        %v572 = vrot.slane %v495, 1
        %v573 = vsel %vm530, %v571, %v572
        %v574 = vrot.slane %v496, 1
        %v575 = vsel %vm530, %v572, %v574
        %v576 = vrot.slane %v497, 1
        %v577 = vrot.slane %v498, 1
        %v578 = vsel %vm530, %v576, %v577
        %v579 = vrot.slane %v499, 1
        %v580 = vsel %vm530, %v577, %v579
        %v601 = vadd.f32 %v446, %v533
        %v602 = vadd.f32 %v447, %v535
        %v603 = vadd.f32 %v448, %v538
        %v604 = vadd.f32 %v449, %v540
        %v605 = vadd.f32 %v450, %v543
        %v606 = vadd.f32 %v451, %v545
        %v607 = vadd.f32 %v452, %v548
        %v608 = vadd.f32 %v453, %v550
        %v609 = vadd.f32 %v454, %v553
        %v610 = vadd.f32 %v455, %v555
        %v611 = vadd.f32 %v456, %v558
        %v612 = vadd.f32 %v457, %v560
        %v613 = vadd.f32 %v458, %v563
        %v614 = vadd.f32 %v459, %v565
        %v615 = vadd.f32 %v460, %v568
        %v616 = vadd.f32 %v461, %v570
        %v617 = vadd.f32 %v462, %v573
        %v618 = vadd.f32 %v463, %v575
        %v619 = vadd.f32 %v464, %v578
        %v620 = vadd.f32 %v465, %v580
        %v621 = vlaneseq
        %v622 = vshrl.u32 %v621, 7
        %v623 = vsub.s32 2, %v622
        %v624 = vrot.slane %v420, %v623
        %v625 = vmul.f32 %v246, %v624
        %v626 = vmul.f32 %v250, %v624
        %v627 = vmul.f32 %v254, %v624
        %v628 = vmul.f32 %v261, %v624
        %v629 = vmul.f32 %v265, %v624
        %v630 = vmul.f32 %v269, %v624
        %v631 = vmul.f32 %v276, %v624
        %v632 = vmul.f32 %v280, %v624
        %v633 = vmul.f32 %v284, %v624
        %v634 = vmul.f32 %v291, %v624
        %v635 = vmul.f32 %v295, %v624
        %v636 = vmul.f32 %v299, %v624
        %v637 = vmul.f32 %v306, %v624
        %v638 = vmul.f32 %v310, %v624
        %v639 = vmul.f32 %v314, %v624
        %v640 = vmul.f32 %v321, %v624
        %v641 = vmul.f32 %v325, %v624
        %v642 = vmul.f32 %v329, %v624
        %v643 = vmul.f32 %v336, %v624
        %v644 = vmul.f32 %v340, %v624
        %v645 = vmul.f32 %v344, %v624
        %v646 = vmul.f32 %v351, %v624
        %v647 = vmul.f32 %v355, %v624
        %v648 = vmul.f32 %v359, %v624
        %v649 = vmul.f32 %v366, %v624
        %v650 = vmul.f32 %v370, %v624
        %v651 = vmul.f32 %v374, %v624
        %v652 = vmul.f32 %v381, %v624
        %v653 = vmul.f32 %v385, %v624
        %v654 = vmul.f32 %v389, %v624
        %vm685 = vcmask 1045504
        %v686 = vrot.slane %v625, 2
        %v687 = vrot.slane %v626, 2
        %v688 = vsel %vm685, %v686, %v687
        %v689 = vrot.slane %v627, 2
        %v690 = vsel %vm685, %v687, %v689
        %v691 = vrot.slane %v628, 2
        %v692 = vrot.slane %v629, 2
        %v693 = vsel %vm685, %v691, %v692
        %v694 = vrot.slane %v630, 2
        %v695 = vsel %vm685, %v692, %v694
        %v696 = vrot.slane %v631, 2
        %v697 = vrot.slane %v632, 2
        %v698 = vsel %vm685, %v696, %v697
        %v699 = vrot.slane %v633, 2
        %v700 = vsel %vm685, %v697, %v699
        %v701 = vrot.slane %v634, 2
        %v702 = vrot.slane %v635, 2
        %v703 = vsel %vm685, %v701, %v702
        %v704 = vrot.slane %v636, 2
        %v705 = vsel %vm685, %v702, %v704
        %v706 = vrot.slane %v637, 2
        %v707 = vrot.slane %v638, 2
        %v708 = vsel %vm685, %v706, %v707
        %v709 = vrot.slane %v639, 2
        %v710 = vsel %vm685, %v707, %v709
        %v711 = vrot.slane %v640, 2
        %v712 = vrot.slane %v641, 2
        %v713 = vsel %vm685, %v711, %v712
        %v714 = vrot.slane %v642, 2
        %v715 = vsel %vm685, %v712, %v714
        %v716 = vrot.slane %v643, 2
        %v717 = vrot.slane %v644, 2
        %v718 = vsel %vm685, %v716, %v717
        %v719 = vrot.slane %v645, 2
        %v720 = vsel %vm685, %v717, %v719
        %v721 = vrot.slane %v646, 2
        %v722 = vrot.slane %v647, 2
        %v723 = vsel %vm685, %v721, %v722
        %v724 = vrot.slane %v648, 2
        %v725 = vsel %vm685, %v722, %v724
        %v726 = vrot.slane %v649, 2
        %v727 = vrot.slane %v650, 2
        %v728 = vsel %vm685, %v726, %v727
        %v729 = vrot.slane %v651, 2
        %v730 = vsel %vm685, %v727, %v729
        %v731 = vrot.slane %v652, 2
        %v732 = vrot.slane %v653, 2
        %v733 = vsel %vm685, %v731, %v732
        %v734 = vrot.slane %v654, 2
        %v735 = vsel %vm685, %v732, %v734
        %v756 = vadd.f32 %v601, %v688
        %v757 = vadd.f32 %v602, %v690
        %v758 = vadd.f32 %v603, %v693
        %v759 = vadd.f32 %v604, %v695
        %v760 = vadd.f32 %v605, %v698
        %v761 = vadd.f32 %v606, %v700
        %v762 = vadd.f32 %v607, %v703
        %v763 = vadd.f32 %v608, %v705
        %v764 = vadd.f32 %v609, %v708
        %v765 = vadd.f32 %v610, %v710
        %v766 = vadd.f32 %v611, %v713
        %v767 = vadd.f32 %v612, %v715
        %v768 = vadd.f32 %v613, %v718
        %v769 = vadd.f32 %v614, %v720
        %v770 = vadd.f32 %v615, %v723
        %v771 = vadd.f32 %v616, %v725
        %v772 = vadd.f32 %v617, %v728
        %v773 = vadd.f32 %v618, %v730
        %v774 = vadd.f32 %v619, %v733
        %v775 = vadd.f32 %v620, %v735
        %v776 = vlaneseq
        %v777 = vshrl.u32 %v776, 7
        %v778 = vsub.s32 3, %v777
        %v779 = vrot.slane %v420, %v778
        %v780 = vmul.f32 %v261, %v779
        %v781 = vmul.f32 %v265, %v779
        %v782 = vmul.f32 %v276, %v779
        %v783 = vmul.f32 %v280, %v779
        %v784 = vmul.f32 %v291, %v779
        %v785 = vmul.f32 %v295, %v779
        %v786 = vmul.f32 %v306, %v779
        %v787 = vmul.f32 %v310, %v779
        %v788 = vmul.f32 %v321, %v779
        %v789 = vmul.f32 %v325, %v779
        %v790 = vmul.f32 %v336, %v779
        %v791 = vmul.f32 %v340, %v779
        %v792 = vmul.f32 %v351, %v779
        %v793 = vmul.f32 %v355, %v779
        %v794 = vmul.f32 %v366, %v779
        %v795 = vmul.f32 %v370, %v779
        %v796 = vmul.f32 %v381, %v779
        %v797 = vmul.f32 %v385, %v779
        %v798 = vmul.f32 %v396, %v779
        %v799 = vmul.f32 %v400, %v779
        %v800 = vadd.f32 %v756, %v780
        %v801 = vadd.f32 %v757, %v781
        %v802 = vadd.f32 %v758, %v782
        %v803 = vadd.f32 %v759, %v783
        %v804 = vadd.f32 %v760, %v784
        %v805 = vadd.f32 %v761, %v785
        %v806 = vadd.f32 %v762, %v786
        %v807 = vadd.f32 %v763, %v787
        %v808 = vadd.f32 %v764, %v788
        %v809 = vadd.f32 %v765, %v789
        %v810 = vadd.f32 %v766, %v790
        %v811 = vadd.f32 %v767, %v791
        %v812 = vadd.f32 %v768, %v792
        %v813 = vadd.f32 %v769, %v793
        %v814 = vadd.f32 %v770, %v794
        %v815 = vadd.f32 %v771, %v795
        %v816 = vadd.f32 %v772, %v796
        %v817 = vadd.f32 %v773, %v797
        %v818 = vadd.f32 %v774, %v798
        %v819 = vadd.f32 %v775, %v799
        %v820 = vlaneseq
        %v821 = vshrl.u32 %v820, 7
        %v822 = vsub.s32 4, %v821
        %v823 = vrot.slane %v420, %v822
        %v824 = vmul.f32 %v261, %v823
        %v825 = vmul.f32 %v265, %v823
        %v826 = vmul.f32 %v269, %v823
        %v827 = vmul.f32 %v276, %v823
        %v828 = vmul.f32 %v280, %v823
        %v829 = vmul.f32 %v284, %v823
        %v830 = vmul.f32 %v291, %v823
        %v831 = vmul.f32 %v295, %v823
        %v832 = vmul.f32 %v299, %v823
        %v833 = vmul.f32 %v306, %v823
        %v834 = vmul.f32 %v310, %v823
        %v835 = vmul.f32 %v314, %v823
        %v836 = vmul.f32 %v321, %v823
        %v837 = vmul.f32 %v325, %v823
        %v838 = vmul.f32 %v329, %v823
        %v839 = vmul.f32 %v336, %v823
        %v840 = vmul.f32 %v340, %v823
        %v841 = vmul.f32 %v344, %v823
        %v842 = vmul.f32 %v351, %v823
        %v843 = vmul.f32 %v355, %v823
        %v844 = vmul.f32 %v359, %v823
        %v845 = vmul.f32 %v366, %v823
        %v846 = vmul.f32 %v370, %v823
        %v847 = vmul.f32 %v374, %v823
        %v848 = vmul.f32 %v381, %v823
        %v849 = vmul.f32 %v385, %v823
        %v850 = vmul.f32 %v389, %v823
        %v851 = vmul.f32 %v396, %v823
        %v852 = vmul.f32 %v400, %v823
        %v853 = vmul.f32 %v404, %v823
        %v884 = vrot.slane %v824, 1
        %v885 = vrot.slane %v825, 1
        %v886 = vsel %vm530, %v884, %v885
        %v887 = vrot.slane %v826, 1
        %v888 = vsel %vm530, %v885, %v887
        %v889 = vrot.slane %v827, 1
        %v890 = vrot.slane %v828, 1
        %v891 = vsel %vm530, %v889, %v890
        %v892 = vrot.slane %v829, 1
        %v893 = vsel %vm530, %v890, %v892
        %v894 = vrot.slane %v830, 1
        %v895 = vrot.slane %v831, 1
        %v896 = vsel %vm530, %v894, %v895
        %v897 = vrot.slane %v832, 1
        %v898 = vsel %vm530, %v895, %v897
        %v899 = vrot.slane %v833, 1
        %v900 = vrot.slane %v834, 1
        %v901 = vsel %vm530, %v899, %v900
        %v902 = vrot.slane %v835, 1
        %v903 = vsel %vm530, %v900, %v902
        %v904 = vrot.slane %v836, 1
        %v905 = vrot.slane %v837, 1
        %v906 = vsel %vm530, %v904, %v905
        %v907 = vrot.slane %v838, 1
        %v908 = vsel %vm530, %v905, %v907
        %v909 = vrot.slane %v839, 1
        %v910 = vrot.slane %v840, 1
        %v911 = vsel %vm530, %v909, %v910
        %v912 = vrot.slane %v841, 1
        %v913 = vsel %vm530, %v910, %v912
        %v914 = vrot.slane %v842, 1
        %v915 = vrot.slane %v843, 1
        %v916 = vsel %vm530, %v914, %v915
        %v917 = vrot.slane %v844, 1
        %v918 = vsel %vm530, %v915, %v917
        %v919 = vrot.slane %v845, 1
        %v920 = vrot.slane %v846, 1
        %v921 = vsel %vm530, %v919, %v920
        %v922 = vrot.slane %v847, 1
        %v923 = vsel %vm530, %v920, %v922
        %v924 = vrot.slane %v848, 1
        %v925 = vrot.slane %v849, 1
        %v926 = vsel %vm530, %v924, %v925
        %v927 = vrot.slane %v850, 1
        %v928 = vsel %vm530, %v925, %v927
        %v929 = vrot.slane %v851, 1
        %v930 = vrot.slane %v852, 1
        %v931 = vsel %vm530, %v929, %v930
        %v932 = vrot.slane %v853, 1
        %v933 = vsel %vm530, %v930, %v932
        %v954 = vadd.f32 %v800, %v886
        %v955 = vadd.f32 %v801, %v888
        %v956 = vadd.f32 %v802, %v891
        %v957 = vadd.f32 %v803, %v893
        %v958 = vadd.f32 %v804, %v896
        %v959 = vadd.f32 %v805, %v898
        %v960 = vadd.f32 %v806, %v901
        %v961 = vadd.f32 %v807, %v903
        %v962 = vadd.f32 %v808, %v906
        %v963 = vadd.f32 %v809, %v908
        %v964 = vadd.f32 %v810, %v911
        %v965 = vadd.f32 %v811, %v913
        %v966 = vadd.f32 %v812, %v916
        %v967 = vadd.f32 %v813, %v918
        %v968 = vadd.f32 %v814, %v921
        %v969 = vadd.f32 %v815, %v923
        %v970 = vadd.f32 %v816, %v926
        %v971 = vadd.f32 %v817, %v928
        %v972 = vadd.f32 %v818, %v931
        %v973 = vadd.f32 %v819, %v933
        %v974 = vlaneseq
        %v975 = vshrl.u32 %v974, 7
        %v976 = vsub.s32 5, %v975
        %v977 = vrot.slane %v420, %v976
        %v978 = vmul.f32 %v261, %v977
        %v979 = vmul.f32 %v265, %v977
        %v980 = vmul.f32 %v269, %v977
        %v981 = vmul.f32 %v276, %v977
        %v982 = vmul.f32 %v280, %v977
        %v983 = vmul.f32 %v284, %v977
        %v984 = vmul.f32 %v291, %v977
        %v985 = vmul.f32 %v295, %v977
        %v986 = vmul.f32 %v299, %v977
        %v987 = vmul.f32 %v306, %v977
        %v988 = vmul.f32 %v310, %v977
        %v989 = vmul.f32 %v314, %v977
        %v990 = vmul.f32 %v321, %v977
        %v991 = vmul.f32 %v325, %v977
        %v992 = vmul.f32 %v329, %v977
        %v993 = vmul.f32 %v336, %v977
        %v994 = vmul.f32 %v340, %v977
        %v995 = vmul.f32 %v344, %v977
        %v996 = vmul.f32 %v351, %v977
        %v997 = vmul.f32 %v355, %v977
        %v998 = vmul.f32 %v359, %v977
        %v999 = vmul.f32 %v366, %v977
        %v1000 = vmul.f32 %v370, %v977
        %v1001 = vmul.f32 %v374, %v977
        %v1002 = vmul.f32 %v381, %v977
        %v1003 = vmul.f32 %v385, %v977
        %v1004 = vmul.f32 %v389, %v977
        %v1005 = vmul.f32 %v396, %v977
        %v1006 = vmul.f32 %v400, %v977
        %v1007 = vmul.f32 %v404, %v977
        %v1038 = vrot.slane %v978, 2
        %v1039 = vrot.slane %v979, 2
        %v1040 = vsel %vm685, %v1038, %v1039
        %v1041 = vrot.slane %v980, 2
        %v1042 = vsel %vm685, %v1039, %v1041
        %v1043 = vrot.slane %v981, 2
        %v1044 = vrot.slane %v982, 2
        %v1045 = vsel %vm685, %v1043, %v1044
        %v1046 = vrot.slane %v983, 2
        %v1047 = vsel %vm685, %v1044, %v1046
        %v1048 = vrot.slane %v984, 2
        %v1049 = vrot.slane %v985, 2
        %v1050 = vsel %vm685, %v1048, %v1049
        %v1051 = vrot.slane %v986, 2
        %v1052 = vsel %vm685, %v1049, %v1051
        %v1053 = vrot.slane %v987, 2
        %v1054 = vrot.slane %v988, 2
        %v1055 = vsel %vm685, %v1053, %v1054
        %v1056 = vrot.slane %v989, 2
        %v1057 = vsel %vm685, %v1054, %v1056
        %v1058 = vrot.slane %v990, 2
        %v1059 = vrot.slane %v991, 2
        %v1060 = vsel %vm685, %v1058, %v1059
        %v1061 = vrot.slane %v992, 2
        %v1062 = vsel %vm685, %v1059, %v1061
        %v1063 = vrot.slane %v993, 2
        %v1064 = vrot.slane %v994, 2
        %v1065 = vsel %vm685, %v1063, %v1064
        %v1066 = vrot.slane %v995, 2
        %v1067 = vsel %vm685, %v1064, %v1066
        %v1068 = vrot.slane %v996, 2
        %v1069 = vrot.slane %v997, 2
        %v1070 = vsel %vm685, %v1068, %v1069
        %v1071 = vrot.slane %v998, 2
        %v1072 = vsel %vm685, %v1069, %v1071
        %v1073 = vrot.slane %v999, 2
        %v1074 = vrot.slane %v1000, 2
        %v1075 = vsel %vm685, %v1073, %v1074
        %v1076 = vrot.slane %v1001, 2
        %v1077 = vsel %vm685, %v1074, %v1076
        %v1078 = vrot.slane %v1002, 2
        %v1079 = vrot.slane %v1003, 2
        %v1080 = vsel %vm685, %v1078, %v1079
        %v1081 = vrot.slane %v1004, 2
        %v1082 = vsel %vm685, %v1079, %v1081
        %v1083 = vrot.slane %v1005, 2
        %v1084 = vrot.slane %v1006, 2
        %v1085 = vsel %vm685, %v1083, %v1084
        %v1086 = vrot.slane %v1007, 2
        %v1087 = vsel %vm685, %v1084, %v1086
        %v1108 = vadd.f32 %v954, %v1040
        %v1109 = vadd.f32 %v955, %v1042
        %v1110 = vadd.f32 %v956, %v1045
        %v1111 = vadd.f32 %v957, %v1047
        %v1112 = vadd.f32 %v958, %v1050
        %v1113 = vadd.f32 %v959, %v1052
        %v1114 = vadd.f32 %v960, %v1055
        %v1115 = vadd.f32 %v961, %v1057
        %v1116 = vadd.f32 %v962, %v1060
        %v1117 = vadd.f32 %v963, %v1062
        %v1118 = vadd.f32 %v964, %v1065
        %v1119 = vadd.f32 %v965, %v1067
        %v1120 = vadd.f32 %v966, %v1070
        %v1121 = vadd.f32 %v967, %v1072
        %v1122 = vadd.f32 %v968, %v1075
        %v1123 = vadd.f32 %v969, %v1077
        %v1124 = vadd.f32 %v970, %v1080
        %v1125 = vadd.f32 %v971, %v1082
        %v1126 = vadd.f32 %v972, %v1085
        %v1127 = vadd.f32 %v973, %v1087
        %v1128 = vlaneseq
        %v1129 = vshrl.u32 %v1128, 7
        %v1130 = vsub.s32 6, %v1129
        %v1131 = vrot.slane %v420, %v1130
        %v1132 = vmul.f32 %v276, %v1131
        %v1133 = vmul.f32 %v280, %v1131
        %v1134 = vmul.f32 %v291, %v1131
        %v1135 = vmul.f32 %v295, %v1131
        %v1136 = vmul.f32 %v306, %v1131
        %v1137 = vmul.f32 %v310, %v1131
        %v1138 = vmul.f32 %v321, %v1131
        %v1139 = vmul.f32 %v325, %v1131
        %v1140 = vmul.f32 %v336, %v1131
        %v1141 = vmul.f32 %v340, %v1131
        %v1142 = vmul.f32 %v351, %v1131
        %v1143 = vmul.f32 %v355, %v1131
        %v1144 = vmul.f32 %v366, %v1131
        %v1145 = vmul.f32 %v370, %v1131
        %v1146 = vmul.f32 %v381, %v1131
        %v1147 = vmul.f32 %v385, %v1131
        %v1148 = vmul.f32 %v396, %v1131
        %v1149 = vmul.f32 %v400, %v1131
        %v1150 = vmul.f32 %v411, %v1131
        %v1151 = vmul.f32 %v415, %v1131
        %v1152 = vadd.f32 %v1108, %v1132
        %v1153 = vadd.f32 %v1109, %v1133
        %v1154 = vadd.f32 %v1110, %v1134
        %v1155 = vadd.f32 %v1111, %v1135
        %v1156 = vadd.f32 %v1112, %v1136
        %v1157 = vadd.f32 %v1113, %v1137
        %v1158 = vadd.f32 %v1114, %v1138
        %v1159 = vadd.f32 %v1115, %v1139
        %v1160 = vadd.f32 %v1116, %v1140
        %v1161 = vadd.f32 %v1117, %v1141
        %v1162 = vadd.f32 %v1118, %v1142
        %v1163 = vadd.f32 %v1119, %v1143
        %v1164 = vadd.f32 %v1120, %v1144
        %v1165 = vadd.f32 %v1121, %v1145
        %v1166 = vadd.f32 %v1122, %v1146
        %v1167 = vadd.f32 %v1123, %v1147
        %v1168 = vadd.f32 %v1124, %v1148
        %v1169 = vadd.f32 %v1125, %v1149
        %v1170 = vadd.f32 %v1126, %v1150
        %v1171 = vadd.f32 %v1127, %v1151
        %v1172 = vlaneseq
        %v1173 = vshrl.u32 %v1172, 7
        %v1174 = vsub.s32 7, %v1173
        %v1175 = vrot.slane %v420, %v1174
        %v1176 = vmul.f32 %v276, %v1175
        %v1177 = vmul.f32 %v280, %v1175
        %v1178 = vmul.f32 %v284, %v1175
        %v1179 = vmul.f32 %v291, %v1175
        %v1180 = vmul.f32 %v295, %v1175
        %v1181 = vmul.f32 %v299, %v1175
        %v1182 = vmul.f32 %v306, %v1175
        %v1183 = vmul.f32 %v310, %v1175
        %v1184 = vmul.f32 %v314, %v1175
        %v1185 = vmul.f32 %v321, %v1175
        %v1186 = vmul.f32 %v325, %v1175
        %v1187 = vmul.f32 %v329, %v1175
        %v1188 = vmul.f32 %v336, %v1175
        %v1189 = vmul.f32 %v340, %v1175
        %v1190 = vmul.f32 %v344, %v1175
        %v1191 = vmul.f32 %v351, %v1175
        %v1192 = vmul.f32 %v355, %v1175
        %v1193 = vmul.f32 %v359, %v1175
        %v1194 = vmul.f32 %v366, %v1175
        %v1195 = vmul.f32 %v370, %v1175
        %v1196 = vmul.f32 %v374, %v1175
        %v1197 = vmul.f32 %v381, %v1175
        %v1198 = vmul.f32 %v385, %v1175
        %v1199 = vmul.f32 %v389, %v1175
        %v1200 = vmul.f32 %v396, %v1175
        %v1201 = vmul.f32 %v400, %v1175
        %v1202 = vmul.f32 %v404, %v1175
        %v1203 = vmul.f32 %v411, %v1175
        %v1204 = vmul.f32 %v415, %v1175
        %v1205 = vmul.f32 %v419, %v1175
        %v1236 = vrot.slane %v1176, 1
        %v1237 = vrot.slane %v1177, 1
        %v1238 = vsel %vm530, %v1236, %v1237
        %v1239 = vrot.slane %v1178, 1
        %v1240 = vsel %vm530, %v1237, %v1239
        %v1241 = vrot.slane %v1179, 1
        %v1242 = vrot.slane %v1180, 1
        %v1243 = vsel %vm530, %v1241, %v1242
        %v1244 = vrot.slane %v1181, 1
        %v1245 = vsel %vm530, %v1242, %v1244
        %v1246 = vrot.slane %v1182, 1
        %v1247 = vrot.slane %v1183, 1
        %v1248 = vsel %vm530, %v1246, %v1247
        %v1249 = vrot.slane %v1184, 1
        %v1250 = vsel %vm530, %v1247, %v1249
        %v1251 = vrot.slane %v1185, 1
        %v1252 = vrot.slane %v1186, 1
        %v1253 = vsel %vm530, %v1251, %v1252
        %v1254 = vrot.slane %v1187, 1
        %v1255 = vsel %vm530, %v1252, %v1254
        %v1256 = vrot.slane %v1188, 1
        %v1257 = vrot.slane %v1189, 1
        %v1258 = vsel %vm530, %v1256, %v1257
        %v1259 = vrot.slane %v1190, 1
        %v1260 = vsel %vm530, %v1257, %v1259
        %v1261 = vrot.slane %v1191, 1
        %v1262 = vrot.slane %v1192, 1
        %v1263 = vsel %vm530, %v1261, %v1262
        %v1264 = vrot.slane %v1193, 1
        %v1265 = vsel %vm530, %v1262, %v1264
        %v1266 = vrot.slane %v1194, 1
        %v1267 = vrot.slane %v1195, 1
        %v1268 = vsel %vm530, %v1266, %v1267
        %v1269 = vrot.slane %v1196, 1
        %v1270 = vsel %vm530, %v1267, %v1269
        %v1271 = vrot.slane %v1197, 1
        %v1272 = vrot.slane %v1198, 1
        %v1273 = vsel %vm530, %v1271, %v1272
        %v1274 = vrot.slane %v1199, 1
        %v1275 = vsel %vm530, %v1272, %v1274
        %v1276 = vrot.slane %v1200, 1
        %v1277 = vrot.slane %v1201, 1
        %v1278 = vsel %vm530, %v1276, %v1277
        %v1279 = vrot.slane %v1202, 1
        %v1280 = vsel %vm530, %v1277, %v1279
        %v1281 = vrot.slane %v1203, 1
        %v1282 = vrot.slane %v1204, 1
        %v1283 = vsel %vm530, %v1281, %v1282
        %v1284 = vrot.slane %v1205, 1
        %v1285 = vsel %vm530, %v1282, %v1284
        %v1306 = vadd.f32 %v1152, %v1238
        %v1307 = vadd.f32 %v1153, %v1240
        %v1308 = vadd.f32 %v1154, %v1243
        %v1309 = vadd.f32 %v1155, %v1245
        %v1310 = vadd.f32 %v1156, %v1248
        %v1311 = vadd.f32 %v1157, %v1250
        %v1312 = vadd.f32 %v1158, %v1253
        %v1313 = vadd.f32 %v1159, %v1255
        %v1314 = vadd.f32 %v1160, %v1258
        %v1315 = vadd.f32 %v1161, %v1260
        %v1316 = vadd.f32 %v1162, %v1263
        %v1317 = vadd.f32 %v1163, %v1265
        %v1318 = vadd.f32 %v1164, %v1268
        %v1319 = vadd.f32 %v1165, %v1270
        %v1320 = vadd.f32 %v1166, %v1273
        %v1321 = vadd.f32 %v1167, %v1275
        %v1322 = vadd.f32 %v1168, %v1278
        %v1323 = vadd.f32 %v1169, %v1280
        %v1324 = vadd.f32 %v1170, %v1283
        %v1325 = vadd.f32 %v1171, %v1285
        %v1326 = vlaneseq
        %v1327 = vshrl.u32 %v1326, 7
        %v1328 = vsub.s32 0, %v1327
        %v1329 = vrot.slane %v421, %v1328
        %v1330 = vmul.f32 %v276, %v1329
        %v1331 = vmul.f32 %v280, %v1329
        %v1332 = vmul.f32 %v284, %v1329
        %v1333 = vmul.f32 %v291, %v1329
        %v1334 = vmul.f32 %v295, %v1329
        %v1335 = vmul.f32 %v299, %v1329
        %v1336 = vmul.f32 %v306, %v1329
        %v1337 = vmul.f32 %v310, %v1329
        %v1338 = vmul.f32 %v314, %v1329
        %v1339 = vmul.f32 %v321, %v1329
        %v1340 = vmul.f32 %v325, %v1329
        %v1341 = vmul.f32 %v329, %v1329
        %v1342 = vmul.f32 %v336, %v1329
        %v1343 = vmul.f32 %v340, %v1329
        %v1344 = vmul.f32 %v344, %v1329
        %v1345 = vmul.f32 %v351, %v1329
        %v1346 = vmul.f32 %v355, %v1329
        %v1347 = vmul.f32 %v359, %v1329
        %v1348 = vmul.f32 %v366, %v1329
        %v1349 = vmul.f32 %v370, %v1329
        %v1350 = vmul.f32 %v374, %v1329
        %v1351 = vmul.f32 %v381, %v1329
        %v1352 = vmul.f32 %v385, %v1329
        %v1353 = vmul.f32 %v389, %v1329
        %v1354 = vmul.f32 %v396, %v1329
        %v1355 = vmul.f32 %v400, %v1329
        %v1356 = vmul.f32 %v404, %v1329
        %v1357 = vmul.f32 %v411, %v1329
        %v1358 = vmul.f32 %v415, %v1329
        %v1359 = vmul.f32 %v419, %v1329
        %v1390 = vrot.slane %v1330, 2
        %v1391 = vrot.slane %v1331, 2
        %v1392 = vsel %vm685, %v1390, %v1391
        %v1393 = vrot.slane %v1332, 2
        %v1394 = vsel %vm685, %v1391, %v1393
        %v1395 = vrot.slane %v1333, 2
        %v1396 = vrot.slane %v1334, 2
        %v1397 = vsel %vm685, %v1395, %v1396
        %v1398 = vrot.slane %v1335, 2
        %v1399 = vsel %vm685, %v1396, %v1398
        %v1400 = vrot.slane %v1336, 2
        %v1401 = vrot.slane %v1337, 2
        %v1402 = vsel %vm685, %v1400, %v1401
        %v1403 = vrot.slane %v1338, 2
        %v1404 = vsel %vm685, %v1401, %v1403
        %v1405 = vrot.slane %v1339, 2
        %v1406 = vrot.slane %v1340, 2
        %v1407 = vsel %vm685, %v1405, %v1406
        %v1408 = vrot.slane %v1341, 2
        %v1409 = vsel %vm685, %v1406, %v1408
        %v1410 = vrot.slane %v1342, 2
        %v1411 = vrot.slane %v1343, 2
        %v1412 = vsel %vm685, %v1410, %v1411
        %v1413 = vrot.slane %v1344, 2
        %v1414 = vsel %vm685, %v1411, %v1413
        %v1415 = vrot.slane %v1345, 2
        %v1416 = vrot.slane %v1346, 2
        %v1417 = vsel %vm685, %v1415, %v1416
        %v1418 = vrot.slane %v1347, 2
        %v1419 = vsel %vm685, %v1416, %v1418
        %v1420 = vrot.slane %v1348, 2
        %v1421 = vrot.slane %v1349, 2
        %v1422 = vsel %vm685, %v1420, %v1421
        %v1423 = vrot.slane %v1350, 2
        %v1424 = vsel %vm685, %v1421, %v1423
        %v1425 = vrot.slane %v1351, 2
        %v1426 = vrot.slane %v1352, 2
        %v1427 = vsel %vm685, %v1425, %v1426
        %v1428 = vrot.slane %v1353, 2
        %v1429 = vsel %vm685, %v1426, %v1428
        %v1430 = vrot.slane %v1354, 2
        %v1431 = vrot.slane %v1355, 2
        %v1432 = vsel %vm685, %v1430, %v1431
        %v1433 = vrot.slane %v1356, 2
        %v1434 = vsel %vm685, %v1431, %v1433
        %v1435 = vrot.slane %v1357, 2
        %v1436 = vrot.slane %v1358, 2
        %v1437 = vsel %vm685, %v1435, %v1436
        %v1438 = vrot.slane %v1359, 2
        %v1439 = vsel %vm685, %v1436, %v1438
        %v1460 = vadd.f32 %v1306, %v1392
        %v1461 = vadd.f32 %v1307, %v1394
        %v1462 = vadd.f32 %v1308, %v1397
        %v1463 = vadd.f32 %v1309, %v1399
        %v1464 = vadd.f32 %v1310, %v1402
        %v1465 = vadd.f32 %v1311, %v1404
        %v1466 = vadd.f32 %v1312, %v1407
        %v1467 = vadd.f32 %v1313, %v1409
        %v1468 = vadd.f32 %v1314, %v1412
        %v1469 = vadd.f32 %v1315, %v1414
        %v1470 = vadd.f32 %v1316, %v1417
        %v1471 = vadd.f32 %v1317, %v1419
        %v1472 = vadd.f32 %v1318, %v1422
        %v1473 = vadd.f32 %v1319, %v1424
        %v1474 = vadd.f32 %v1320, %v1427
        %v1475 = vadd.f32 %v1321, %v1429
        %v1476 = vadd.f32 %v1322, %v1432
        %v1477 = vadd.f32 %v1323, %v1434
        %v1478 = vadd.f32 %v1324, %v1437
        %v1479 = vadd.f32 %v1325, %v1439
        %v1480 = vld [vmem:[%s2] sm:$0x1]
        %v1482 = vlaneseq
        %v1483 = vshrl.u32 %v1482, 7
        %v1484 = vsub.s32 0, %v1483
        %v1485 = vrot.slane %v1480, %v1484
        %v1487 = vadd.f32 %v1460, %v1485
        %v1488 = vadd.f32 %v1461, %v1485
        %v1489 = vadd.f32 %v1462, %v1485
        %v1490 = vadd.f32 %v1463, %v1485
        %v1491 = vadd.f32 %v1464, %v1485
        %v1492 = vadd.f32 %v1465, %v1485
        %v1493 = vadd.f32 %v1466, %v1485
        %v1494 = vadd.f32 %v1467, %v1485
        %v1495 = vadd.f32 %v1468, %v1485
        %v1496 = vadd.f32 %v1469, %v1485
        %v1497 = vadd.f32 %v1470, %v1485
        %v1498 = vadd.f32 %v1471, %v1485
        %v1499 = vadd.f32 %v1472, %v1485
        %v1500 = vadd.f32 %v1473, %v1485
        %v1501 = vadd.f32 %v1474, %v1485
        %v1502 = vadd.f32 %v1475, %v1485
        %v1503 = vadd.f32 %v1476, %v1485
        %v1504 = vadd.f32 %v1477, %v1485
        %v1505 = vadd.f32 %v1478, %v1485
        %v1506 = vadd.f32 %v1479, %v1485
        %v1507 = vmax.f32 %v1487, 0.0
        %v1508 = vmax.f32 %v1488, 0.0
        %v1509 = vmax.f32 %v1489, 0.0
        %v1510 = vmax.f32 %v1490, 0.0
        %v1511 = vmax.f32 %v1491, 0.0
        %v1512 = vmax.f32 %v1492, 0.0
        %v1513 = vmax.f32 %v1493, 0.0
        %v1514 = vmax.f32 %v1494, 0.0
        %v1515 = vmax.f32 %v1495, 0.0
        %v1516 = vmax.f32 %v1496, 0.0
        %v1517 = vmax.f32 %v1497, 0.0
        %v1518 = vmax.f32 %v1498, 0.0
        %v1519 = vmax.f32 %v1499, 0.0
        %v1520 = vmax.f32 %v1500, 0.0
        %v1521 = vmax.f32 %v1501, 0.0
        %v1522 = vmax.f32 %v1502, 0.0
        %v1523 = vmax.f32 %v1503, 0.0
        %v1524 = vmax.f32 %v1504, 0.0
        %v1525 = vmax.f32 %v1505, 0.0
        %v1526 = vmax.f32 %v1506, 0.0
        %s1527 = ssub.s32 %s236, 1
        %v1528 = vstv %s1527
        %v1529 = vadd.s32 %v1528, 1
        %v1530 = vadd.s32 %v1528, 2
        %v1531 = vadd.s32 %v1528, 3
        %v1532 = vadd.s32 %v1528, 4
        %v1533 = vadd.s32 %v1528, 5
        %v1534 = vadd.s32 %v1528, 6
        %v1535 = vadd.s32 %v1528, 7
        %v1536 = vadd.s32 %v1528, 8
        %v1537 = vadd.s32 %v1528, 9
        %vm1538 = vcmp.ge.s32.totalorder %v1528, 0
        %vm1539 = vcmp.ge.s32.totalorder %v1529, 0
        %vm1540 = vcmp.ge.s32.totalorder %v1530, 0
        %vm1541 = vcmp.ge.s32.totalorder %v1531, 0
        %vm1542 = vcmp.ge.s32.totalorder %v1532, 0
        %vm1543 = vcmp.ge.s32.totalorder %v1533, 0
        %vm1544 = vcmp.ge.s32.totalorder %v1534, 0
        %vm1545 = vcmp.ge.s32.totalorder %v1535, 0
        %vm1546 = vcmp.ge.s32.totalorder %v1536, 0
        %vm1547 = vcmp.ge.s32.totalorder %v1537, 0
        %vm1548 = vcmp.lt.s32.totalorder %v1528, 8
        %vm1549 = vcmp.lt.s32.totalorder %v1529, 8
        %vm1550 = vcmp.lt.s32.totalorder %v1530, 8
        %vm1551 = vcmp.lt.s32.totalorder %v1531, 8
        %vm1552 = vcmp.lt.s32.totalorder %v1532, 8
        %vm1553 = vcmp.lt.s32.totalorder %v1533, 8
        %vm1554 = vcmp.lt.s32.totalorder %v1534, 8
        %vm1555 = vcmp.lt.s32.totalorder %v1535, 8
        %vm1556 = vcmp.lt.s32.totalorder %v1536, 8
        %vm1557 = vcmp.lt.s32.totalorder %v1537, 8
        %vm1558 = vmand %vm1538, %vm1548
        %vm1559 = vmand %vm1539, %vm1549
        %vm1560 = vmand %vm1540, %vm1550
        %vm1561 = vmand %vm1541, %vm1551
        %vm1562 = vmand %vm1542, %vm1552
        %vm1563 = vmand %vm1543, %vm1553
        %vm1564 = vmand %vm1544, %vm1554
        %vm1565 = vmand %vm1545, %vm1555
        %vm1566 = vmand %vm1546, %vm1556
        %vm1567 = vmand %vm1547, %vm1557
        %v1568 = vsel %vm1558, 1, 0
        %v1569 = vsel %vm1559, 1, 0
        %v1570 = vsel %vm1560, 1, 0
        %v1571 = vsel %vm1561, 1, 0
        %v1572 = vsel %vm1562, 1, 0
        %v1573 = vsel %vm1563, 1, 0
        %v1574 = vsel %vm1564, 1, 0
        %v1575 = vsel %vm1565, 1, 0
        %v1576 = vsel %vm1566, 1, 0
        %v1577 = vsel %vm1567, 1, 0
        %vm1578 = vcmp.eq.s32.totalorder %v1568, 1
        %vm1579 = vcmp.eq.s32.totalorder %v1569, 1
        %vm1580 = vcmp.eq.s32.totalorder %v1570, 1
        %vm1581 = vcmp.eq.s32.totalorder %v1571, 1
        %vm1582 = vcmp.eq.s32.totalorder %v1572, 1
        %vm1583 = vcmp.eq.s32.totalorder %v1573, 1
        %vm1584 = vcmp.eq.s32.totalorder %v1574, 1
        %vm1585 = vcmp.eq.s32.totalorder %v1575, 1
        %vm1586 = vcmp.eq.s32.totalorder %v1576, 1
        %vm1587 = vcmp.eq.s32.totalorder %v1577, 1
        %v1588 = vsel %vm1578, %v1507, 0.0
        %v1589 = vsel %vm1578, %v1508, 0.0
        %v1590 = vsel %vm1579, %v1509, 0.0
        %v1591 = vsel %vm1579, %v1510, 0.0
        %v1592 = vsel %vm1580, %v1511, 0.0
        %v1593 = vsel %vm1580, %v1512, 0.0
        %v1594 = vsel %vm1581, %v1513, 0.0
        %v1595 = vsel %vm1581, %v1514, 0.0
        %v1596 = vsel %vm1582, %v1515, 0.0
        %v1597 = vsel %vm1582, %v1516, 0.0
        %v1598 = vsel %vm1583, %v1517, 0.0
        %v1599 = vsel %vm1583, %v1518, 0.0
        %v1600 = vsel %vm1584, %v1519, 0.0
        %v1601 = vsel %vm1584, %v1520, 0.0
        %v1602 = vsel %vm1585, %v1521, 0.0
        %v1603 = vsel %vm1585, %v1522, 0.0
        %v1604 = vsel %vm1586, %v1523, 0.0
        %v1605 = vsel %vm1586, %v1524, 0.0
        %v1606 = vsel %vm1587, %v1525, 0.0
        %v1607 = vsel %vm1587, %v1526, 0.0
        %v1608 = vpack.c.bf16 %v1589, %v1588
        %v1609 = vpack.c.bf16 %v1591, %v1590
        %v1610 = vpack.c.bf16 %v1593, %v1592
        %v1611 = vpack.c.bf16 %v1595, %v1594
        %v1612 = vpack.c.bf16 %v1597, %v1596
        %v1613 = vpack.c.bf16 %v1599, %v1598
        %v1614 = vpack.c.bf16 %v1601, %v1600
        %v1615 = vpack.c.bf16 %v1603, %v1602
        %v1616 = vpack.c.bf16 %v1605, %v1604
        %v1617 = vpack.c.bf16 %v1607, %v1606
        %v1628 = vunpack.c.l.b16 %v1608
        %v1629 = vunpack.c.h.b16 %v1608
        %v1630 = vunpack.c.l.b16 %v1609
        %v1631 = vunpack.c.h.b16 %v1609
        %v1632 = vunpack.c.l.b16 %v1610
        %v1633 = vunpack.c.h.b16 %v1610
        %v1634 = vunpack.c.l.b16 %v1611
        %v1635 = vunpack.c.h.b16 %v1611
        %v1636 = vunpack.c.l.b16 %v1612
        %v1637 = vunpack.c.h.b16 %v1612
        %v1638 = vunpack.c.l.b16 %v1613
        %v1639 = vunpack.c.h.b16 %v1613
        %v1640 = vunpack.c.l.b16 %v1614
        %v1641 = vunpack.c.h.b16 %v1614
        %v1642 = vunpack.c.l.b16 %v1615
        %v1643 = vunpack.c.h.b16 %v1615
        %v1644 = vunpack.c.l.b16 %v1616
        %v1645 = vunpack.c.h.b16 %v1616
        %v1646 = vunpack.c.l.b16 %v1617
        %v1647 = vunpack.c.h.b16 %v1617
        %v1648 = vpack.c.b16 %v1628, %v1628
        %v1649 = vpack.c.b16 %v1629, %v1629
        %v1650 = vpack.c.b16 %v1630, %v1630
        %v1651 = vpack.c.b16 %v1631, %v1631
        %v1652 = vpack.c.b16 %v1632, %v1632
        %v1653 = vpack.c.b16 %v1633, %v1633
        %v1654 = vpack.c.b16 %v1634, %v1634
        %v1655 = vpack.c.b16 %v1635, %v1635
        %v1656 = vpack.c.b16 %v1636, %v1636
        %v1657 = vpack.c.b16 %v1637, %v1637
        %v1658 = vpack.c.b16 %v1638, %v1638
        %v1659 = vpack.c.b16 %v1639, %v1639
        %v1660 = vpack.c.b16 %v1640, %v1640
        %v1661 = vpack.c.b16 %v1641, %v1641
        %v1662 = vpack.c.b16 %v1642, %v1642
        %v1663 = vpack.c.b16 %v1643, %v1643
        %v1664 = vpack.c.b16 %v1644, %v1644
        %v1665 = vpack.c.b16 %v1645, %v1645
        %v1666 = vpack.c.b16 %v1646, %v1646
        %v1667 = vpack.c.b16 %v1647, %v1647
        %vm1668 = vsmask.f32 256
        %vm1669 = vsmask.f32 4368
        %vm1670 = vmor %vm1668, %vm1669
        %v1672 = vshrl.u32 %v1648, 16
        %v1674 = vrot.slane %v1672, 7
        %v1675 = vshll.u32 %v1648, 16
        %v1677 = vor.u32 %v1674, %v1675
        %v1678 = vrot.slane %v1674, 4
        %v1680 = vshrl.u32 %v1649, 16
        %v1682 = vrot.slane %v1680, 7
        %v1683 = vshll.u32 %v1649, 16
        %v1685 = vor.u32 %v1682, %v1683
        %v1686 = vsel %vm1670, %v1678, %v1685
        %v1687 = vrot.slane %v1682, 4
        %v1689 = vshrl.u32 %v1650, 16
        %v1691 = vrot.slane %v1689, 7
        %v1692 = vshll.u32 %v1650, 16
        %v1694 = vor.u32 %v1691, %v1692
        %v1695 = vrot.slane %v1691, 4
        %v1697 = vshrl.u32 %v1651, 16
        %v1699 = vrot.slane %v1697, 7
        %v1700 = vshll.u32 %v1651, 16
        %v1702 = vor.u32 %v1699, %v1700
        %v1703 = vsel %vm1670, %v1695, %v1702
        %v1704 = vrot.slane %v1699, 4
        %v1706 = vshrl.u32 %v1652, 16
        %v1708 = vrot.slane %v1706, 7
        %v1709 = vshll.u32 %v1652, 16
        %v1711 = vor.u32 %v1708, %v1709
        %v1712 = vrot.slane %v1708, 4
        %v1714 = vshrl.u32 %v1653, 16
        %v1716 = vrot.slane %v1714, 7
        %v1717 = vshll.u32 %v1653, 16
        %v1719 = vor.u32 %v1716, %v1717
        %v1720 = vsel %vm1670, %v1712, %v1719
        %v1721 = vrot.slane %v1716, 4
        %v1723 = vshrl.u32 %v1654, 16
        %v1725 = vrot.slane %v1723, 7
        %v1726 = vshll.u32 %v1654, 16
        %v1728 = vor.u32 %v1725, %v1726
        %v1729 = vrot.slane %v1725, 4
        %v1731 = vshrl.u32 %v1655, 16
        %v1733 = vrot.slane %v1731, 7
        %v1734 = vshll.u32 %v1655, 16
        %v1736 = vor.u32 %v1733, %v1734
        %v1737 = vsel %vm1670, %v1729, %v1736
        %v1738 = vrot.slane %v1733, 4
        %v1740 = vshrl.u32 %v1656, 16
        %v1742 = vrot.slane %v1740, 7
        %v1743 = vshll.u32 %v1656, 16
        %v1745 = vor.u32 %v1742, %v1743
        %v1746 = vrot.slane %v1742, 4
        %v1748 = vshrl.u32 %v1657, 16
        %v1750 = vrot.slane %v1748, 7
        %v1751 = vshll.u32 %v1657, 16
        %v1753 = vor.u32 %v1750, %v1751
        %v1754 = vsel %vm1670, %v1746, %v1753
        %v1755 = vrot.slane %v1750, 4
        %v1757 = vshrl.u32 %v1658, 16
        %v1759 = vrot.slane %v1757, 7
        %v1760 = vshll.u32 %v1658, 16
        %v1762 = vor.u32 %v1759, %v1760
        %v1763 = vrot.slane %v1759, 4
        %v1765 = vshrl.u32 %v1659, 16
        %v1767 = vrot.slane %v1765, 7
        %v1768 = vshll.u32 %v1659, 16
        %v1770 = vor.u32 %v1767, %v1768
        %v1771 = vsel %vm1670, %v1763, %v1770
        %v1772 = vrot.slane %v1767, 4
        %v1774 = vshrl.u32 %v1660, 16
        %v1776 = vrot.slane %v1774, 7
        %v1777 = vshll.u32 %v1660, 16
        %v1779 = vor.u32 %v1776, %v1777
        %v1780 = vrot.slane %v1776, 4
        %v1782 = vshrl.u32 %v1661, 16
        %v1784 = vrot.slane %v1782, 7
        %v1785 = vshll.u32 %v1661, 16
        %v1787 = vor.u32 %v1784, %v1785
        %v1788 = vsel %vm1670, %v1780, %v1787
        %v1789 = vrot.slane %v1784, 4
        %v1791 = vshrl.u32 %v1662, 16
        %v1793 = vrot.slane %v1791, 7
        %v1794 = vshll.u32 %v1662, 16
        %v1796 = vor.u32 %v1793, %v1794
        %v1797 = vrot.slane %v1793, 4
        %v1799 = vshrl.u32 %v1663, 16
        %v1801 = vrot.slane %v1799, 7
        %v1802 = vshll.u32 %v1663, 16
        %v1804 = vor.u32 %v1801, %v1802
        %v1805 = vsel %vm1670, %v1797, %v1804
        %v1806 = vrot.slane %v1801, 4
        %v1808 = vshrl.u32 %v1664, 16
        %v1810 = vrot.slane %v1808, 7
        %v1811 = vshll.u32 %v1664, 16
        %v1813 = vor.u32 %v1810, %v1811
        %v1814 = vrot.slane %v1810, 4
        %v1816 = vshrl.u32 %v1665, 16
        %v1818 = vrot.slane %v1816, 7
        %v1819 = vshll.u32 %v1665, 16
        %v1821 = vor.u32 %v1818, %v1819
        %v1822 = vsel %vm1670, %v1814, %v1821
        %v1823 = vrot.slane %v1818, 4
        %v1825 = vshrl.u32 %v1666, 16
        %v1827 = vrot.slane %v1825, 7
        %v1828 = vshll.u32 %v1666, 16
        %v1830 = vor.u32 %v1827, %v1828
        %v1831 = vrot.slane %v1827, 4
        %v1833 = vshrl.u32 %v1667, 16
        %v1835 = vrot.slane %v1833, 7
        %v1836 = vshll.u32 %v1667, 16
        %v1838 = vor.u32 %v1835, %v1836
        %v1839 = vsel %vm1670, %v1831, %v1838
        %v1840 = vrot.slane %v1835, 4
        %vm1871 = vcmask 519168
        %vm1872 = vsmask.f32 7938
        %vm1873 = vmand %vm1871, %vm1872
        %v1874 = vld [vmem:[#allocation2] sm:$0xf]
        %v1875 = vsel %vm1873, %v1677, %v1874
        %1876 = vst [vmem:[#allocation2] sm:$0xf] %v1875
        %vm1877 = vcmask 519168
        %1878 = vst.msk [vmem:[#allocation2 + $0x4] sm:$0xf] %vm1877, %v1686
        %vm1879 = vcmask 516096
        %vm1880 = vmand %vm1879, %vm1668
        %v1881 = vld [vmem:[#allocation2 + $0x8] sm:$0x1]
        %v1882 = vsel %vm1880, %v1687, %v1881
        %1883 = vst [vmem:[#allocation2 + $0x8] sm:$0x1] %v1882
        %v1884 = vld [vmem:[#allocation2 + $0xc] sm:$0xf]
        %v1885 = vsel %vm1873, %v1694, %v1884
        %1886 = vst [vmem:[#allocation2 + $0xc] sm:$0xf] %v1885
        %1887 = vst.msk [vmem:[#allocation2 + $0x10] sm:$0xf] %vm1877, %v1703
        %v1888 = vld [vmem:[#allocation2 + $0x14] sm:$0x1]
        %v1889 = vsel %vm1880, %v1704, %v1888
        %1890 = vst [vmem:[#allocation2 + $0x14] sm:$0x1] %v1889
        %v1891 = vld [vmem:[#allocation2 + $0x18] sm:$0xf]
        %v1892 = vsel %vm1873, %v1711, %v1891
        %1893 = vst [vmem:[#allocation2 + $0x18] sm:$0xf] %v1892
        %1894 = vst.msk [vmem:[#allocation2 + $0x1c] sm:$0xf] %vm1877, %v1720
        %v1895 = vld [vmem:[#allocation2 + $0x20] sm:$0x1]
        %v1896 = vsel %vm1880, %v1721, %v1895
        %1897 = vst [vmem:[#allocation2 + $0x20] sm:$0x1] %v1896
        %v1898 = vld [vmem:[#allocation2 + $0x24] sm:$0xf]
        %v1899 = vsel %vm1873, %v1728, %v1898
        %1900 = vst [vmem:[#allocation2 + $0x24] sm:$0xf] %v1899
        %1901 = vst.msk [vmem:[#allocation2 + $0x28] sm:$0xf] %vm1877, %v1737
        %v1902 = vld [vmem:[#allocation2 + $0x2c] sm:$0x1]
        %v1903 = vsel %vm1880, %v1738, %v1902
        %1904 = vst [vmem:[#allocation2 + $0x2c] sm:$0x1] %v1903
        %v1905 = vld [vmem:[#allocation2 + $0x30] sm:$0xf]
        %v1906 = vsel %vm1873, %v1745, %v1905
        %1907 = vst [vmem:[#allocation2 + $0x30] sm:$0xf] %v1906
        %1908 = vst.msk [vmem:[#allocation2 + $0x34] sm:$0xf] %vm1877, %v1754
        %v1909 = vld [vmem:[#allocation2 + $0x38] sm:$0x1]
        %v1910 = vsel %vm1880, %v1755, %v1909
        %1911 = vst [vmem:[#allocation2 + $0x38] sm:$0x1] %v1910
        %v1912 = vld [vmem:[#allocation2 + $0x3c] sm:$0xf]
        %v1913 = vsel %vm1873, %v1762, %v1912
        %1914 = vst [vmem:[#allocation2 + $0x3c] sm:$0xf] %v1913
        %1915 = vst.msk [vmem:[#allocation2 + $0x40] sm:$0xf] %vm1877, %v1771
        %v1916 = vld [vmem:[#allocation2 + $0x44] sm:$0x1]
        %v1917 = vsel %vm1880, %v1772, %v1916
        %1918 = vst [vmem:[#allocation2 + $0x44] sm:$0x1] %v1917
        %v1919 = vld [vmem:[#allocation2 + $0x48] sm:$0xf]
        %v1920 = vsel %vm1873, %v1779, %v1919
        %1921 = vst [vmem:[#allocation2 + $0x48] sm:$0xf] %v1920
        %1922 = vst.msk [vmem:[#allocation2 + $0x4c] sm:$0xf] %vm1877, %v1788
        %v1923 = vld [vmem:[#allocation2 + $0x50] sm:$0x1]
        %v1924 = vsel %vm1880, %v1789, %v1923
        %1925 = vst [vmem:[#allocation2 + $0x50] sm:$0x1] %v1924
        %v1926 = vld [vmem:[#allocation2 + $0x54] sm:$0xf]
        %v1927 = vsel %vm1873, %v1796, %v1926
        %1928 = vst [vmem:[#allocation2 + $0x54] sm:$0xf] %v1927
        %1929 = vst.msk [vmem:[#allocation2 + $0x58] sm:$0xf] %vm1877, %v1805
        %v1930 = vld [vmem:[#allocation2 + $0x5c] sm:$0x1]
        %v1931 = vsel %vm1880, %v1806, %v1930
        %1932 = vst [vmem:[#allocation2 + $0x5c] sm:$0x1] %v1931
        %v1933 = vld [vmem:[#allocation2 + $0x60] sm:$0xf]
        %v1934 = vsel %vm1873, %v1813, %v1933
        %1935 = vst [vmem:[#allocation2 + $0x60] sm:$0xf] %v1934
        %1936 = vst.msk [vmem:[#allocation2 + $0x64] sm:$0xf] %vm1877, %v1822
        %v1937 = vld [vmem:[#allocation2 + $0x68] sm:$0x1]
        %v1938 = vsel %vm1880, %v1823, %v1937
        %1939 = vst [vmem:[#allocation2 + $0x68] sm:$0x1] %v1938
        %v1940 = vld [vmem:[#allocation2 + $0x6c] sm:$0xf]
        %v1941 = vsel %vm1873, %v1830, %v1940
        %1942 = vst [vmem:[#allocation2 + $0x6c] sm:$0xf] %v1941
        %1943 = vst.msk [vmem:[#allocation2 + $0x70] sm:$0xf] %vm1877, %v1839
        %v1944 = vld [vmem:[#allocation2 + $0x74] sm:$0x1]
        %v1945 = vsel %vm1880, %v1840, %v1944
        %1946 = vst [vmem:[#allocation2 + $0x74] sm:$0x1] %v1945
        %v1947 = vld [vmem:[#allocation2] sm:$0x1]
        %v1948 = vsel %vm1880, 0, %v1947
        %1949 = vst [vmem:[#allocation2] sm:$0x1] %v1948
        %v1950 = vld [vmem:[#allocation2 + $0xc] sm:$0x1]
        %v1951 = vsel %vm1880, 0, %v1950
        %1952 = vst [vmem:[#allocation2 + $0xc] sm:$0x1] %v1951
        %v1953 = vld [vmem:[#allocation2 + $0x18] sm:$0x1]
        %v1954 = vsel %vm1880, 0, %v1953
        %1955 = vst [vmem:[#allocation2 + $0x18] sm:$0x1] %v1954
        %v1956 = vld [vmem:[#allocation2 + $0x24] sm:$0x1]
        %v1957 = vsel %vm1880, 0, %v1956
        %1958 = vst [vmem:[#allocation2 + $0x24] sm:$0x1] %v1957
        %v1959 = vld [vmem:[#allocation2 + $0x30] sm:$0x1]
        %v1960 = vsel %vm1880, 0, %v1959
        %1961 = vst [vmem:[#allocation2 + $0x30] sm:$0x1] %v1960
        %v1962 = vld [vmem:[#allocation2 + $0x3c] sm:$0x1]
        %v1963 = vsel %vm1880, 0, %v1962
        %1964 = vst [vmem:[#allocation2 + $0x3c] sm:$0x1] %v1963
        %v1965 = vld [vmem:[#allocation2 + $0x48] sm:$0x1]
        %v1966 = vsel %vm1880, 0, %v1965
        %1967 = vst [vmem:[#allocation2 + $0x48] sm:$0x1] %v1966
        %v1968 = vld [vmem:[#allocation2 + $0x54] sm:$0x1]
        %v1969 = vsel %vm1880, 0, %v1968
        %1970 = vst [vmem:[#allocation2 + $0x54] sm:$0x1] %v1969
        %v1971 = vld [vmem:[#allocation2 + $0x60] sm:$0x1]
        %v1972 = vsel %vm1880, 0, %v1971
        %1973 = vst [vmem:[#allocation2 + $0x60] sm:$0x1] %v1972
        %v1974 = vld [vmem:[#allocation2 + $0x6c] sm:$0x1]
        %v1975 = vsel %vm1880, 0, %v1974
        %1976 = vst [vmem:[#allocation2 + $0x6c] sm:$0x1] %v1975
        %vm1977 = vmand %vm1879, %vm1872
        %v1978 = vld [vmem:[#allocation2 + $0x8] sm:$0x1]
        %v1979 = vsel %vm1977, 0, %v1978
        %1980 = vst [vmem:[#allocation2 + $0x8] sm:$0x1] %v1979
        %v1981 = vld [vmem:[#allocation2 + $0x14] sm:$0x1]
        %v1982 = vsel %vm1977, 0, %v1981
        %1983 = vst [vmem:[#allocation2 + $0x14] sm:$0x1] %v1982
        %v1984 = vld [vmem:[#allocation2 + $0x20] sm:$0x1]
        %v1985 = vsel %vm1977, 0, %v1984
        %1986 = vst [vmem:[#allocation2 + $0x20] sm:$0x1] %v1985
        %v1987 = vld [vmem:[#allocation2 + $0x2c] sm:$0x1]
        %v1988 = vsel %vm1977, 0, %v1987
        %1989 = vst [vmem:[#allocation2 + $0x2c] sm:$0x1] %v1988
        %v1990 = vld [vmem:[#allocation2 + $0x38] sm:$0x1]
        %v1991 = vsel %vm1977, 0, %v1990
        %1992 = vst [vmem:[#allocation2 + $0x38] sm:$0x1] %v1991
        %v1993 = vld [vmem:[#allocation2 + $0x44] sm:$0x1]
        %v1994 = vsel %vm1977, 0, %v1993
        %1995 = vst [vmem:[#allocation2 + $0x44] sm:$0x1] %v1994
        %v1996 = vld [vmem:[#allocation2 + $0x50] sm:$0x1]
        %v1997 = vsel %vm1977, 0, %v1996
        %1998 = vst [vmem:[#allocation2 + $0x50] sm:$0x1] %v1997
        %v1999 = vld [vmem:[#allocation2 + $0x5c] sm:$0x1]
        %v2000 = vsel %vm1977, 0, %v1999
        %2001 = vst [vmem:[#allocation2 + $0x5c] sm:$0x1] %v2000
        %v2002 = vld [vmem:[#allocation2 + $0x68] sm:$0x1]
        %v2003 = vsel %vm1977, 0, %v2002
        %2004 = vst [vmem:[#allocation2 + $0x68] sm:$0x1] %v2003
        %v2005 = vld [vmem:[#allocation2 + $0x74] sm:$0x1]
        %v2006 = vsel %vm1977, 0, %v2005
        %2007 = vst [vmem:[#allocation2 + $0x74] sm:$0x1] %v2006
        %v2008 = vld [vmem:[#allocation2] sm:$0xf]
        %v2009 = vld [vmem:[#allocation2 + $0x4] sm:$0xf]
        %v2010 = vld [vmem:[#allocation2 + $0xc] sm:$0xf]
        %v2011 = vld [vmem:[#allocation2 + $0x10] sm:$0xf]
        %v2012 = vld [vmem:[#allocation2 + $0x18] sm:$0xf]
        %v2013 = vld [vmem:[#allocation2 + $0x1c] sm:$0xf]
        %v2014 = vld [vmem:[#allocation2 + $0x24] sm:$0xf]
        %v2015 = vld [vmem:[#allocation2 + $0x28] sm:$0xf]
        %v2016 = vld [vmem:[#allocation2 + $0x30] sm:$0xf]
        %v2017 = vld [vmem:[#allocation2 + $0x34] sm:$0xf]
        %v2018 = vld [vmem:[#allocation2 + $0x3c] sm:$0xf]
        %v2019 = vld [vmem:[#allocation2 + $0x40] sm:$0xf]
        %v2020 = vld [vmem:[#allocation2 + $0x48] sm:$0xf]
        %v2021 = vld [vmem:[#allocation2 + $0x4c] sm:$0xf]
        %v2022 = vld [vmem:[#allocation2 + $0x54] sm:$0xf]
        %v2023 = vld [vmem:[#allocation2 + $0x58] sm:$0xf]
        %v2024 = vld [vmem:[#allocation2 + $0x8] sm:$0x1]
        %v2025 = vld [vmem:[#allocation2 + $0x14] sm:$0x1]
        %v2026 = vld [vmem:[#allocation2 + $0x20] sm:$0x1]
        %v2027 = vld [vmem:[#allocation2 + $0x2c] sm:$0x1]
        %v2028 = vld [vmem:[#allocation2 + $0x38] sm:$0x1]
        %v2029 = vld [vmem:[#allocation2 + $0x44] sm:$0x1]
        %v2030 = vld [vmem:[#allocation2 + $0x50] sm:$0x1]
        %v2031 = vld [vmem:[#allocation2 + $0x5c] sm:$0x1]
        %vm2032 = vsmask.f32 3328
        %vm2033 = vsmask.f32 7440
        %vm2034 = vmor %vm2032, %vm2033
        %v2036 = vshrl.u32 %v2008, 16
        %v2038 = vrot.slane %v2036, 4
        %v2039 = vshll.u32 %v2008, 16
        %v2041 = vrot.slane %v2039, 5
        %v2042 = vor.u32 %v2038, %v2041
        %v2043 = vrot.slane %v2042, 4
        %v2045 = vshll.u32 %v2009, 16
        %v2047 = vrot.slane %v2045, 5
        %v2048 = vsel %vm2034, %v2043, %v2047
        %v2049 = vshrl.u32 %v2009, 16
        %v2051 = vrot.slane %v2049, 4
        %v2052 = vor.u32 %v2051, %v2047
        %v2053 = vrot.slane %v2052, 4
        %v2055 = vshll.u32 %v2024, 16
        %v2057 = vrot.slane %v2055, 5
        %v2058 = vsel %vm2034, %v2053, %v2057
        %v2060 = vshrl.u32 %v2010, 16
        %v2062 = vrot.slane %v2060, 4
        %v2063 = vshll.u32 %v2010, 16
        %v2065 = vrot.slane %v2063, 5
        %v2066 = vor.u32 %v2062, %v2065
        %v2067 = vrot.slane %v2066, 4
        %v2069 = vshll.u32 %v2011, 16
        %v2071 = vrot.slane %v2069, 5
        %v2072 = vsel %vm2034, %v2067, %v2071
        %v2073 = vshrl.u32 %v2011, 16
        %v2075 = vrot.slane %v2073, 4
        %v2076 = vor.u32 %v2075, %v2071
        %v2077 = vrot.slane %v2076, 4
        %v2079 = vshll.u32 %v2025, 16
        %v2081 = vrot.slane %v2079, 5
        %v2082 = vsel %vm2034, %v2077, %v2081
        %v2084 = vshrl.u32 %v2012, 16
        %v2086 = vrot.slane %v2084, 4
        %v2087 = vshll.u32 %v2012, 16
        %v2089 = vrot.slane %v2087, 5
        %v2090 = vor.u32 %v2086, %v2089
        %v2091 = vrot.slane %v2090, 4
        %v2093 = vshll.u32 %v2013, 16
        %v2095 = vrot.slane %v2093, 5
        %v2096 = vsel %vm2034, %v2091, %v2095
        %v2097 = vshrl.u32 %v2013, 16
        %v2099 = vrot.slane %v2097, 4
        %v2100 = vor.u32 %v2099, %v2095
        %v2101 = vrot.slane %v2100, 4
        %v2103 = vshll.u32 %v2026, 16
        %v2105 = vrot.slane %v2103, 5
        %v2106 = vsel %vm2034, %v2101, %v2105
        %v2108 = vshrl.u32 %v2014, 16
        %v2110 = vrot.slane %v2108, 4
        %v2111 = vshll.u32 %v2014, 16
        %v2113 = vrot.slane %v2111, 5
        %v2114 = vor.u32 %v2110, %v2113
        %v2115 = vrot.slane %v2114, 4
        %v2117 = vshll.u32 %v2015, 16
        %v2119 = vrot.slane %v2117, 5
        %v2120 = vsel %vm2034, %v2115, %v2119
        %v2121 = vshrl.u32 %v2015, 16
        %v2123 = vrot.slane %v2121, 4
        %v2124 = vor.u32 %v2123, %v2119
        %v2125 = vrot.slane %v2124, 4
        %v2127 = vshll.u32 %v2027, 16
        %v2129 = vrot.slane %v2127, 5
        %v2130 = vsel %vm2034, %v2125, %v2129
        %v2132 = vshrl.u32 %v2016, 16
        %v2134 = vrot.slane %v2132, 4
        %v2135 = vshll.u32 %v2016, 16
        %v2137 = vrot.slane %v2135, 5
        %v2138 = vor.u32 %v2134, %v2137
        %v2139 = vrot.slane %v2138, 4
        %v2141 = vshll.u32 %v2017, 16
        %v2143 = vrot.slane %v2141, 5
        %v2144 = vsel %vm2034, %v2139, %v2143
        %v2145 = vshrl.u32 %v2017, 16
        %v2147 = vrot.slane %v2145, 4
        %v2148 = vor.u32 %v2147, %v2143
        %v2149 = vrot.slane %v2148, 4
        %v2151 = vshll.u32 %v2028, 16
        %v2153 = vrot.slane %v2151, 5
        %v2154 = vsel %vm2034, %v2149, %v2153
        %v2156 = vshrl.u32 %v2018, 16
        %v2158 = vrot.slane %v2156, 4
        %v2159 = vshll.u32 %v2018, 16
        %v2161 = vrot.slane %v2159, 5
        %v2162 = vor.u32 %v2158, %v2161
        %v2163 = vrot.slane %v2162, 4
        %v2165 = vshll.u32 %v2019, 16
        %v2167 = vrot.slane %v2165, 5
        %v2168 = vsel %vm2034, %v2163, %v2167
        %v2169 = vshrl.u32 %v2019, 16
        %v2171 = vrot.slane %v2169, 4
        %v2172 = vor.u32 %v2171, %v2167
        %v2173 = vrot.slane %v2172, 4
        %v2175 = vshll.u32 %v2029, 16
        %v2177 = vrot.slane %v2175, 5
        %v2178 = vsel %vm2034, %v2173, %v2177
        %v2180 = vshrl.u32 %v2020, 16
        %v2182 = vrot.slane %v2180, 4
        %v2183 = vshll.u32 %v2020, 16
        %v2185 = vrot.slane %v2183, 5
        %v2186 = vor.u32 %v2182, %v2185
        %v2187 = vrot.slane %v2186, 4
        %v2189 = vshll.u32 %v2021, 16
        %v2191 = vrot.slane %v2189, 5
        %v2192 = vsel %vm2034, %v2187, %v2191
        %v2193 = vshrl.u32 %v2021, 16
        %v2195 = vrot.slane %v2193, 4
        %v2196 = vor.u32 %v2195, %v2191
        %v2197 = vrot.slane %v2196, 4
        %v2199 = vshll.u32 %v2030, 16
        %v2201 = vrot.slane %v2199, 5
        %v2202 = vsel %vm2034, %v2197, %v2201
        %v2204 = vshrl.u32 %v2022, 16
        %v2206 = vrot.slane %v2204, 4
        %v2207 = vshll.u32 %v2022, 16
        %v2209 = vrot.slane %v2207, 5
        %v2210 = vor.u32 %v2206, %v2209
        %v2211 = vrot.slane %v2210, 4
        %v2213 = vshll.u32 %v2023, 16
        %v2215 = vrot.slane %v2213, 5
        %v2216 = vsel %vm2034, %v2211, %v2215
        %v2217 = vshrl.u32 %v2023, 16
        %v2219 = vrot.slane %v2217, 4
        %v2220 = vor.u32 %v2219, %v2215
        %v2221 = vrot.slane %v2220, 4
        %v2223 = vshll.u32 %v2031, 16
        %v2225 = vrot.slane %v2223, 5
        %v2226 = vsel %vm2034, %v2221, %v2225
        %v2243 = vunpack.c.l.b16 %v2008
        %v2244 = vunpack.c.l.b16 %v2009
        %v2245 = vunpack.c.l.b16 %v2010
        %v2246 = vunpack.c.l.b16 %v2011
        %v2247 = vunpack.c.l.b16 %v2012
        %v2248 = vunpack.c.l.b16 %v2013
        %v2249 = vunpack.c.l.b16 %v2014
        %v2250 = vunpack.c.l.b16 %v2015
        %v2251 = vunpack.c.l.b16 %v2016
        %v2252 = vunpack.c.l.b16 %v2017
        %v2253 = vunpack.c.l.b16 %v2018
        %v2254 = vunpack.c.l.b16 %v2019
        %v2255 = vunpack.c.l.b16 %v2020
        %v2256 = vunpack.c.l.b16 %v2021
        %v2257 = vunpack.c.l.b16 %v2022
        %v2258 = vunpack.c.l.b16 %v2023
        %v2259 = vpack.c.b16 %v2244, %v2243
        %v2260 = vpack.c.b16 %v2246, %v2245
        %v2261 = vpack.c.b16 %v2248, %v2247
        %v2262 = vpack.c.b16 %v2250, %v2249
        %v2263 = vpack.c.b16 %v2252, %v2251
        %v2264 = vpack.c.b16 %v2254, %v2253
        %v2265 = vpack.c.b16 %v2256, %v2255
        %v2266 = vpack.c.b16 %v2258, %v2257
        %v2267 = vunpack.c.l.b16 %v2048
        %v2268 = vunpack.c.l.b16 %v2058
        %v2269 = vunpack.c.l.b16 %v2072
        %v2270 = vunpack.c.l.b16 %v2082
        %v2271 = vunpack.c.l.b16 %v2096
        %v2272 = vunpack.c.l.b16 %v2106
        %v2273 = vunpack.c.l.b16 %v2120
        %v2274 = vunpack.c.l.b16 %v2130
        %v2275 = vunpack.c.l.b16 %v2144
        %v2276 = vunpack.c.l.b16 %v2154
        %v2277 = vunpack.c.l.b16 %v2168
        %v2278 = vunpack.c.l.b16 %v2178
        %v2279 = vunpack.c.l.b16 %v2192
        %v2280 = vunpack.c.l.b16 %v2202
        %v2281 = vunpack.c.l.b16 %v2216
        %v2282 = vunpack.c.l.b16 %v2226
        %v2283 = vpack.c.b16 %v2268, %v2267
        %v2284 = vpack.c.b16 %v2270, %v2269
        %v2285 = vpack.c.b16 %v2272, %v2271
        %v2286 = vpack.c.b16 %v2274, %v2273
        %v2287 = vpack.c.b16 %v2276, %v2275
        %v2288 = vpack.c.b16 %v2278, %v2277
        %v2289 = vpack.c.b16 %v2280, %v2279
        %v2290 = vpack.c.b16 %v2282, %v2281
        %2291 = vrot.lane.b32.xlu0 %v2283, 64
        %v2292 = vpop.permute.xlu0 %2291
        %2293 = vrot.lane.b32.xlu0 %v2284, 64
        %v2294 = vpop.permute.xlu0 %2293
        %2295 = vrot.lane.b32.xlu0 %v2285, 64
        %v2296 = vpop.permute.xlu0 %2295
        %2297 = vrot.lane.b32.xlu0 %v2286, 64
        %v2298 = vpop.permute.xlu0 %2297
        %2299 = vrot.lane.b32.xlu0 %v2287, 64
        %v2300 = vpop.permute.xlu0 %2299
        %2301 = vrot.lane.b32.xlu0 %v2288, 64
        %v2302 = vpop.permute.xlu0 %2301
        %2303 = vrot.lane.b32.xlu0 %v2289, 64
        %v2304 = vpop.permute.xlu0 %2303
        %2305 = vrot.lane.b32.xlu0 %v2290, 64
        %v2306 = vpop.permute.xlu0 %2305
        %vm2307 = vcmask 523264
        %v2310 = vsel %vm2307, %v2259, %v2292
        %v2314 = vsel %vm2307, %v2260, %v2294
        %v2318 = vsel %vm2307, %v2261, %v2296
        %v2322 = vsel %vm2307, %v2262, %v2298
        %v2326 = vsel %vm2307, %v2263, %v2300
        %v2330 = vsel %vm2307, %v2264, %v2302
        %v2334 = vsel %vm2307, %v2265, %v2304
        %v2338 = vsel %vm2307, %v2266, %v2306
        %2340 = vst [vmem:[#allocation3] sm:$0xff] %v2310
        %2341 = vst [vmem:[#allocation3 + $0x28] sm:$0xff] %v2314
        %2342 = vst [vmem:[#allocation3 + $0x50] sm:$0xff] %v2318
        %2343 = vst [vmem:[#allocation3 + $0x78] sm:$0xff] %v2322
        %2344 = vst [vmem:[#allocation3 + $0xa0] sm:$0xff] %v2326
        %2345 = vst [vmem:[#allocation3 + $0xc8] sm:$0xff] %v2330
        %2346 = vst [vmem:[#allocation3 + $0xf0] sm:$0xff] %v2334
        %2347 = vst [vmem:[#allocation3 + $0x118] sm:$0xff] %v2338
        %v2348 = vld [vmem:[#allocation2] sm:$0xe]
        %v2349 = vld [vmem:[#allocation2 + $0x4] sm:$0xf]
        %v2350 = vld [vmem:[#allocation2 + $0x8] sm:$0x1]
        %v2351 = vld [vmem:[#allocation2 + $0xc] sm:$0xe]
        %v2352 = vld [vmem:[#allocation2 + $0x10] sm:$0xf]
        %v2353 = vld [vmem:[#allocation2 + $0x14] sm:$0x1]
        %v2354 = vld [vmem:[#allocation2 + $0x18] sm:$0xe]
        %v2355 = vld [vmem:[#allocation2 + $0x1c] sm:$0xf]
        %v2356 = vld [vmem:[#allocation2 + $0x20] sm:$0x1]
        %v2357 = vld [vmem:[#allocation2 + $0x24] sm:$0xe]
        %v2358 = vld [vmem:[#allocation2 + $0x28] sm:$0xf]
        %v2359 = vld [vmem:[#allocation2 + $0x2c] sm:$0x1]
        %v2360 = vld [vmem:[#allocation2 + $0x30] sm:$0xe]
        %v2361 = vld [vmem:[#allocation2 + $0x34] sm:$0xf]
        %v2362 = vld [vmem:[#allocation2 + $0x38] sm:$0x1]
        %v2363 = vld [vmem:[#allocation2 + $0x3c] sm:$0xe]
        %v2364 = vld [vmem:[#allocation2 + $0x40] sm:$0xf]
        %v2365 = vld [vmem:[#allocation2 + $0x44] sm:$0x1]
        %v2366 = vld [vmem:[#allocation2 + $0x48] sm:$0xe]
        %v2367 = vld [vmem:[#allocation2 + $0x4c] sm:$0xf]
        %v2368 = vld [vmem:[#allocation2 + $0x50] sm:$0x1]
        %v2369 = vld [vmem:[#allocation2 + $0x54] sm:$0xe]
        %v2370 = vld [vmem:[#allocation2 + $0x58] sm:$0xf]
        %v2371 = vld [vmem:[#allocation2 + $0x5c] sm:$0x1]
        %vm2396 = vcmask 1042432
        %vm2397 = vcmask 1046532
        %vm2398 = vmor %vm2396, %vm2397
        %v2399 = vrot.slane %v2348, 5
        %v2400 = vrot.slane %v2399, 4
        %v2401 = vrot.slane %v2349, 5
        %v2402 = vsel %vm2398, %v2400, %v2401
        %v2403 = vrot.slane %v2401, 4
        %v2404 = vrot.slane %v2350, 5
        %v2405 = vsel %vm2398, %v2403, %v2404
        %v2406 = vrot.slane %v2351, 5
        %v2407 = vrot.slane %v2406, 4
        %v2408 = vrot.slane %v2352, 5
        %v2409 = vsel %vm2398, %v2407, %v2408
        %v2410 = vrot.slane %v2408, 4
        %v2411 = vrot.slane %v2353, 5
        %v2412 = vsel %vm2398, %v2410, %v2411
        %v2413 = vrot.slane %v2354, 5
        %v2414 = vrot.slane %v2413, 4
        %v2415 = vrot.slane %v2355, 5
        %v2416 = vsel %vm2398, %v2414, %v2415
        %v2417 = vrot.slane %v2415, 4
        %v2418 = vrot.slane %v2356, 5
        %v2419 = vsel %vm2398, %v2417, %v2418
        %v2420 = vrot.slane %v2357, 5
        %v2421 = vrot.slane %v2420, 4
        %v2422 = vrot.slane %v2358, 5
        %v2423 = vsel %vm2398, %v2421, %v2422
        %v2424 = vrot.slane %v2422, 4
        %v2425 = vrot.slane %v2359, 5
        %v2426 = vsel %vm2398, %v2424, %v2425
        %v2427 = vrot.slane %v2360, 5
        %v2428 = vrot.slane %v2427, 4
        %v2429 = vrot.slane %v2361, 5
        %v2430 = vsel %vm2398, %v2428, %v2429
        %v2431 = vrot.slane %v2429, 4
        %v2432 = vrot.slane %v2362, 5
        %v2433 = vsel %vm2398, %v2431, %v2432
        %v2434 = vrot.slane %v2363, 5
        %v2435 = vrot.slane %v2434, 4
        %v2436 = vrot.slane %v2364, 5
        %v2437 = vsel %vm2398, %v2435, %v2436
        %v2438 = vrot.slane %v2436, 4
        %v2439 = vrot.slane %v2365, 5
        %v2440 = vsel %vm2398, %v2438, %v2439
        %v2441 = vrot.slane %v2366, 5
        %v2442 = vrot.slane %v2441, 4
        %v2443 = vrot.slane %v2367, 5
        %v2444 = vsel %vm2398, %v2442, %v2443
        %v2445 = vrot.slane %v2443, 4
        %v2446 = vrot.slane %v2368, 5
        %v2447 = vsel %vm2398, %v2445, %v2446
        %v2448 = vrot.slane %v2369, 5
        %v2449 = vrot.slane %v2448, 4
        %v2450 = vrot.slane %v2370, 5
        %v2451 = vsel %vm2398, %v2449, %v2450
        %v2452 = vrot.slane %v2450, 4
        %v2453 = vrot.slane %v2371, 5
        %v2454 = vsel %vm2398, %v2452, %v2453
        %s2455 = scalar_lea.vmem [#allocation2], 12
        %v2456 = vld [vmem:[%s2455] sm:$0xf]
        %v2457 = vld [vmem:[%s2455 + $0x4] sm:$0xf]
        %v2458 = vld [vmem:[%s2455 + $0xc] sm:$0xf]
        %v2459 = vld [vmem:[%s2455 + $0x10] sm:$0xf]
        %v2460 = vld [vmem:[%s2455 + $0x18] sm:$0xf]
        %v2461 = vld [vmem:[%s2455 + $0x1c] sm:$0xf]
        %v2462 = vld [vmem:[%s2455 + $0x24] sm:$0xf]
        %v2463 = vld [vmem:[%s2455 + $0x28] sm:$0xf]
        %v2464 = vld [vmem:[%s2455 + $0x30] sm:$0xf]
        %v2465 = vld [vmem:[%s2455 + $0x34] sm:$0xf]
        %v2466 = vld [vmem:[%s2455 + $0x3c] sm:$0xf]
        %v2467 = vld [vmem:[%s2455 + $0x40] sm:$0xf]
        %v2468 = vld [vmem:[%s2455 + $0x48] sm:$0xf]
        %v2469 = vld [vmem:[%s2455 + $0x4c] sm:$0xf]
        %v2470 = vld [vmem:[%s2455 + $0x54] sm:$0xf]
        %v2471 = vld [vmem:[%s2455 + $0x58] sm:$0xf]
        %v2472 = vunpack.c.l.b16 %v2402
        %v2473 = vunpack.c.l.b16 %v2405
        %v2474 = vunpack.c.l.b16 %v2409
        %v2475 = vunpack.c.l.b16 %v2412
        %v2476 = vunpack.c.l.b16 %v2416
        %v2477 = vunpack.c.l.b16 %v2419
        %v2478 = vunpack.c.l.b16 %v2423
        %v2479 = vunpack.c.l.b16 %v2426
        %v2480 = vunpack.c.l.b16 %v2430
        %v2481 = vunpack.c.l.b16 %v2433
        %v2482 = vunpack.c.l.b16 %v2437
        %v2483 = vunpack.c.l.b16 %v2440
        %v2484 = vunpack.c.l.b16 %v2444
        %v2485 = vunpack.c.l.b16 %v2447
        %v2486 = vunpack.c.l.b16 %v2451
        %v2487 = vunpack.c.l.b16 %v2454
        %v2488 = vpack.c.b16 %v2473, %v2472
        %v2489 = vpack.c.b16 %v2475, %v2474
        %v2490 = vpack.c.b16 %v2477, %v2476
        %v2491 = vpack.c.b16 %v2479, %v2478
        %v2492 = vpack.c.b16 %v2481, %v2480
        %v2493 = vpack.c.b16 %v2483, %v2482
        %v2494 = vpack.c.b16 %v2485, %v2484
        %v2495 = vpack.c.b16 %v2487, %v2486
        %v2512 = vunpack.c.l.b16 %v2456
        %v2513 = vunpack.c.l.b16 %v2457
        %v2514 = vunpack.c.l.b16 %v2458
        %v2515 = vunpack.c.l.b16 %v2459
        %v2516 = vunpack.c.l.b16 %v2460
        %v2517 = vunpack.c.l.b16 %v2461
        %v2518 = vunpack.c.l.b16 %v2462
        %v2519 = vunpack.c.l.b16 %v2463
        %v2520 = vunpack.c.l.b16 %v2464
        %v2521 = vunpack.c.l.b16 %v2465
        %v2522 = vunpack.c.l.b16 %v2466
        %v2523 = vunpack.c.l.b16 %v2467
        %v2524 = vunpack.c.l.b16 %v2468
        %v2525 = vunpack.c.l.b16 %v2469
        %v2526 = vunpack.c.l.b16 %v2470
        %v2527 = vunpack.c.l.b16 %v2471
        %v2528 = vpack.c.b16 %v2513, %v2512
        %v2529 = vpack.c.b16 %v2515, %v2514
        %v2530 = vpack.c.b16 %v2517, %v2516
        %v2531 = vpack.c.b16 %v2519, %v2518
        %v2532 = vpack.c.b16 %v2521, %v2520
        %v2533 = vpack.c.b16 %v2523, %v2522
        %v2534 = vpack.c.b16 %v2525, %v2524
        %v2535 = vpack.c.b16 %v2527, %v2526
        %2536 = vrot.lane.b32.xlu0 %v2528, 64
        %v2537 = vpop.permute.xlu0 %2536
        %2538 = vrot.lane.b32.xlu0 %v2529, 64
        %v2539 = vpop.permute.xlu0 %2538
        %2540 = vrot.lane.b32.xlu0 %v2530, 64
        %v2541 = vpop.permute.xlu0 %2540
        %2542 = vrot.lane.b32.xlu0 %v2531, 64
        %v2543 = vpop.permute.xlu0 %2542
        %2544 = vrot.lane.b32.xlu0 %v2532, 64
        %v2545 = vpop.permute.xlu0 %2544
        %2546 = vrot.lane.b32.xlu0 %v2533, 64
        %v2547 = vpop.permute.xlu0 %2546
        %2548 = vrot.lane.b32.xlu0 %v2534, 64
        %v2549 = vpop.permute.xlu0 %2548
        %2550 = vrot.lane.b32.xlu0 %v2535, 64
        %v2551 = vpop.permute.xlu0 %2550
        %v2554 = vsel %vm2307, %v2488, %v2537
        %v2558 = vsel %vm2307, %v2489, %v2539
        %v2562 = vsel %vm2307, %v2490, %v2541
        %v2566 = vsel %vm2307, %v2491, %v2543
        %v2570 = vsel %vm2307, %v2492, %v2545
        %v2574 = vsel %vm2307, %v2493, %v2547
        %v2578 = vsel %vm2307, %v2494, %v2549
        %v2582 = vsel %vm2307, %v2495, %v2551
        %2584 = vst [vmem:[#allocation3 + $0x8] sm:$0xff] %v2554
        %2585 = vst [vmem:[#allocation3 + $0x30] sm:$0xff] %v2558
        %2586 = vst [vmem:[#allocation3 + $0x58] sm:$0xff] %v2562
        %2587 = vst [vmem:[#allocation3 + $0x80] sm:$0xff] %v2566
        %2588 = vst [vmem:[#allocation3 + $0xa8] sm:$0xff] %v2570
        %2589 = vst [vmem:[#allocation3 + $0xd0] sm:$0xff] %v2574
        %2590 = vst [vmem:[#allocation3 + $0xf8] sm:$0xff] %v2578
        %2591 = vst [vmem:[#allocation3 + $0x120] sm:$0xff] %v2582
        %v2592 = vld [vmem:[%s2455] sm:$0xf]
        %v2593 = vld [vmem:[%s2455 + $0x4] sm:$0xf]
        %v2594 = vld [vmem:[%s2455 + $0x8] sm:$0x1]
        %v2595 = vld [vmem:[%s2455 + $0xc] sm:$0xf]
        %v2596 = vld [vmem:[%s2455 + $0x10] sm:$0xf]
        %v2597 = vld [vmem:[%s2455 + $0x14] sm:$0x1]
        %v2598 = vld [vmem:[%s2455 + $0x18] sm:$0xf]
        %v2599 = vld [vmem:[%s2455 + $0x1c] sm:$0xf]
        %v2600 = vld [vmem:[%s2455 + $0x20] sm:$0x1]
        %v2601 = vld [vmem:[%s2455 + $0x24] sm:$0xf]
        %v2602 = vld [vmem:[%s2455 + $0x28] sm:$0xf]
        %v2603 = vld [vmem:[%s2455 + $0x2c] sm:$0x1]
        %v2604 = vld [vmem:[%s2455 + $0x30] sm:$0xf]
        %v2605 = vld [vmem:[%s2455 + $0x34] sm:$0xf]
        %v2606 = vld [vmem:[%s2455 + $0x38] sm:$0x1]
        %v2607 = vld [vmem:[%s2455 + $0x3c] sm:$0xf]
        %v2608 = vld [vmem:[%s2455 + $0x40] sm:$0xf]
        %v2609 = vld [vmem:[%s2455 + $0x44] sm:$0x1]
        %v2610 = vld [vmem:[%s2455 + $0x48] sm:$0xf]
        %v2611 = vld [vmem:[%s2455 + $0x4c] sm:$0xf]
        %v2612 = vld [vmem:[%s2455 + $0x50] sm:$0x1]
        %v2613 = vld [vmem:[%s2455 + $0x54] sm:$0xf]
        %v2614 = vld [vmem:[%s2455 + $0x58] sm:$0xf]
        %v2615 = vld [vmem:[%s2455 + $0x5c] sm:$0x1]
        %v2617 = vshrl.u32 %v2592, 16
        %v2619 = vrot.slane %v2617, 4
        %v2620 = vshll.u32 %v2592, 16
        %v2622 = vrot.slane %v2620, 5
        %v2623 = vor.u32 %v2619, %v2622
        %v2624 = vrot.slane %v2623, 4
        %v2626 = vshll.u32 %v2593, 16
        %v2628 = vrot.slane %v2626, 5
        %v2629 = vsel %vm2034, %v2624, %v2628
        %v2630 = vshrl.u32 %v2593, 16
        %v2632 = vrot.slane %v2630, 4
        %v2633 = vor.u32 %v2632, %v2628
        %v2634 = vrot.slane %v2633, 4
        %v2636 = vshll.u32 %v2594, 16
        %v2638 = vrot.slane %v2636, 5
        %v2639 = vsel %vm2034, %v2634, %v2638
        %v2641 = vshrl.u32 %v2595, 16
        %v2643 = vrot.slane %v2641, 4
        %v2644 = vshll.u32 %v2595, 16
        %v2646 = vrot.slane %v2644, 5
        %v2647 = vor.u32 %v2643, %v2646
        %v2648 = vrot.slane %v2647, 4
        %v2650 = vshll.u32 %v2596, 16
        %v2652 = vrot.slane %v2650, 5
        %v2653 = vsel %vm2034, %v2648, %v2652
        %v2654 = vshrl.u32 %v2596, 16
        %v2656 = vrot.slane %v2654, 4
        %v2657 = vor.u32 %v2656, %v2652
        %v2658 = vrot.slane %v2657, 4
        %v2660 = vshll.u32 %v2597, 16
        %v2662 = vrot.slane %v2660, 5
        %v2663 = vsel %vm2034, %v2658, %v2662
        %v2665 = vshrl.u32 %v2598, 16
        %v2667 = vrot.slane %v2665, 4
        %v2668 = vshll.u32 %v2598, 16
        %v2670 = vrot.slane %v2668, 5
        %v2671 = vor.u32 %v2667, %v2670
        %v2672 = vrot.slane %v2671, 4
        %v2674 = vshll.u32 %v2599, 16
        %v2676 = vrot.slane %v2674, 5
        %v2677 = vsel %vm2034, %v2672, %v2676
        %v2678 = vshrl.u32 %v2599, 16
        %v2680 = vrot.slane %v2678, 4
        %v2681 = vor.u32 %v2680, %v2676
        %v2682 = vrot.slane %v2681, 4
        %v2684 = vshll.u32 %v2600, 16
        %v2686 = vrot.slane %v2684, 5
        %v2687 = vsel %vm2034, %v2682, %v2686
        %v2689 = vshrl.u32 %v2601, 16
        %v2691 = vrot.slane %v2689, 4
        %v2692 = vshll.u32 %v2601, 16
        %v2694 = vrot.slane %v2692, 5
        %v2695 = vor.u32 %v2691, %v2694
        %v2696 = vrot.slane %v2695, 4
        %v2698 = vshll.u32 %v2602, 16
        %v2700 = vrot.slane %v2698, 5
        %v2701 = vsel %vm2034, %v2696, %v2700
        %v2702 = vshrl.u32 %v2602, 16
        %v2704 = vrot.slane %v2702, 4
        %v2705 = vor.u32 %v2704, %v2700
        %v2706 = vrot.slane %v2705, 4
        %v2708 = vshll.u32 %v2603, 16
        %v2710 = vrot.slane %v2708, 5
        %v2711 = vsel %vm2034, %v2706, %v2710
        %v2713 = vshrl.u32 %v2604, 16
        %v2715 = vrot.slane %v2713, 4
        %v2716 = vshll.u32 %v2604, 16
        %v2718 = vrot.slane %v2716, 5
        %v2719 = vor.u32 %v2715, %v2718
        %v2720 = vrot.slane %v2719, 4
        %v2722 = vshll.u32 %v2605, 16
        %v2724 = vrot.slane %v2722, 5
        %v2725 = vsel %vm2034, %v2720, %v2724
        %v2726 = vshrl.u32 %v2605, 16
        %v2728 = vrot.slane %v2726, 4
        %v2729 = vor.u32 %v2728, %v2724
        %v2730 = vrot.slane %v2729, 4
        %v2732 = vshll.u32 %v2606, 16
        %v2734 = vrot.slane %v2732, 5
        %v2735 = vsel %vm2034, %v2730, %v2734
        %v2737 = vshrl.u32 %v2607, 16
        %v2739 = vrot.slane %v2737, 4
        %v2740 = vshll.u32 %v2607, 16
        %v2742 = vrot.slane %v2740, 5
        %v2743 = vor.u32 %v2739, %v2742
        %v2744 = vrot.slane %v2743, 4
        %v2746 = vshll.u32 %v2608, 16
        %v2748 = vrot.slane %v2746, 5
        %v2749 = vsel %vm2034, %v2744, %v2748
        %v2750 = vshrl.u32 %v2608, 16
        %v2752 = vrot.slane %v2750, 4
        %v2753 = vor.u32 %v2752, %v2748
        %v2754 = vrot.slane %v2753, 4
        %v2756 = vshll.u32 %v2609, 16
        %v2758 = vrot.slane %v2756, 5
        %v2759 = vsel %vm2034, %v2754, %v2758
        %v2761 = vshrl.u32 %v2610, 16
        %v2763 = vrot.slane %v2761, 4
        %v2764 = vshll.u32 %v2610, 16
        %v2766 = vrot.slane %v2764, 5
        %v2767 = vor.u32 %v2763, %v2766
        %v2768 = vrot.slane %v2767, 4
        %v2770 = vshll.u32 %v2611, 16
        %v2772 = vrot.slane %v2770, 5
        %v2773 = vsel %vm2034, %v2768, %v2772
        %v2774 = vshrl.u32 %v2611, 16
        %v2776 = vrot.slane %v2774, 4
        %v2777 = vor.u32 %v2776, %v2772
        %v2778 = vrot.slane %v2777, 4
        %v2780 = vshll.u32 %v2612, 16
        %v2782 = vrot.slane %v2780, 5
        %v2783 = vsel %vm2034, %v2778, %v2782
        %v2785 = vshrl.u32 %v2613, 16
        %v2787 = vrot.slane %v2785, 4
        %v2788 = vshll.u32 %v2613, 16
        %v2790 = vrot.slane %v2788, 5
        %v2791 = vor.u32 %v2787, %v2790
        %v2792 = vrot.slane %v2791, 4
        %v2794 = vshll.u32 %v2614, 16
        %v2796 = vrot.slane %v2794, 5
        %v2797 = vsel %vm2034, %v2792, %v2796
        %v2798 = vshrl.u32 %v2614, 16
        %v2800 = vrot.slane %v2798, 4
        %v2801 = vor.u32 %v2800, %v2796
        %v2802 = vrot.slane %v2801, 4
        %v2804 = vshll.u32 %v2615, 16
        %v2806 = vrot.slane %v2804, 5
        %v2807 = vsel %vm2034, %v2802, %v2806
        %v2808 = vld [vmem:[%s2455] sm:$0xe]
        %v2809 = vld [vmem:[%s2455 + $0xc] sm:$0xe]
        %v2810 = vld [vmem:[%s2455 + $0x18] sm:$0xe]
        %v2811 = vld [vmem:[%s2455 + $0x24] sm:$0xe]
        %v2812 = vld [vmem:[%s2455 + $0x30] sm:$0xe]
        %v2813 = vld [vmem:[%s2455 + $0x3c] sm:$0xe]
        %v2814 = vld [vmem:[%s2455 + $0x48] sm:$0xe]
        %v2815 = vld [vmem:[%s2455 + $0x54] sm:$0xe]
        %v2840 = vrot.slane %v2808, 5
        %v2841 = vrot.slane %v2840, 4
        %v2842 = vrot.slane %v2593, 5
        %v2843 = vsel %vm2398, %v2841, %v2842
        %v2844 = vrot.slane %v2842, 4
        %v2845 = vrot.slane %v2594, 5
        %v2846 = vsel %vm2398, %v2844, %v2845
        %v2847 = vrot.slane %v2809, 5
        %v2848 = vrot.slane %v2847, 4
        %v2849 = vrot.slane %v2596, 5
        %v2850 = vsel %vm2398, %v2848, %v2849
        %v2851 = vrot.slane %v2849, 4
        %v2852 = vrot.slane %v2597, 5
        %v2853 = vsel %vm2398, %v2851, %v2852
        %v2854 = vrot.slane %v2810, 5
        %v2855 = vrot.slane %v2854, 4
        %v2856 = vrot.slane %v2599, 5
        %v2857 = vsel %vm2398, %v2855, %v2856
        %v2858 = vrot.slane %v2856, 4
        %v2859 = vrot.slane %v2600, 5
        %v2860 = vsel %vm2398, %v2858, %v2859
        %v2861 = vrot.slane %v2811, 5
        %v2862 = vrot.slane %v2861, 4
        %v2863 = vrot.slane %v2602, 5
        %v2864 = vsel %vm2398, %v2862, %v2863
        %v2865 = vrot.slane %v2863, 4
        %v2866 = vrot.slane %v2603, 5
        %v2867 = vsel %vm2398, %v2865, %v2866
        %v2868 = vrot.slane %v2812, 5
        %v2869 = vrot.slane %v2868, 4
        %v2870 = vrot.slane %v2605, 5
        %v2871 = vsel %vm2398, %v2869, %v2870
        %v2872 = vrot.slane %v2870, 4
        %v2873 = vrot.slane %v2606, 5
        %v2874 = vsel %vm2398, %v2872, %v2873
        %v2875 = vrot.slane %v2813, 5
        %v2876 = vrot.slane %v2875, 4
        %v2877 = vrot.slane %v2608, 5
        %v2878 = vsel %vm2398, %v2876, %v2877
        %v2879 = vrot.slane %v2877, 4
        %v2880 = vrot.slane %v2609, 5
        %v2881 = vsel %vm2398, %v2879, %v2880
        %v2882 = vrot.slane %v2814, 5
        %v2883 = vrot.slane %v2882, 4
        %v2884 = vrot.slane %v2611, 5
        %v2885 = vsel %vm2398, %v2883, %v2884
        %v2886 = vrot.slane %v2884, 4
        %v2887 = vrot.slane %v2612, 5
        %v2888 = vsel %vm2398, %v2886, %v2887
        %v2889 = vrot.slane %v2815, 5
        %v2890 = vrot.slane %v2889, 4
        %v2891 = vrot.slane %v2614, 5
        %v2892 = vsel %vm2398, %v2890, %v2891
        %v2893 = vrot.slane %v2891, 4
        %v2894 = vrot.slane %v2615, 5
        %v2895 = vsel %vm2398, %v2893, %v2894
        %v2896 = vunpack.c.l.b16 %v2629
        %v2897 = vunpack.c.l.b16 %v2639
        %v2898 = vunpack.c.l.b16 %v2653
        %v2899 = vunpack.c.l.b16 %v2663
        %v2900 = vunpack.c.l.b16 %v2677
        %v2901 = vunpack.c.l.b16 %v2687
        %v2902 = vunpack.c.l.b16 %v2701
        %v2903 = vunpack.c.l.b16 %v2711
        %v2904 = vunpack.c.l.b16 %v2725
        %v2905 = vunpack.c.l.b16 %v2735
        %v2906 = vunpack.c.l.b16 %v2749
        %v2907 = vunpack.c.l.b16 %v2759
        %v2908 = vunpack.c.l.b16 %v2773
        %v2909 = vunpack.c.l.b16 %v2783
        %v2910 = vunpack.c.l.b16 %v2797
        %v2911 = vunpack.c.l.b16 %v2807
        %v2912 = vpack.c.b16 %v2897, %v2896
        %v2913 = vpack.c.b16 %v2899, %v2898
        %v2914 = vpack.c.b16 %v2901, %v2900
        %v2915 = vpack.c.b16 %v2903, %v2902
        %v2916 = vpack.c.b16 %v2905, %v2904
        %v2917 = vpack.c.b16 %v2907, %v2906
        %v2918 = vpack.c.b16 %v2909, %v2908
        %v2919 = vpack.c.b16 %v2911, %v2910
        %v2920 = vunpack.c.l.b16 %v2843
        %v2921 = vunpack.c.l.b16 %v2846
        %v2922 = vunpack.c.l.b16 %v2850
        %v2923 = vunpack.c.l.b16 %v2853
        %v2924 = vunpack.c.l.b16 %v2857
        %v2925 = vunpack.c.l.b16 %v2860
        %v2926 = vunpack.c.l.b16 %v2864
        %v2927 = vunpack.c.l.b16 %v2867
        %v2928 = vunpack.c.l.b16 %v2871
        %v2929 = vunpack.c.l.b16 %v2874
        %v2930 = vunpack.c.l.b16 %v2878
        %v2931 = vunpack.c.l.b16 %v2881
        %v2932 = vunpack.c.l.b16 %v2885
        %v2933 = vunpack.c.l.b16 %v2888
        %v2934 = vunpack.c.l.b16 %v2892
        %v2935 = vunpack.c.l.b16 %v2895
        %v2936 = vpack.c.b16 %v2921, %v2920
        %v2937 = vpack.c.b16 %v2923, %v2922
        %v2938 = vpack.c.b16 %v2925, %v2924
        %v2939 = vpack.c.b16 %v2927, %v2926
        %v2940 = vpack.c.b16 %v2929, %v2928
        %v2941 = vpack.c.b16 %v2931, %v2930
        %v2942 = vpack.c.b16 %v2933, %v2932
        %v2943 = vpack.c.b16 %v2935, %v2934
        %2944 = vrot.lane.b32.xlu0 %v2936, 64
        %v2945 = vpop.permute.xlu0 %2944
        %2946 = vrot.lane.b32.xlu0 %v2937, 64
        %v2947 = vpop.permute.xlu0 %2946
        %2948 = vrot.lane.b32.xlu0 %v2938, 64
        %v2949 = vpop.permute.xlu0 %2948
        %2950 = vrot.lane.b32.xlu0 %v2939, 64
        %v2951 = vpop.permute.xlu0 %2950
        %2952 = vrot.lane.b32.xlu0 %v2940, 64
        %v2953 = vpop.permute.xlu0 %2952
        %2954 = vrot.lane.b32.xlu0 %v2941, 64
        %v2955 = vpop.permute.xlu0 %2954
        %2956 = vrot.lane.b32.xlu0 %v2942, 64
        %v2957 = vpop.permute.xlu0 %2956
        %2958 = vrot.lane.b32.xlu0 %v2943, 64
        %v2959 = vpop.permute.xlu0 %2958
        %v2962 = vsel %vm2307, %v2912, %v2945
        %v2966 = vsel %vm2307, %v2913, %v2947
        %v2970 = vsel %vm2307, %v2914, %v2949
        %v2974 = vsel %vm2307, %v2915, %v2951
        %v2978 = vsel %vm2307, %v2916, %v2953
        %v2982 = vsel %vm2307, %v2917, %v2955
        %v2986 = vsel %vm2307, %v2918, %v2957
        %v2990 = vsel %vm2307, %v2919, %v2959
        %2992 = vst [vmem:[#allocation3 + $0x10] sm:$0xff] %v2962
        %2993 = vst [vmem:[#allocation3 + $0x38] sm:$0xff] %v2966
        %2994 = vst [vmem:[#allocation3 + $0x60] sm:$0xff] %v2970
        %2995 = vst [vmem:[#allocation3 + $0x88] sm:$0xff] %v2974
        %2996 = vst [vmem:[#allocation3 + $0xb0] sm:$0xff] %v2978
        %2997 = vst [vmem:[#allocation3 + $0xd8] sm:$0xff] %v2982
        %2998 = vst [vmem:[#allocation3 + $0x100] sm:$0xff] %v2986
        %2999 = vst [vmem:[#allocation3 + $0x128] sm:$0xff] %v2990
        %s3000 = scalar_lea.vmem [#allocation2], 24
        %v3001 = vld [vmem:[%s3000] sm:$0xf]
        %v3002 = vld [vmem:[%s3000 + $0x4] sm:$0xf]
        %v3003 = vld [vmem:[%s3000 + $0xc] sm:$0xf]
        %v3004 = vld [vmem:[%s3000 + $0x10] sm:$0xf]
        %v3005 = vld [vmem:[%s3000 + $0x18] sm:$0xf]
        %v3006 = vld [vmem:[%s3000 + $0x1c] sm:$0xf]
        %v3007 = vld [vmem:[%s3000 + $0x24] sm:$0xf]
        %v3008 = vld [vmem:[%s3000 + $0x28] sm:$0xf]
        %v3009 = vld [vmem:[%s3000 + $0x30] sm:$0xf]
        %v3010 = vld [vmem:[%s3000 + $0x34] sm:$0xf]
        %v3011 = vld [vmem:[%s3000 + $0x3c] sm:$0xf]
        %v3012 = vld [vmem:[%s3000 + $0x40] sm:$0xf]
        %v3013 = vld [vmem:[%s3000 + $0x48] sm:$0xf]
        %v3014 = vld [vmem:[%s3000 + $0x4c] sm:$0xf]
        %v3015 = vld [vmem:[%s3000 + $0x54] sm:$0xf]
        %v3016 = vld [vmem:[%s3000 + $0x58] sm:$0xf]
        %v3017 = vld [vmem:[%s3000 + $0x8] sm:$0x1]
        %v3018 = vld [vmem:[%s3000 + $0x14] sm:$0x1]
        %v3019 = vld [vmem:[%s3000 + $0x20] sm:$0x1]
        %v3020 = vld [vmem:[%s3000 + $0x2c] sm:$0x1]
        %v3021 = vld [vmem:[%s3000 + $0x38] sm:$0x1]
        %v3022 = vld [vmem:[%s3000 + $0x44] sm:$0x1]
        %v3023 = vld [vmem:[%s3000 + $0x50] sm:$0x1]
        %v3024 = vld [vmem:[%s3000 + $0x5c] sm:$0x1]
        %v3026 = vshrl.u32 %v3001, 16
        %v3028 = vrot.slane %v3026, 4
        %v3029 = vshll.u32 %v3001, 16
        %v3031 = vrot.slane %v3029, 5
        %v3032 = vor.u32 %v3028, %v3031
        %v3033 = vrot.slane %v3032, 4
        %v3035 = vshll.u32 %v3002, 16
        %v3037 = vrot.slane %v3035, 5
        %v3038 = vsel %vm2034, %v3033, %v3037
        %v3039 = vshrl.u32 %v3002, 16
        %v3041 = vrot.slane %v3039, 4
        %v3042 = vor.u32 %v3041, %v3037
        %v3043 = vrot.slane %v3042, 4
        %v3045 = vshll.u32 %v3017, 16
        %v3047 = vrot.slane %v3045, 5
        %v3048 = vsel %vm2034, %v3043, %v3047
        %v3050 = vshrl.u32 %v3003, 16
        %v3052 = vrot.slane %v3050, 4
        %v3053 = vshll.u32 %v3003, 16
        %v3055 = vrot.slane %v3053, 5
        %v3056 = vor.u32 %v3052, %v3055
        %v3057 = vrot.slane %v3056, 4
        %v3059 = vshll.u32 %v3004, 16
        %v3061 = vrot.slane %v3059, 5
        %v3062 = vsel %vm2034, %v3057, %v3061
        %v3063 = vshrl.u32 %v3004, 16
        %v3065 = vrot.slane %v3063, 4
        %v3066 = vor.u32 %v3065, %v3061
        %v3067 = vrot.slane %v3066, 4
        %v3069 = vshll.u32 %v3018, 16
        %v3071 = vrot.slane %v3069, 5
        %v3072 = vsel %vm2034, %v3067, %v3071
        %v3074 = vshrl.u32 %v3005, 16
        %v3076 = vrot.slane %v3074, 4
        %v3077 = vshll.u32 %v3005, 16
        %v3079 = vrot.slane %v3077, 5
        %v3080 = vor.u32 %v3076, %v3079
        %v3081 = vrot.slane %v3080, 4
        %v3083 = vshll.u32 %v3006, 16
        %v3085 = vrot.slane %v3083, 5
        %v3086 = vsel %vm2034, %v3081, %v3085
        %v3087 = vshrl.u32 %v3006, 16
        %v3089 = vrot.slane %v3087, 4
        %v3090 = vor.u32 %v3089, %v3085
        %v3091 = vrot.slane %v3090, 4
        %v3093 = vshll.u32 %v3019, 16
        %v3095 = vrot.slane %v3093, 5
        %v3096 = vsel %vm2034, %v3091, %v3095
        %v3098 = vshrl.u32 %v3007, 16
        %v3100 = vrot.slane %v3098, 4
        %v3101 = vshll.u32 %v3007, 16
        %v3103 = vrot.slane %v3101, 5
        %v3104 = vor.u32 %v3100, %v3103
        %v3105 = vrot.slane %v3104, 4
        %v3107 = vshll.u32 %v3008, 16
        %v3109 = vrot.slane %v3107, 5
        %v3110 = vsel %vm2034, %v3105, %v3109
        %v3111 = vshrl.u32 %v3008, 16
        %v3113 = vrot.slane %v3111, 4
        %v3114 = vor.u32 %v3113, %v3109
        %v3115 = vrot.slane %v3114, 4
        %v3117 = vshll.u32 %v3020, 16
        %v3119 = vrot.slane %v3117, 5
        %v3120 = vsel %vm2034, %v3115, %v3119
        %v3122 = vshrl.u32 %v3009, 16
        %v3124 = vrot.slane %v3122, 4
        %v3125 = vshll.u32 %v3009, 16
        %v3127 = vrot.slane %v3125, 5
        %v3128 = vor.u32 %v3124, %v3127
        %v3129 = vrot.slane %v3128, 4
        %v3131 = vshll.u32 %v3010, 16
        %v3133 = vrot.slane %v3131, 5
        %v3134 = vsel %vm2034, %v3129, %v3133
        %v3135 = vshrl.u32 %v3010, 16
        %v3137 = vrot.slane %v3135, 4
        %v3138 = vor.u32 %v3137, %v3133
        %v3139 = vrot.slane %v3138, 4
        %v3141 = vshll.u32 %v3021, 16
        %v3143 = vrot.slane %v3141, 5
        %v3144 = vsel %vm2034, %v3139, %v3143
        %v3146 = vshrl.u32 %v3011, 16
        %v3148 = vrot.slane %v3146, 4
        %v3149 = vshll.u32 %v3011, 16
        %v3151 = vrot.slane %v3149, 5
        %v3152 = vor.u32 %v3148, %v3151
        %v3153 = vrot.slane %v3152, 4
        %v3155 = vshll.u32 %v3012, 16
        %v3157 = vrot.slane %v3155, 5
        %v3158 = vsel %vm2034, %v3153, %v3157
        %v3159 = vshrl.u32 %v3012, 16
        %v3161 = vrot.slane %v3159, 4
        %v3162 = vor.u32 %v3161, %v3157
        %v3163 = vrot.slane %v3162, 4
        %v3165 = vshll.u32 %v3022, 16
        %v3167 = vrot.slane %v3165, 5
        %v3168 = vsel %vm2034, %v3163, %v3167
        %v3170 = vshrl.u32 %v3013, 16
        %v3172 = vrot.slane %v3170, 4
        %v3173 = vshll.u32 %v3013, 16
        %v3175 = vrot.slane %v3173, 5
        %v3176 = vor.u32 %v3172, %v3175
        %v3177 = vrot.slane %v3176, 4
        %v3179 = vshll.u32 %v3014, 16
        %v3181 = vrot.slane %v3179, 5
        %v3182 = vsel %vm2034, %v3177, %v3181
        %v3183 = vshrl.u32 %v3014, 16
        %v3185 = vrot.slane %v3183, 4
        %v3186 = vor.u32 %v3185, %v3181
        %v3187 = vrot.slane %v3186, 4
        %v3189 = vshll.u32 %v3023, 16
        %v3191 = vrot.slane %v3189, 5
        %v3192 = vsel %vm2034, %v3187, %v3191
        %v3194 = vshrl.u32 %v3015, 16
        %v3196 = vrot.slane %v3194, 4
        %v3197 = vshll.u32 %v3015, 16
        %v3199 = vrot.slane %v3197, 5
        %v3200 = vor.u32 %v3196, %v3199
        %v3201 = vrot.slane %v3200, 4
        %v3203 = vshll.u32 %v3016, 16
        %v3205 = vrot.slane %v3203, 5
        %v3206 = vsel %vm2034, %v3201, %v3205
        %v3207 = vshrl.u32 %v3016, 16
        %v3209 = vrot.slane %v3207, 4
        %v3210 = vor.u32 %v3209, %v3205
        %v3211 = vrot.slane %v3210, 4
        %v3213 = vshll.u32 %v3024, 16
        %v3215 = vrot.slane %v3213, 5
        %v3216 = vsel %vm2034, %v3211, %v3215
        %v3233 = vunpack.c.l.b16 %v3001
        %v3234 = vunpack.c.l.b16 %v3002
        %v3235 = vunpack.c.l.b16 %v3003
        %v3236 = vunpack.c.l.b16 %v3004
        %v3237 = vunpack.c.l.b16 %v3005
        %v3238 = vunpack.c.l.b16 %v3006
        %v3239 = vunpack.c.l.b16 %v3007
        %v3240 = vunpack.c.l.b16 %v3008
        %v3241 = vunpack.c.l.b16 %v3009
        %v3242 = vunpack.c.l.b16 %v3010
        %v3243 = vunpack.c.l.b16 %v3011
        %v3244 = vunpack.c.l.b16 %v3012
        %v3245 = vunpack.c.l.b16 %v3013
        %v3246 = vunpack.c.l.b16 %v3014
        %v3247 = vunpack.c.l.b16 %v3015
        %v3248 = vunpack.c.l.b16 %v3016
        %v3249 = vpack.c.b16 %v3234, %v3233
        %v3250 = vpack.c.b16 %v3236, %v3235
        %v3251 = vpack.c.b16 %v3238, %v3237
        %v3252 = vpack.c.b16 %v3240, %v3239
        %v3253 = vpack.c.b16 %v3242, %v3241
        %v3254 = vpack.c.b16 %v3244, %v3243
        %v3255 = vpack.c.b16 %v3246, %v3245
        %v3256 = vpack.c.b16 %v3248, %v3247
        %v3257 = vunpack.c.l.b16 %v3038
        %v3258 = vunpack.c.l.b16 %v3048
        %v3259 = vunpack.c.l.b16 %v3062
        %v3260 = vunpack.c.l.b16 %v3072
        %v3261 = vunpack.c.l.b16 %v3086
        %v3262 = vunpack.c.l.b16 %v3096
        %v3263 = vunpack.c.l.b16 %v3110
        %v3264 = vunpack.c.l.b16 %v3120
        %v3265 = vunpack.c.l.b16 %v3134
        %v3266 = vunpack.c.l.b16 %v3144
        %v3267 = vunpack.c.l.b16 %v3158
        %v3268 = vunpack.c.l.b16 %v3168
        %v3269 = vunpack.c.l.b16 %v3182
        %v3270 = vunpack.c.l.b16 %v3192
        %v3271 = vunpack.c.l.b16 %v3206
        %v3272 = vunpack.c.l.b16 %v3216
        %v3273 = vpack.c.b16 %v3258, %v3257
        %v3274 = vpack.c.b16 %v3260, %v3259
        %v3275 = vpack.c.b16 %v3262, %v3261
        %v3276 = vpack.c.b16 %v3264, %v3263
        %v3277 = vpack.c.b16 %v3266, %v3265
        %v3278 = vpack.c.b16 %v3268, %v3267
        %v3279 = vpack.c.b16 %v3270, %v3269
        %v3280 = vpack.c.b16 %v3272, %v3271
        %3281 = vrot.lane.b32.xlu0 %v3273, 64
        %v3282 = vpop.permute.xlu0 %3281
        %3283 = vrot.lane.b32.xlu0 %v3274, 64
        %v3284 = vpop.permute.xlu0 %3283
        %3285 = vrot.lane.b32.xlu0 %v3275, 64
        %v3286 = vpop.permute.xlu0 %3285
        %3287 = vrot.lane.b32.xlu0 %v3276, 64
        %v3288 = vpop.permute.xlu0 %3287
        %3289 = vrot.lane.b32.xlu0 %v3277, 64
        %v3290 = vpop.permute.xlu0 %3289
        %3291 = vrot.lane.b32.xlu0 %v3278, 64
        %v3292 = vpop.permute.xlu0 %3291
        %3293 = vrot.lane.b32.xlu0 %v3279, 64
        %v3294 = vpop.permute.xlu0 %3293
        %3295 = vrot.lane.b32.xlu0 %v3280, 64
        %v3296 = vpop.permute.xlu0 %3295
        %v3299 = vsel %vm2307, %v3249, %v3282
        %v3303 = vsel %vm2307, %v3250, %v3284
        %v3307 = vsel %vm2307, %v3251, %v3286
        %v3311 = vsel %vm2307, %v3252, %v3288
        %v3315 = vsel %vm2307, %v3253, %v3290
        %v3319 = vsel %vm2307, %v3254, %v3292
        %v3323 = vsel %vm2307, %v3255, %v3294
        %v3327 = vsel %vm2307, %v3256, %v3296
        %3329 = vst [vmem:[#allocation3 + $0x18] sm:$0xff] %v3299
        %3330 = vst [vmem:[#allocation3 + $0x40] sm:$0xff] %v3303
        %3331 = vst [vmem:[#allocation3 + $0x68] sm:$0xff] %v3307
        %3332 = vst [vmem:[#allocation3 + $0x90] sm:$0xff] %v3311
        %3333 = vst [vmem:[#allocation3 + $0xb8] sm:$0xff] %v3315
        %3334 = vst [vmem:[#allocation3 + $0xe0] sm:$0xff] %v3319
        %3335 = vst [vmem:[#allocation3 + $0x108] sm:$0xff] %v3323
        %3336 = vst [vmem:[#allocation3 + $0x130] sm:$0xff] %v3327
        %v3337 = vld [vmem:[%s3000] sm:$0xe]
        %v3338 = vld [vmem:[%s3000 + $0x4] sm:$0xf]
        %v3339 = vld [vmem:[%s3000 + $0x8] sm:$0x1]
        %v3340 = vld [vmem:[%s3000 + $0xc] sm:$0xe]
        %v3341 = vld [vmem:[%s3000 + $0x10] sm:$0xf]
        %v3342 = vld [vmem:[%s3000 + $0x14] sm:$0x1]
        %v3343 = vld [vmem:[%s3000 + $0x18] sm:$0xe]
        %v3344 = vld [vmem:[%s3000 + $0x1c] sm:$0xf]
        %v3345 = vld [vmem:[%s3000 + $0x20] sm:$0x1]
        %v3346 = vld [vmem:[%s3000 + $0x24] sm:$0xe]
        %v3347 = vld [vmem:[%s3000 + $0x28] sm:$0xf]
        %v3348 = vld [vmem:[%s3000 + $0x2c] sm:$0x1]
        %v3349 = vld [vmem:[%s3000 + $0x30] sm:$0xe]
        %v3350 = vld [vmem:[%s3000 + $0x34] sm:$0xf]
        %v3351 = vld [vmem:[%s3000 + $0x38] sm:$0x1]
        %v3352 = vld [vmem:[%s3000 + $0x3c] sm:$0xe]
        %v3353 = vld [vmem:[%s3000 + $0x40] sm:$0xf]
        %v3354 = vld [vmem:[%s3000 + $0x44] sm:$0x1]
        %v3355 = vld [vmem:[%s3000 + $0x48] sm:$0xe]
        %v3356 = vld [vmem:[%s3000 + $0x4c] sm:$0xf]
        %v3357 = vld [vmem:[%s3000 + $0x50] sm:$0x1]
        %v3358 = vld [vmem:[%s3000 + $0x54] sm:$0xe]
        %v3359 = vld [vmem:[%s3000 + $0x58] sm:$0xf]
        %v3360 = vld [vmem:[%s3000 + $0x5c] sm:$0x1]
        %v3385 = vrot.slane %v3337, 5
        %v3386 = vrot.slane %v3385, 4
        %v3387 = vrot.slane %v3338, 5
        %v3388 = vsel %vm2398, %v3386, %v3387
        %v3389 = vrot.slane %v3387, 4
        %v3390 = vrot.slane %v3339, 5
        %v3391 = vsel %vm2398, %v3389, %v3390
        %v3392 = vrot.slane %v3340, 5
        %v3393 = vrot.slane %v3392, 4
        %v3394 = vrot.slane %v3341, 5
        %v3395 = vsel %vm2398, %v3393, %v3394
        %v3396 = vrot.slane %v3394, 4
        %v3397 = vrot.slane %v3342, 5
        %v3398 = vsel %vm2398, %v3396, %v3397
        %v3399 = vrot.slane %v3343, 5
        %v3400 = vrot.slane %v3399, 4
        %v3401 = vrot.slane %v3344, 5
        %v3402 = vsel %vm2398, %v3400, %v3401
        %v3403 = vrot.slane %v3401, 4
        %v3404 = vrot.slane %v3345, 5
        %v3405 = vsel %vm2398, %v3403, %v3404
        %v3406 = vrot.slane %v3346, 5
        %v3407 = vrot.slane %v3406, 4
        %v3408 = vrot.slane %v3347, 5
        %v3409 = vsel %vm2398, %v3407, %v3408
        %v3410 = vrot.slane %v3408, 4
        %v3411 = vrot.slane %v3348, 5
        %v3412 = vsel %vm2398, %v3410, %v3411
        %v3413 = vrot.slane %v3349, 5
        %v3414 = vrot.slane %v3413, 4
        %v3415 = vrot.slane %v3350, 5
        %v3416 = vsel %vm2398, %v3414, %v3415
        %v3417 = vrot.slane %v3415, 4
        %v3418 = vrot.slane %v3351, 5
        %v3419 = vsel %vm2398, %v3417, %v3418
        %v3420 = vrot.slane %v3352, 5
        %v3421 = vrot.slane %v3420, 4
        %v3422 = vrot.slane %v3353, 5
        %v3423 = vsel %vm2398, %v3421, %v3422
        %v3424 = vrot.slane %v3422, 4
        %v3425 = vrot.slane %v3354, 5
        %v3426 = vsel %vm2398, %v3424, %v3425
        %v3427 = vrot.slane %v3355, 5
        %v3428 = vrot.slane %v3427, 4
        %v3429 = vrot.slane %v3356, 5
        %v3430 = vsel %vm2398, %v3428, %v3429
        %v3431 = vrot.slane %v3429, 4
        %v3432 = vrot.slane %v3357, 5
        %v3433 = vsel %vm2398, %v3431, %v3432
        %v3434 = vrot.slane %v3358, 5
        %v3435 = vrot.slane %v3434, 4
        %v3436 = vrot.slane %v3359, 5
        %v3437 = vsel %vm2398, %v3435, %v3436
        %v3438 = vrot.slane %v3436, 4
        %v3439 = vrot.slane %v3360, 5
        %v3440 = vsel %vm2398, %v3438, %v3439
        %v3441 = vunpack.c.l.b16 %v3388
        %v3442 = vunpack.c.l.b16 %v3391
        %v3443 = vunpack.c.l.b16 %v3395
        %v3444 = vunpack.c.l.b16 %v3398
        %v3445 = vunpack.c.l.b16 %v3402
        %v3446 = vunpack.c.l.b16 %v3405
        %v3447 = vunpack.c.l.b16 %v3409
        %v3448 = vunpack.c.l.b16 %v3412
        %v3449 = vunpack.c.l.b16 %v3416
        %v3450 = vunpack.c.l.b16 %v3419
        %v3451 = vunpack.c.l.b16 %v3423
        %v3452 = vunpack.c.l.b16 %v3426
        %v3453 = vunpack.c.l.b16 %v3430
        %v3454 = vunpack.c.l.b16 %v3433
        %v3455 = vunpack.c.l.b16 %v3437
        %v3456 = vunpack.c.l.b16 %v3440
        %v3457 = vpack.c.b16 %v3442, %v3441
        %v3458 = vpack.c.b16 %v3444, %v3443
        %v3459 = vpack.c.b16 %v3446, %v3445
        %v3460 = vpack.c.b16 %v3448, %v3447
        %v3461 = vpack.c.b16 %v3450, %v3449
        %v3462 = vpack.c.b16 %v3452, %v3451
        %v3463 = vpack.c.b16 %v3454, %v3453
        %v3464 = vpack.c.b16 %v3456, %v3455
        %v3467 = vsel %vm2307, %v3457, 0
        %v3470 = vsel %vm2307, %v3458, 0
        %v3473 = vsel %vm2307, %v3459, 0
        %v3476 = vsel %vm2307, %v3460, 0
        %v3479 = vsel %vm2307, %v3461, 0
        %v3482 = vsel %vm2307, %v3462, 0
        %v3485 = vsel %vm2307, %v3463, 0
        %v3488 = vsel %vm2307, %v3464, 0
        %3490 = vst [vmem:[#allocation3 + $0x20] sm:$0xff] %v3467
        %3491 = vst [vmem:[#allocation3 + $0x48] sm:$0xff] %v3470
        %3492 = vst [vmem:[#allocation3 + $0x70] sm:$0xff] %v3473
        %3493 = vst [vmem:[#allocation3 + $0x98] sm:$0xff] %v3476
        %3494 = vst [vmem:[#allocation3 + $0xc0] sm:$0xff] %v3479
        %3495 = vst [vmem:[#allocation3 + $0xe8] sm:$0xff] %v3482
        %3496 = vst [vmem:[#allocation3 + $0x110] sm:$0xff] %v3485
        %3497 = vst [vmem:[#allocation3 + $0x138] sm:$0xff] %v3488
        %v3498 = vld [vmem:[#allocation3] sm:$0xff]
        %v3499 = vld [vmem:[#allocation3 + $0x8] sm:$0xff]
        %v3500 = vld [vmem:[#allocation3 + $0x10] sm:$0xff]
        %v3501 = vld [vmem:[#allocation3 + $0x18] sm:$0xff]
        %v3502 = vld [vmem:[#allocation3 + $0x20] sm:$0xff]
        %v3503 = vld [vmem:[#allocation3 + $0x28] sm:$0xff]
        %v3504 = vld [vmem:[#allocation3 + $0x30] sm:$0xff]
        %v3505 = vld [vmem:[#allocation3 + $0x38] sm:$0xff]
        %v3506 = vld [vmem:[#allocation3 + $0x40] sm:$0xff]
        %v3507 = vld [vmem:[#allocation3 + $0x48] sm:$0xff]
        %v3508 = vld [vmem:[#allocation3 + $0x50] sm:$0xff]
        %v3509 = vld [vmem:[#allocation3 + $0x58] sm:$0xff]
        %v3510 = vld [vmem:[#allocation3 + $0x60] sm:$0xff]
        %v3511 = vld [vmem:[#allocation3 + $0x68] sm:$0xff]
        %v3512 = vld [vmem:[#allocation3 + $0x70] sm:$0xff]
        %v3513 = vld [vmem:[#allocation3 + $0x78] sm:$0xff]
        %v3514 = vld [vmem:[#allocation3 + $0x80] sm:$0xff]
        %v3515 = vld [vmem:[#allocation3 + $0x88] sm:$0xff]
        %v3516 = vld [vmem:[#allocation3 + $0x90] sm:$0xff]
        %v3517 = vld [vmem:[#allocation3 + $0x98] sm:$0xff]
        %v3518 = vld [vmem:[#allocation3 + $0xa0] sm:$0xff]
        %v3519 = vld [vmem:[#allocation3 + $0xa8] sm:$0xff]
        %v3520 = vld [vmem:[#allocation3 + $0xb0] sm:$0xff]
        %v3521 = vld [vmem:[#allocation3 + $0xb8] sm:$0xff]
        %v3522 = vld [vmem:[#allocation3 + $0xc0] sm:$0xff]
        %v3523 = vld [vmem:[#allocation3 + $0xc8] sm:$0xff]
        %v3524 = vld [vmem:[#allocation3 + $0xd0] sm:$0xff]
        %v3525 = vld [vmem:[#allocation3 + $0xd8] sm:$0xff]
        %v3526 = vld [vmem:[#allocation3 + $0xe0] sm:$0xff]
        %v3527 = vld [vmem:[#allocation3 + $0xe8] sm:$0xff]
        %v3528 = vld [vmem:[#allocation3 + $0xf0] sm:$0xff]
        %v3529 = vld [vmem:[#allocation3 + $0xf8] sm:$0xff]
        %v3530 = vld [vmem:[#allocation3 + $0x100] sm:$0xff]
        %v3531 = vld [vmem:[#allocation3 + $0x108] sm:$0xff]
        %v3532 = vld [vmem:[#allocation3 + $0x110] sm:$0xff]
        %v3533 = vld [vmem:[#allocation3 + $0x118] sm:$0xff]
        %v3534 = vld [vmem:[#allocation3 + $0x120] sm:$0xff]
        %v3535 = vld [vmem:[#allocation3 + $0x128] sm:$0xff]
        %v3536 = vld [vmem:[#allocation3 + $0x130] sm:$0xff]
        %v3537 = vld [vmem:[#allocation3 + $0x138] sm:$0xff]
        %v3538 = vld [vmem:[%s3] sm:$0xf]
        %v3539 = vld [vmem:[%s3 + $0x4] sm:$0xf]
        %v3540 = vld [vmem:[%s3 + $0x8] sm:$0xf]
        %v3541 = vld [vmem:[%s3 + $0xc] sm:$0xf]
        %v3542 = vld [vmem:[%s3 + $0x10] sm:$0xf]
        %v3543 = vld [vmem:[%s3 + $0x14] sm:$0xf]
        %v3544 = vld [vmem:[%s3 + $0x18] sm:$0xf]
        %v3545 = vld [vmem:[%s3 + $0x1c] sm:$0xf]
        %v3546 = vld [vmem:[%s3 + $0x20] sm:$0xf]
        %v3547 = vld [vmem:[%s3 + $0x24] sm:$0xf]
        %v3548 = vld [vmem:[%s3 + $0x28] sm:$0xf]
        %v3549 = vld [vmem:[%s3 + $0x2c] sm:$0xf]
        %v3550 = vld [vmem:[%s3 + $0x30] sm:$0xf]
        %v3551 = vld [vmem:[%s3 + $0x34] sm:$0xf]
        %v3552 = vld [vmem:[%s3 + $0x38] sm:$0xf]
        %v3553 = vld [vmem:[%s3 + $0x3c] sm:$0xf]
        %v3554 = vld [vmem:[%s3 + $0x40] sm:$0xf]
        %v3555 = vld [vmem:[%s3 + $0x44] sm:$0xf]
        %v3556 = vld [vmem:[%s3 + $0x48] sm:$0xf]
        %v3557 = vld [vmem:[%s3 + $0x4c] sm:$0xf]
        %v3558 = vld [vmem:[%s3 + $0x50] sm:$0xf]
        %v3559 = vld [vmem:[%s3 + $0x54] sm:$0xf]
        %v3560 = vld [vmem:[%s3 + $0x58] sm:$0xf]
        %v3561 = vld [vmem:[%s3 + $0x5c] sm:$0xf]
        %v3562 = vld [vmem:[%s3 + $0x60] sm:$0xf]
        %v3563 = vld [vmem:[%s3 + $0x64] sm:$0xf]
        %v3564 = vld [vmem:[%s3 + $0x68] sm:$0xf]
        %v3565 = vld [vmem:[%s3 + $0x6c] sm:$0xf]
        %v3566 = vld [vmem:[%s3 + $0x70] sm:$0xf]
        %v3567 = vld [vmem:[%s3 + $0x74] sm:$0xf]
        %v3568 = vld [vmem:[%s3 + $0x78] sm:$0xf]
        %v3569 = vld [vmem:[%s3 + $0x7c] sm:$0xf]
        %v3570 = vld [vmem:[%s3 + $0x80] sm:$0xf]
        %v3571 = vld [vmem:[%s3 + $0x84] sm:$0xf]
        %v3572 = vld [vmem:[%s3 + $0x88] sm:$0xf]
        %v3573 = vld [vmem:[%s3 + $0x8c] sm:$0xf]
        %v3574 = vld [vmem:[%s3 + $0x90] sm:$0xf]
        %v3575 = vld [vmem:[%s3 + $0x94] sm:$0xf]
        %v3576 = vld [vmem:[%s3 + $0x98] sm:$0xf]
        %v3577 = vld [vmem:[%s3 + $0x9c] sm:$0xf]
        %v3578 = vld [vmem:[%s3 + $0xa0] sm:$0xf]
        %v3579 = vld [vmem:[%s3 + $0xa4] sm:$0xf]
        %v3580 = vld [vmem:[%s3 + $0xa8] sm:$0xf]
        %v3581 = vld [vmem:[%s3 + $0xac] sm:$0xf]
        %v3582 = vld [vmem:[%s3 + $0xb0] sm:$0xf]
        %v3583 = vld [vmem:[%s3 + $0xb4] sm:$0xf]
        %v3584 = vld [vmem:[%s3 + $0xb8] sm:$0xf]
        %v3585 = vld [vmem:[%s3 + $0xbc] sm:$0xf]
        %v3586 = vld [vmem:[%s3 + $0xc0] sm:$0xf]
        %v3587 = vld [vmem:[%s3 + $0xc4] sm:$0xf]
        %v3588 = vld [vmem:[%s3 + $0xc8] sm:$0xf]
        %v3589 = vld [vmem:[%s3 + $0xcc] sm:$0xf]
        %v3590 = vld [vmem:[%s3 + $0xd0] sm:$0xf]
        %v3591 = vld [vmem:[%s3 + $0xd4] sm:$0xf]
        %v3592 = vld [vmem:[%s3 + $0xd8] sm:$0xf]
        %v3593 = vld [vmem:[%s3 + $0xdc] sm:$0xf]
        %v3594 = vld [vmem:[%s3 + $0xe0] sm:$0xf]
        %v3595 = vld [vmem:[%s3 + $0xe4] sm:$0xf]
        %v3596 = vld [vmem:[%s3 + $0xe8] sm:$0xf]
        %v3597 = vld [vmem:[%s3 + $0xec] sm:$0xf]
        %v3598 = vld [vmem:[%s3 + $0xf0] sm:$0xf]
        %v3599 = vld [vmem:[%s3 + $0xf4] sm:$0xf]
        %v3600 = vld [vmem:[%s3 + $0xf8] sm:$0xf]
        %v3601 = vld [vmem:[%s3 + $0xfc] sm:$0xf]
        %v3602 = vld [vmem:[%s3 + $0x100] sm:$0xf]
        %v3603 = vld [vmem:[%s3 + $0x104] sm:$0xf]
        %v3604 = vld [vmem:[%s3 + $0x108] sm:$0xf]
        %v3605 = vld [vmem:[%s3 + $0x10c] sm:$0xf]
        %v3606 = vld [vmem:[%s3 + $0x110] sm:$0xf]
        %v3607 = vld [vmem:[%s3 + $0x114] sm:$0xf]
        %v3608 = vld [vmem:[%s3 + $0x118] sm:$0xf]
        %v3609 = vld [vmem:[%s3 + $0x11c] sm:$0xf]
        %v3610 = vld [vmem:[%s3 + $0x120] sm:$0xf]
        %v3611 = vld [vmem:[%s3 + $0x124] sm:$0xf]
        %v3612 = vld [vmem:[%s3 + $0x128] sm:$0xf]
        %v3613 = vld [vmem:[%s3 + $0x12c] sm:$0xf]
        %v3614 = vld [vmem:[%s3 + $0x130] sm:$0xf]
        %v3615 = vld [vmem:[%s3 + $0x134] sm:$0xf]
        %v3616 = vld [vmem:[%s3 + $0x138] sm:$0xf]
        %v3617 = vld [vmem:[%s3 + $0x13c] sm:$0xf]
        %v3618 = vld [vmem:[%s4] sm:$0x1]
        %v3620 = vlaneseq
        %v3621 = vshrl.u32 %v3620, 7
        %v3622 = vsub.s32 0, %v3621
        %v3623 = vrot.slane %v3618, %v3622
        %v3705 = vunpack.c.l.b16 %v3538
        %v3706 = vunpack.c.l.b16 %v3539
        %v3707 = vunpack.c.l.b16 %v3540
        %v3708 = vunpack.c.l.b16 %v3541
        %v3709 = vunpack.c.l.b16 %v3542
        %v3710 = vunpack.c.l.b16 %v3543
        %v3711 = vunpack.c.l.b16 %v3544
        %v3712 = vunpack.c.l.b16 %v3545
        %v3713 = vunpack.c.l.b16 %v3546
        %v3714 = vunpack.c.l.b16 %v3547
        %v3715 = vunpack.c.l.b16 %v3548
        %v3716 = vunpack.c.l.b16 %v3549
        %v3717 = vunpack.c.l.b16 %v3550
        %v3718 = vunpack.c.l.b16 %v3551
        %v3719 = vunpack.c.l.b16 %v3552
        %v3720 = vunpack.c.l.b16 %v3553
        %v3721 = vunpack.c.l.b16 %v3554
        %v3722 = vunpack.c.l.b16 %v3555
        %v3723 = vunpack.c.l.b16 %v3556
        %v3724 = vunpack.c.l.b16 %v3557
        %v3725 = vunpack.c.l.b16 %v3558
        %v3726 = vunpack.c.l.b16 %v3559
        %v3727 = vunpack.c.l.b16 %v3560
        %v3728 = vunpack.c.l.b16 %v3561
        %v3729 = vunpack.c.l.b16 %v3562
        %v3730 = vunpack.c.l.b16 %v3563
        %v3731 = vunpack.c.l.b16 %v3564
        %v3732 = vunpack.c.l.b16 %v3565
        %v3733 = vunpack.c.l.b16 %v3566
        %v3734 = vunpack.c.l.b16 %v3567
        %v3735 = vunpack.c.l.b16 %v3568
        %v3736 = vunpack.c.l.b16 %v3569
        %v3737 = vunpack.c.l.b16 %v3570
        %v3738 = vunpack.c.l.b16 %v3571
        %v3739 = vunpack.c.l.b16 %v3572
        %v3740 = vunpack.c.l.b16 %v3573
        %v3741 = vunpack.c.l.b16 %v3574
        %v3742 = vunpack.c.l.b16 %v3575
        %v3743 = vunpack.c.l.b16 %v3576
        %v3744 = vunpack.c.l.b16 %v3577
        %v3745 = vunpack.c.l.b16 %v3578
        %v3746 = vunpack.c.l.b16 %v3579
        %v3747 = vunpack.c.l.b16 %v3580
        %v3748 = vunpack.c.l.b16 %v3581
        %v3749 = vunpack.c.l.b16 %v3582
        %v3750 = vunpack.c.l.b16 %v3583
        %v3751 = vunpack.c.l.b16 %v3584
        %v3752 = vunpack.c.l.b16 %v3585
        %v3753 = vunpack.c.l.b16 %v3586
        %v3754 = vunpack.c.l.b16 %v3587
        %v3755 = vunpack.c.l.b16 %v3588
        %v3756 = vunpack.c.l.b16 %v3589
        %v3757 = vunpack.c.l.b16 %v3590
        %v3758 = vunpack.c.l.b16 %v3591
        %v3759 = vunpack.c.l.b16 %v3592
        %v3760 = vunpack.c.l.b16 %v3593
        %v3761 = vunpack.c.l.b16 %v3594
        %v3762 = vunpack.c.l.b16 %v3595
        %v3763 = vunpack.c.l.b16 %v3596
        %v3764 = vunpack.c.l.b16 %v3597
        %v3765 = vunpack.c.l.b16 %v3598
        %v3766 = vunpack.c.l.b16 %v3599
        %v3767 = vunpack.c.l.b16 %v3600
        %v3768 = vunpack.c.l.b16 %v3601
        %v3769 = vunpack.c.l.b16 %v3602
        %v3770 = vunpack.c.l.b16 %v3603
        %v3771 = vunpack.c.l.b16 %v3604
        %v3772 = vunpack.c.l.b16 %v3605
        %v3773 = vunpack.c.l.b16 %v3606
        %v3774 = vunpack.c.l.b16 %v3607
        %v3775 = vunpack.c.l.b16 %v3608
        %v3776 = vunpack.c.l.b16 %v3609
        %v3777 = vunpack.c.l.b16 %v3610
        %v3778 = vunpack.c.l.b16 %v3611
        %v3779 = vunpack.c.l.b16 %v3612
        %v3780 = vunpack.c.l.b16 %v3613
        %v3781 = vunpack.c.l.b16 %v3614
        %v3782 = vunpack.c.l.b16 %v3615
        %v3783 = vunpack.c.l.b16 %v3616
        %v3784 = vunpack.c.l.b16 %v3617
        %v3785 = vpack.c.b16 %v3706, %v3705
        %v3786 = vpack.c.b16 %v3708, %v3707
        %v3787 = vpack.c.b16 %v3710, %v3709
        %v3788 = vpack.c.b16 %v3712, %v3711
        %v3789 = vpack.c.b16 %v3714, %v3713
        %v3790 = vpack.c.b16 %v3716, %v3715
        %v3791 = vpack.c.b16 %v3718, %v3717
        %v3792 = vpack.c.b16 %v3720, %v3719
        %v3793 = vpack.c.b16 %v3722, %v3721
        %v3794 = vpack.c.b16 %v3724, %v3723
        %v3795 = vpack.c.b16 %v3726, %v3725
        %v3796 = vpack.c.b16 %v3728, %v3727
        %v3797 = vpack.c.b16 %v3730, %v3729
        %v3798 = vpack.c.b16 %v3732, %v3731
        %v3799 = vpack.c.b16 %v3734, %v3733
        %v3800 = vpack.c.b16 %v3736, %v3735
        %v3801 = vpack.c.b16 %v3738, %v3737
        %v3802 = vpack.c.b16 %v3740, %v3739
        %v3803 = vpack.c.b16 %v3742, %v3741
        %v3804 = vpack.c.b16 %v3744, %v3743
        %v3805 = vpack.c.b16 %v3746, %v3745
        %v3806 = vpack.c.b16 %v3748, %v3747
        %v3807 = vpack.c.b16 %v3750, %v3749
        %v3808 = vpack.c.b16 %v3752, %v3751
        %v3809 = vpack.c.b16 %v3754, %v3753
        %v3810 = vpack.c.b16 %v3756, %v3755
        %v3811 = vpack.c.b16 %v3758, %v3757
        %v3812 = vpack.c.b16 %v3760, %v3759
        %v3813 = vpack.c.b16 %v3762, %v3761
        %v3814 = vpack.c.b16 %v3764, %v3763
        %v3815 = vpack.c.b16 %v3766, %v3765
        %v3816 = vpack.c.b16 %v3768, %v3767
        %v3817 = vpack.c.b16 %v3770, %v3769
        %v3818 = vpack.c.b16 %v3772, %v3771
        %v3819 = vpack.c.b16 %v3774, %v3773
        %v3820 = vpack.c.b16 %v3776, %v3775
        %v3821 = vpack.c.b16 %v3778, %v3777
        %v3822 = vpack.c.b16 %v3780, %v3779
        %v3823 = vpack.c.b16 %v3782, %v3781
        %v3824 = vpack.c.b16 %v3784, %v3783
        %3865 = vmatprep.subr.bf16.mxu0 0
        %3866 = vmatpush1.bf16.msra.mxu0 %v3785
        %3867 = vmatprep.subr.bf16.mxu0 0
        %3868 = vmatpush1.bf16.msra.mxu0 %v3786
        %3869 = vmatprep.subr.bf16.mxu0 0
        %3870 = vmatpush1.bf16.msra.mxu0 %v3787
        %3871 = vmatprep.subr.bf16.mxu0 0
        %3872 = vmatpush1.bf16.msra.mxu0 %v3788
        %3873 = vmatprep.subr.bf16.mxu0 0
        %3874 = vmatpush1.bf16.msra.mxu0 %v3789
        %3875 = vmatprep.subr.bf16.mxu0 0
        %3876 = vmatpush1.bf16.msra.mxu0 %v3790
        %3877 = vmatprep.subr.bf16.mxu0 0
        %3878 = vmatpush1.bf16.msra.mxu0 %v3791
        %3879 = vmatprep.subr.bf16.mxu0 0
        %3880 = vmatpush1.bf16.msra.mxu0 %v3792
        %3881 = vmatprep.subr.bf16.mxu0 0
        %3882 = vmatpush1.bf16.msra.mxu0 %v3793
        %3883 = vmatprep.subr.bf16.mxu0 0
        %3884 = vmatpush1.bf16.msra.mxu0 %v3794
        %3885 = vmatprep.subr.bf16.mxu0 0
        %3886 = vmatpush1.bf16.msra.mxu0 %v3795
        %3887 = vmatprep.subr.bf16.mxu0 0
        %3888 = vmatpush1.bf16.msra.mxu0 %v3796
        %3889 = vmatprep.subr.bf16.mxu0 0
        %3890 = vmatpush1.bf16.msra.mxu0 %v3797
        %3891 = vmatprep.subr.bf16.mxu0 0
        %3892 = vmatpush1.bf16.msra.mxu0 %v3798
        %3893 = vmatprep.subr.bf16.mxu0 0
        %3894 = vmatpush1.bf16.msra.mxu0 %v3799
        %3895 = vmatprep.subr.bf16.mxu0 0
        %3896 = vmatpush1.bf16.msra.mxu0 %v3800
        %3897 = vmatprep.mubr.bf16.mxu0 %v3499
        %3898 = vmatmul.mubr.bf16.gmra.mrb[0].mxu0 %v3498
        %v3899 = vpop.f32.mrb[0].mxu0
        %v3900 = vadd.f32 %v3623, %v3899
        %v3901 = vpop.f32.mrb[0].mxu0
        %v3902 = vpop.f32.mrb[0].mxu0
        %v3903 = vadd.f32 %v3623, %v3902
        %v3904 = vpop.f32.mrb[0].mxu0
        %3905 = vmatprep.mubr.bf16.mxu0 %v3504
        %3906 = vmatmul.mubr.bf16.gmra.mrb[0].mxu0 %v3503
        %v3907 = vpop.f32.mrb[0].mxu0
        %v3908 = vadd.f32 %v3623, %v3907
        %v3909 = vpop.f32.mrb[0].mxu0
        %v3910 = vpop.f32.mrb[0].mxu0
        %v3911 = vadd.f32 %v3623, %v3910
        %v3912 = vpop.f32.mrb[0].mxu0
        %3913 = vmatprep.mubr.bf16.mxu0 %v3509
        %3914 = vmatmul.mubr.bf16.gmra.mrb[0].mxu0 %v3508
        %v3915 = vpop.f32.mrb[0].mxu0
        %v3916 = vadd.f32 %v3623, %v3915
        %v3917 = vpop.f32.mrb[0].mxu0
        %v3918 = vpop.f32.mrb[0].mxu0
        %v3919 = vadd.f32 %v3623, %v3918
        %v3920 = vpop.f32.mrb[0].mxu0
        %3921 = vmatprep.mubr.bf16.mxu0 %v3514
        %3922 = vmatmul.mubr.bf16.gmra.mrb[0].mxu0 %v3513
        %v3923 = vpop.f32.mrb[0].mxu0
        %v3924 = vadd.f32 %v3623, %v3923
        %v3925 = vpop.f32.mrb[0].mxu0
        %v3926 = vpop.f32.mrb[0].mxu0
        %v3927 = vadd.f32 %v3623, %v3926
        %v3928 = vpop.f32.mrb[0].mxu0
        %3929 = vmatprep.mubr.bf16.mxu0 %v3519
        %3930 = vmatmul.mubr.bf16.gmra.mrb[0].mxu0 %v3518
        %v3931 = vpop.f32.mrb[0].mxu0
        %v3932 = vadd.f32 %v3623, %v3931
        %v3933 = vpop.f32.mrb[0].mxu0
        %v3934 = vpop.f32.mrb[0].mxu0
        %v3935 = vadd.f32 %v3623, %v3934
        %v3936 = vpop.f32.mrb[0].mxu0
        %3937 = vmatprep.mubr.bf16.mxu0 %v3524
        %3938 = vmatmul.mubr.bf16.gmra.mrb[0].mxu0 %v3523
        %v3939 = vpop.f32.mrb[0].mxu0
        %v3940 = vadd.f32 %v3623, %v3939
        %v3941 = vpop.f32.mrb[0].mxu0
        %v3942 = vpop.f32.mrb[0].mxu0
        %v3943 = vadd.f32 %v3623, %v3942
        %v3944 = vpop.f32.mrb[0].mxu0
        %3945 = vmatprep.mubr.bf16.mxu0 %v3529
        %3946 = vmatmul.mubr.bf16.gmra.mrb[0].mxu0 %v3528
        %v3947 = vpop.f32.mrb[0].mxu0
        %v3948 = vadd.f32 %v3623, %v3947
        %v3949 = vpop.f32.mrb[0].mxu0
        %v3950 = vpop.f32.mrb[0].mxu0
        %v3951 = vadd.f32 %v3623, %v3950
        %v3952 = vpop.f32.mrb[0].mxu0
        %3953 = vmatprep.mubr.bf16.mxu0 %v3534
        %3954 = vmatmul.mubr.bf16.gmra.mrb[0].mxu0 %v3533
        %v3955 = vpop.f32.mrb[0].mxu0
        %v3956 = vadd.f32 %v3623, %v3955
        %v3957 = vpop.f32.mrb[0].mxu0
        %v3958 = vpop.f32.mrb[0].mxu0
        %v3959 = vadd.f32 %v3623, %v3958
        %v3960 = vpop.f32.mrb[0].mxu0
        %3961 = vdwg.mxu0
        %3962 = vmatprep.subr.bf16.mxu0 0
        %3963 = vmatpush1.bf16.msra.mxu0 %v3801
        %3964 = vmatprep.subr.bf16.mxu0 0
        %3965 = vmatpush1.bf16.msra.mxu0 %v3802
        %3966 = vmatprep.subr.bf16.mxu0 0
        %3967 = vmatpush1.bf16.msra.mxu0 %v3803
        %3968 = vmatprep.subr.bf16.mxu0 0
        %3969 = vmatpush1.bf16.msra.mxu0 %v3804
        %3970 = vmatprep.subr.bf16.mxu0 0
        %3971 = vmatpush1.bf16.msra.mxu0 %v3805
        %3972 = vmatprep.subr.bf16.mxu0 0
        %3973 = vmatpush1.bf16.msra.mxu0 %v3806
        %3974 = vmatprep.subr.bf16.mxu0 0
        %3975 = vmatpush1.bf16.msra.mxu0 %v3807
        %3976 = vmatprep.subr.bf16.mxu0 0
        %3977 = vmatpush1.bf16.msra.mxu0 %v3808
        %3978 = vmatprep.subr.bf16.mxu0 0
        %3979 = vmatpush1.bf16.msra.mxu0 %v3809
        %3980 = vmatprep.subr.bf16.mxu0 0
        %3981 = vmatpush1.bf16.msra.mxu0 %v3810
        %3982 = vmatprep.subr.bf16.mxu0 0
        %3983 = vmatpush1.bf16.msra.mxu0 %v3811
        %3984 = vmatprep.subr.bf16.mxu0 0
        %3985 = vmatpush1.bf16.msra.mxu0 %v3812
        %3986 = vmatprep.subr.bf16.mxu0 0
        %3987 = vmatpush1.bf16.msra.mxu0 %v3813
        %3988 = vmatprep.subr.bf16.mxu0 0
        %3989 = vmatpush1.bf16.msra.mxu0 %v3814
        %3990 = vmatprep.subr.bf16.mxu0 0
        %3991 = vmatpush1.bf16.msra.mxu0 %v3815
        %3992 = vmatprep.subr.bf16.mxu0 0
        %3993 = vmatpush1.bf16.msra.mxu0 %v3816
        %3994 = vmatprep.mubr.bf16.mxu0 %v3501
        %3995 = vmatmul.mubr.bf16.gmra.mrb[0].mxu0 %v3500
        %v3996 = vpop.f32.mrb[0].mxu0
        %v3997 = vadd.f32 %v3900, %v3996
        %v3998 = vpop.f32.mrb[0].mxu0
        %v3999 = vpop.f32.mrb[0].mxu0
        %v4000 = vadd.f32 %v3903, %v3999
        %v4001 = vpop.f32.mrb[0].mxu0
        %4002 = vmatprep.mubr.bf16.mxu0 %v3506
        %4003 = vmatmul.mubr.bf16.gmra.mrb[0].mxu0 %v3505
        %v4004 = vpop.f32.mrb[0].mxu0
        %v4005 = vadd.f32 %v3908, %v4004
        %v4006 = vpop.f32.mrb[0].mxu0
        %v4007 = vpop.f32.mrb[0].mxu0
        %v4008 = vadd.f32 %v3911, %v4007
        %v4009 = vpop.f32.mrb[0].mxu0
        %4010 = vmatprep.mubr.bf16.mxu0 %v3511
        %4011 = vmatmul.mubr.bf16.gmra.mrb[0].mxu0 %v3510
        %v4012 = vpop.f32.mrb[0].mxu0
        %v4013 = vadd.f32 %v3916, %v4012
        %v4014 = vpop.f32.mrb[0].mxu0
        %v4015 = vpop.f32.mrb[0].mxu0
        %v4016 = vadd.f32 %v3919, %v4015
        %v4017 = vpop.f32.mrb[0].mxu0
        %4018 = vmatprep.mubr.bf16.mxu0 %v3516
        %4019 = vmatmul.mubr.bf16.gmra.mrb[0].mxu0 %v3515
        %v4020 = vpop.f32.mrb[0].mxu0
        %v4021 = vadd.f32 %v3924, %v4020
        %v4022 = vpop.f32.mrb[0].mxu0
        %v4023 = vpop.f32.mrb[0].mxu0
        %v4024 = vadd.f32 %v3927, %v4023
        %v4025 = vpop.f32.mrb[0].mxu0
        %4026 = vmatprep.mubr.bf16.mxu0 %v3521
        %4027 = vmatmul.mubr.bf16.gmra.mrb[0].mxu0 %v3520
        %v4028 = vpop.f32.mrb[0].mxu0
        %v4029 = vadd.f32 %v3932, %v4028
        %v4030 = vpop.f32.mrb[0].mxu0
        %v4031 = vpop.f32.mrb[0].mxu0
        %v4032 = vadd.f32 %v3935, %v4031
        %v4033 = vpop.f32.mrb[0].mxu0
        %4034 = vmatprep.mubr.bf16.mxu0 %v3526
        %4035 = vmatmul.mubr.bf16.gmra.mrb[0].mxu0 %v3525
        %v4036 = vpop.f32.mrb[0].mxu0
        %v4037 = vadd.f32 %v3940, %v4036
        %v4038 = vpop.f32.mrb[0].mxu0
        %v4039 = vpop.f32.mrb[0].mxu0
        %v4040 = vadd.f32 %v3943, %v4039
        %v4041 = vpop.f32.mrb[0].mxu0
        %4042 = vmatprep.mubr.bf16.mxu0 %v3531
        %4043 = vmatmul.mubr.bf16.gmra.mrb[0].mxu0 %v3530
        %v4044 = vpop.f32.mrb[0].mxu0
        %v4045 = vadd.f32 %v3948, %v4044
        %v4046 = vpop.f32.mrb[0].mxu0
        %v4047 = vpop.f32.mrb[0].mxu0
        %v4048 = vadd.f32 %v3951, %v4047
        %v4049 = vpop.f32.mrb[0].mxu0
        %4050 = vmatprep.mubr.bf16.mxu0 %v3536
        %4051 = vmatmul.mubr.bf16.gmra.mrb[0].mxu0 %v3535
        %v4052 = vpop.f32.mrb[0].mxu0
        %v4053 = vadd.f32 %v3956, %v4052
        %v4054 = vpop.f32.mrb[0].mxu0
        %v4055 = vpop.f32.mrb[0].mxu0
        %v4056 = vadd.f32 %v3959, %v4055
        %v4057 = vpop.f32.mrb[0].mxu0
        %4058 = vdwg.mxu0
        %4059 = vmatprep.subr.bf16.mxu0 0
        %4060 = vmatpush1.bf16.msra.mxu0 %v3817
        %4061 = vmatprep.subr.bf16.mxu0 0
        %4062 = vmatpush1.bf16.msra.mxu0 %v3818
        %4063 = vmatprep.subr.bf16.mxu0 0
        %4064 = vmatpush1.bf16.msra.mxu0 %v3819
        %4065 = vmatprep.subr.bf16.mxu0 0
        %4066 = vmatpush1.bf16.msra.mxu0 %v3820
        %4067 = vmatprep.subr.bf16.mxu0 0
        %4068 = vmatpush1.bf16.msra.mxu0 %v3821
        %4069 = vmatprep.subr.bf16.mxu0 0
        %4070 = vmatpush1.bf16.msra.mxu0 %v3822
        %4071 = vmatprep.subr.bf16.mxu0 0
        %4072 = vmatpush1.bf16.msra.mxu0 %v3823
        %4073 = vmatprep.subr.bf16.mxu0 0
        %4074 = vmatpush1.bf16.msra.mxu0 %v3824
        %4075 = vmatprep.subr.bf16.mxu0 0
        %4076 = vmatpush1.bf16.msra.mxu0 0
        %4077 = vmatprep.subr.bf16.mxu0 0
        %4078 = vmatpush1.bf16.msra.mxu0 0
        %4079 = vmatprep.subr.bf16.mxu0 0
        %4080 = vmatpush1.bf16.msra.mxu0 0
        %4081 = vmatprep.subr.bf16.mxu0 0
        %4082 = vmatpush1.bf16.msra.mxu0 0
        %4083 = vmatprep.subr.bf16.mxu0 0
        %4084 = vmatpush1.bf16.msra.mxu0 0
        %4085 = vmatprep.subr.bf16.mxu0 0
        %4086 = vmatpush1.bf16.msra.mxu0 0
        %4087 = vmatprep.subr.bf16.mxu0 0
        %4088 = vmatpush1.bf16.msra.mxu0 0
        %4089 = vmatprep.subr.bf16.mxu0 0
        %4090 = vmatpush1.bf16.msra.mxu0 0
        %4091 = vmatprep.mubr.bf16.mxu0 0
        %4092 = vmatmul.mubr.bf16.gmra.mrb[0].mxu0 %v3502
        %v4093 = vpop.f32.mrb[0].mxu0
        %v4094 = vadd.f32 %v3997, %v4093
        %v4095 = vpop.f32.mrb[0].mxu0
        %v4096 = vpop.f32.mrb[0].mxu0
        %v4097 = vadd.f32 %v4000, %v4096
        %v4098 = vpop.f32.mrb[0].mxu0
        %4099 = vmatprep.mubr.bf16.mxu0 0
        %4100 = vmatmul.mubr.bf16.gmra.mrb[0].mxu0 %v3507
        %v4101 = vpop.f32.mrb[0].mxu0
        %v4102 = vadd.f32 %v4005, %v4101
        %v4103 = vpop.f32.mrb[0].mxu0
        %v4104 = vpop.f32.mrb[0].mxu0
        %v4105 = vadd.f32 %v4008, %v4104
        %v4106 = vpop.f32.mrb[0].mxu0
        %4107 = vmatprep.mubr.bf16.mxu0 0
        %4108 = vmatmul.mubr.bf16.gmra.mrb[0].mxu0 %v3512
        %v4109 = vpop.f32.mrb[0].mxu0
        %v4110 = vadd.f32 %v4013, %v4109
        %v4111 = vpop.f32.mrb[0].mxu0
        %v4112 = vpop.f32.mrb[0].mxu0
        %v4113 = vadd.f32 %v4016, %v4112
        %v4114 = vpop.f32.mrb[0].mxu0
        %4115 = vmatprep.mubr.bf16.mxu0 0
        %4116 = vmatmul.mubr.bf16.gmra.mrb[0].mxu0 %v3517
        %v4117 = vpop.f32.mrb[0].mxu0
        %v4118 = vadd.f32 %v4021, %v4117
        %v4119 = vpop.f32.mrb[0].mxu0
        %v4120 = vpop.f32.mrb[0].mxu0
        %v4121 = vadd.f32 %v4024, %v4120
        %v4122 = vpop.f32.mrb[0].mxu0
        %4123 = vmatprep.mubr.bf16.mxu0 0
        %4124 = vmatmul.mubr.bf16.gmra.mrb[0].mxu0 %v3522
        %v4125 = vpop.f32.mrb[0].mxu0
        %v4126 = vadd.f32 %v4029, %v4125
        %v4127 = vpop.f32.mrb[0].mxu0
        %v4128 = vpop.f32.mrb[0].mxu0
        %v4129 = vadd.f32 %v4032, %v4128
        %v4130 = vpop.f32.mrb[0].mxu0
        %4131 = vmatprep.mubr.bf16.mxu0 0
        %4132 = vmatmul.mubr.bf16.gmra.mrb[0].mxu0 %v3527
        %v4133 = vpop.f32.mrb[0].mxu0
        %v4134 = vadd.f32 %v4037, %v4133
        %v4135 = vpop.f32.mrb[0].mxu0
        %v4136 = vpop.f32.mrb[0].mxu0
        %v4137 = vadd.f32 %v4040, %v4136
        %v4138 = vpop.f32.mrb[0].mxu0
        %4139 = vmatprep.mubr.bf16.mxu0 0
        %4140 = vmatmul.mubr.bf16.gmra.mrb[0].mxu0 %v3532
        %v4141 = vpop.f32.mrb[0].mxu0
        %v4142 = vadd.f32 %v4045, %v4141
        %v4143 = vpop.f32.mrb[0].mxu0
        %v4144 = vpop.f32.mrb[0].mxu0
        %v4145 = vadd.f32 %v4048, %v4144
        %v4146 = vpop.f32.mrb[0].mxu0
        %4147 = vmatprep.mubr.bf16.mxu0 0
        %4148 = vmatmul.mubr.bf16.gmra.mrb[0].mxu0 %v3537
        %v4149 = vpop.f32.mrb[0].mxu0
        %v4150 = vadd.f32 %v4053, %v4149
        %v4151 = vpop.f32.mrb[0].mxu0
        %v4152 = vpop.f32.mrb[0].mxu0
        %v4153 = vadd.f32 %v4056, %v4152
        %v4154 = vpop.f32.mrb[0].mxu0
        %4155 = vdwg.mxu0
        %v4156 = vmax.f32 %v4094, 0.0
        %v4157 = vmax.f32 %v4097, 0.0
        %v4158 = vmax.f32 %v4102, 0.0
        %v4159 = vmax.f32 %v4105, 0.0
        %v4160 = vmax.f32 %v4110, 0.0
        %v4161 = vmax.f32 %v4113, 0.0
        %v4162 = vmax.f32 %v4118, 0.0
        %v4163 = vmax.f32 %v4121, 0.0
        %v4164 = vmax.f32 %v4126, 0.0
        %v4165 = vmax.f32 %v4129, 0.0
        %v4166 = vmax.f32 %v4134, 0.0
        %v4167 = vmax.f32 %v4137, 0.0
        %v4168 = vmax.f32 %v4142, 0.0
        %v4169 = vmax.f32 %v4145, 0.0
        %v4170 = vmax.f32 %v4150, 0.0
        %v4171 = vmax.f32 %v4153, 0.0
        %v4172 = vstv %s236
        %v4173 = vadd.s32 %v4172, 1
        %v4174 = vadd.s32 %v4172, 2
        %v4175 = vadd.s32 %v4172, 3
        %v4176 = vadd.s32 %v4172, 4
        %v4177 = vadd.s32 %v4172, 5
        %v4178 = vadd.s32 %v4172, 6
        %v4179 = vadd.s32 %v4172, 7
        %vm4180 = vcmp.lt.s32.totalorder %v4172, 8
        %vm4181 = vcmp.lt.s32.totalorder %v4173, 8
        %vm4182 = vcmp.lt.s32.totalorder %v4174, 8
        %vm4183 = vcmp.lt.s32.totalorder %v4175, 8
        %vm4184 = vcmp.lt.s32.totalorder %v4176, 8
        %vm4185 = vcmp.lt.s32.totalorder %v4177, 8
        %vm4186 = vcmp.lt.s32.totalorder %v4178, 8
        %vm4187 = vcmp.lt.s32.totalorder %v4179, 8
        %v4188 = vsel %vm4180, 1, 0
        %v4189 = vsel %vm4181, 1, 0
        %v4190 = vsel %vm4182, 1, 0
        %v4191 = vsel %vm4183, 1, 0
        %v4192 = vsel %vm4184, 1, 0
        %v4193 = vsel %vm4185, 1, 0
        %v4194 = vsel %vm4186, 1, 0
        %v4195 = vsel %vm4187, 1, 0
        %vm4196 = vcmp.eq.s32.totalorder %v4188, 1
        %vm4197 = vcmp.eq.s32.totalorder %v4189, 1
        %vm4198 = vcmp.eq.s32.totalorder %v4190, 1
        %vm4199 = vcmp.eq.s32.totalorder %v4191, 1
        %vm4200 = vcmp.eq.s32.totalorder %v4192, 1
        %vm4201 = vcmp.eq.s32.totalorder %v4193, 1
        %vm4202 = vcmp.eq.s32.totalorder %v4194, 1
        %vm4203 = vcmp.eq.s32.totalorder %v4195, 1
        %v4204 = vsel %vm4196, %v4156, 0.0
        %v4205 = vsel %vm4196, %v4157, 0.0
        %v4206 = vsel %vm4197, %v4158, 0.0
        %v4207 = vsel %vm4197, %v4159, 0.0
        %v4208 = vsel %vm4198, %v4160, 0.0
        %v4209 = vsel %vm4198, %v4161, 0.0
        %v4210 = vsel %vm4199, %v4162, 0.0
        %v4211 = vsel %vm4199, %v4163, 0.0
        %v4212 = vsel %vm4200, %v4164, 0.0
        %v4213 = vsel %vm4200, %v4165, 0.0
        %v4214 = vsel %vm4201, %v4166, 0.0
        %v4215 = vsel %vm4201, %v4167, 0.0
        %v4216 = vsel %vm4202, %v4168, 0.0
        %v4217 = vsel %vm4202, %v4169, 0.0
        %v4218 = vsel %vm4203, %v4170, 0.0
        %v4219 = vsel %vm4203, %v4171, 0.0
        %v4220 = vsel %vm2307, %v4204, 0.0
        %v4221 = vsel %vm2307, %v4206, 0.0
        %v4222 = vadd.f32 %v4220, %v4221
        %v4223 = vsel %vm2307, %v4208, 0.0
        %v4224 = vadd.f32 %v4222, %v4223
        %v4225 = vsel %vm2307, %v4210, 0.0
        %v4226 = vadd.f32 %v4224, %v4225
        %v4227 = vsel %vm2307, %v4212, 0.0
        %v4228 = vadd.f32 %v4226, %v4227
        %v4229 = vsel %vm2307, %v4214, 0.0
        %v4230 = vadd.f32 %v4228, %v4229
        %v4231 = vsel %vm2307, %v4216, 0.0
        %v4232 = vadd.f32 %v4230, %v4231
        %v4233 = vsel %vm2307, %v4218, 0.0
        %v4234 = vadd.f32 %v4232, %v4233
        %v4235 = vsel %vm2307, %v4205, 0.0
        %v4236 = vsel %vm2307, %v4207, 0.0
        %v4237 = vadd.f32 %v4235, %v4236
        %v4238 = vsel %vm2307, %v4209, 0.0
        %v4239 = vadd.f32 %v4237, %v4238
        %v4240 = vsel %vm2307, %v4211, 0.0
        %v4241 = vadd.f32 %v4239, %v4240
        %v4242 = vsel %vm2307, %v4213, 0.0
        %v4243 = vadd.f32 %v4241, %v4242
        %v4244 = vsel %vm2307, %v4215, 0.0
        %v4245 = vadd.f32 %v4243, %v4244
        %v4246 = vsel %vm2307, %v4217, 0.0
        %v4247 = vadd.f32 %v4245, %v4246
        %v4248 = vsel %vm2307, %v4219, 0.0
        %v4249 = vadd.f32 %v4247, %v4248
        %p4250 = scmp.eq.s32.totalorder %s24, 0
        // Predicated region
        $region41: #{tpu_custom_call.1} parent=39 // pred_check
          %p4251 = pneg %p4250
        $region42: #{tpu_custom_call.1} parent=39 // pred_check_branch
          %4253 = sbr.rel (%p4251) target = $region44
        $region43: #{tpu_custom_call.1} parent=39 // pred_region
          %4254 = vst.msk [vmem:[%s229] sm:$0xff] %vm2307, 0.0
          %4255 = vst.msk [vmem:[%s229 + $0x8] sm:$0xff] %vm2307, 0.0
        $region44: #{tpu_custom_call.1} parent=39 // pred_fallthru
          _
        %v4256 = vld [vmem:[%s229] sm:$0xff]
        %v4257 = vld [vmem:[%s229 + $0x8] sm:$0xff]
        %v4258 = vadd.f32 %v4256, %v4234
        %v4259 = vadd.f32 %v4257, %v4249
        %4260 = vst.msk [vmem:[%s229] sm:$0xff] %vm2307, %v4258
        %4261 = vst.msk [vmem:[%s229 + $0x8] sm:$0xff] %vm2307, %v4259
        // Predicated region
        $region45: #{tpu_custom_call.1} parent=39 // pred_check
          %p4262 = pneg %p4250
        $region46: #{tpu_custom_call.1} parent=39 // pred_check_branch
          %4264 = sbr.rel (%p4262) target = $region48
        $region47: #{tpu_custom_call.1} parent=39 // pred_region
          %v4265 = vld [vmem:[%s229] sm:$0xff]
          %v4266 = vld [vmem:[%s229 + $0x8] sm:$0xff]
          %v4267 = vmul.f32 %v4265, 0.125
          %v4268 = vmul.f32 %v4266, 0.125
          %4269 = vst.msk [vmem:[%s229] sm:$0xff] %vm2307, %v4267
          %4270 = vst.msk [vmem:[%s229 + $0x8] sm:$0xff] %vm2307, %v4268
        $region48: #{tpu_custom_call.1} parent=39 // pred_fallthru
          _
        %s4271 = sand.u32 %s149, 1
        %s4272 = scalar_lea.sflag [#allocation5], %s4271
        %s4273 = sand.u32 %s149, 1
        %s4274 = smul.addr %s4273, 16
        %s4275 = scalar_lea.vmem [#allocation4], %s4274
        // Predicated region
        $region49: #{tpu_custom_call.1} parent=39 // pred_check
          %p4276 = pneg %p159
        $region50: #{tpu_custom_call.1} parent=39 // pred_check_branch
          %4278 = sbr.rel (%p4276) target = $region52
        $region51: #{tpu_custom_call.1} parent=39 // pred_region
          %s4280 = ssub.s32 256, 256
          %4281 = vsyncadd %s4272, %s4280
          %s4282 = smul.addr %s23, 2
          %s4283 = smul.addr %s4282, 128
          %s4284 = scalar_lea.hbm %s5, %s4283
          %s4285 = sshll.u32 %s4275, 4
          %s4286 = int_to_ptr.vmem [resolvable:$true] %s4285
          %4291 = dma.vmem_to_hbm [thread:$0]  %s4286, 256, %s4284, %s4272, 128, 128, 8
        $region52: #{tpu_custom_call.1} parent=39 // pred_fallthru
          _
      $region40: #{tpu_custom_call.1} parent=5 // pred_fallthru
        _
      %p4292 = scmp.le.s32.totalorder 2, %s14
      // Predicated region
      $region53: #{tpu_custom_call.1} parent=5 // pred_check
        %p4293 = pneg %p4292
      $region54: #{tpu_custom_call.1} parent=5 // pred_check_branch
        %4295 = sbr.rel (%p4293) target = $region56
      $region55: #{tpu_custom_call.1} parent=5 // pred_region
        %s4296 = ssub.s32 %s14, 2
        // Predicated region
        $region57: #{tpu_custom_call.1} parent=55 // pred_check
          %p4297 = pneg %p165
        $region58: #{tpu_custom_call.1} parent=55 // pred_check_branch
          %4299 = sbr.rel (%p4297) target = $region60
        $region59: #{tpu_custom_call.1} parent=55 // pred_region
          %s4300 = sand.u32 %s150, 1
          %s4301 = scalar_lea.sflag [#allocation5], %s4300
          %s4302 = sand.u32 %s150, 1
          %s4303 = smul.addr %s4302, 16
          %s4304 = scalar_lea.vmem [#allocation4], %s4303
          %4305 = dma.done %s4301, 256
        $region60: #{tpu_custom_call.1} parent=55 // pred_fallthru
          _
      $region56: #{tpu_custom_call.1} parent=5 // pred_fallthru
        _
    $region6: #{tpu_custom_call.1} parent=1 // loop_footer
      %s18 = sadd.s32 1, %s14
    $region7: #{tpu_custom_call.1} parent=1 // loop_footer_branch
      %13 = sbr.rel target = $region3
    $region8: #{tpu_custom_call.1} parent=1 // loop_exit
      _
    %4306 = vsyncpa [#allocation5], 1
    %s4307 = scalar_lea.sflag [#allocation5], 1
    %4308 = vsyncpa %s4307, 1

</llo_original>
